<compile_context>
chip_gen: v6e
topology: v6e:2x2x1
jax: 0.10.0
libtpu: 0.0.40
codegen_flags: <defaults>
</compile_context>

<pallas_src>
import math
import functools

import jax
import jax.numpy as jnp
from jax.experimental import pallas as pl
from jax.experimental.pallas import tpu as pltpu


# --------------------------------------------------------------------------
# Tile selection / VMEM budget helpers.
# --------------------------------------------------------------------------
def _pick_tm(n, cap=512):
    """Node (output-row) tile: largest multiple-of-16 divisor of n up to cap,
    preferring >= 2 node tiles so v7x's two TensorCores both get work."""
    cands = [c for c in (512, 256, 128, 64, 32, 16) if c <= cap and n % c == 0]
    if not cands:
        # TODO(synk): pad N to a multiple of 16 for large non-aligned graphs
        # instead of falling back to a single full-extent block.
        return n
    for c in cands:                      # descending
        if n // c >= 2:
            return c
    return cands[0]


def _pick_tk(nr, cap=2048):
    """Contraction (src*relation) tile: multiple of 128 dividing nr, else full."""
    for c in (2048, 1024, 512, 256, 128):
        if c <= cap and nr % c == 0:
            return c
    return nr


def _vmem_limit_bytes(tm, tk, d, extra_f32_blocks=0):
    """Explicit scoped-VMEM budget: double-buffered bf16 streams + resident f32
    blocks, 2x headroom, clamped inside v7x's 64 MiB physical VMEM."""
    streamed = 2 * (tm * tk * 2 + tk * d * 2)          # A + Y blocks, 2 buffers
    resident = (2 + extra_f32_blocks) * tm * d * 4     # output(s) + x/z1 tiles
    need = streamed + resident + (1 << 20)
    return int(min(max(2 * need, 32 << 20), 56 << 20))


# --------------------------------------------------------------------------
# Hoisted feature transform with relation-concatenated RHS:
#   Y_wide = X @ W_wide,  W_wide = (D_in, R*D_out)   (bf16 streams, f32 acc)
# --------------------------------------------------------------------------
def _xw_kernel(x_ref, w_ref, y_ref):
    y_ref[...] = jnp.dot(x_ref[...].astype(jnp.bfloat16), w_ref[...],
                         preferred_element_type=jnp.float32).astype(y_ref.dtype)


def xw_all_relations(x, w_wide, *, tm):
    n, d_in = x.shape
    rd = w_wide.shape[1]
    return pl.pallas_call(
        _xw_kernel,
        out_shape=jax.ShapeDtypeStruct((n, rd), jnp.bfloat16),
        grid_spec=pltpu.PrefetchScalarGridSpec(
            num_scalar_prefetch=0,
            grid=(n // tm,),
            in_specs=[
                pl.BlockSpec((tm, d_in), lambda i: (i, 0)),
                pl.BlockSpec((d_in, rd), lambda i: (0, 0)),   # W resident
            ],
            out_specs=pl.BlockSpec((tm, rd), lambda i: (i, 0)),
        ),
        compiler_params=pltpu.CompilerParams(
            dimension_semantics=("parallel",),
            vmem_limit_bytes=_vmem_limit_bytes(tm, d_in, rd)),
    )(x, w_wide)


# --------------------------------------------------------------------------
# Layer 1:  z1 = leaky_relu( A_flat @ Y1_flat + b1 )
# K-tiled matmul; accumulates directly into the f32 output block.
# --------------------------------------------------------------------------
def _conv_kernel(a_ref, y_ref, b_ref, o_ref, *, apply_leaky):
    k = pl.program_id(1)

    @pl.when(k == 0)
    def _():
        o_ref[...] = jnp.zeros_like(o_ref)

    # (tm, tk) bf16 @ (tk, D) bf16 -> (tm, D) f32 on the MXU.
    o_ref[...] += jnp.dot(a_ref[...], y_ref[...],
                          preferred_element_type=jnp.float32)

    @pl.when(k == pl.num_programs(1) - 1)
    def _():
        out = o_ref[...] + b_ref[...]
        if apply_leaky:                          # fused LeakyReLU(0.01)
            out = jnp.where(out >= 0, out, 0.01 * out)
        o_ref[...] = out


def ecge_conv(adj_flat, y_flat, bias, *, tm, tk, apply_leaky):
    n, nr = adj_flat.shape
    d = y_flat.shape[1]
    kern = functools.partial(_conv_kernel, apply_leaky=apply_leaky)
    return pl.pallas_call(
        kern,
        out_shape=jax.ShapeDtypeStruct((n, d), jnp.float32),
        grid_spec=pltpu.PrefetchScalarGridSpec(
            num_scalar_prefetch=0,
            grid=(n // tm, nr // tk),
            in_specs=[
                # TODO(synk): sweep pipeline_mode=pl.Buffered(3) on A/Y streams.
                pl.BlockSpec((tm, tk), lambda i, k: (i, k)),
                pl.BlockSpec((tk, d), lambda i, k: (k, 0)),
                pl.BlockSpec((1, d), lambda i, k: (0, 0)),
            ],
            out_specs=pl.BlockSpec((tm, d), lambda i, k: (i, 0)),
        ),
        compiler_params=pltpu.CompilerParams(
            dimension_semantics=("parallel", "arbitrary"),
            vmem_limit_bytes=_vmem_limit_bytes(tm, tk, d)),
    )(adj_flat, y_flat, bias)


# --------------------------------------------------------------------------
# Layer 2 + fused combine epilogue:
#   z2      = A_flat @ Y2_flat + b2     (accumulated in star_ref)
#   z_star  = (x + z1 + z2) / 4
#   z_sharp = (sum_{i>=lamda} [x, z1, z2][i]) / (4 - lamda)
# --------------------------------------------------------------------------
def _conv_combine_kernel(a_ref, y_ref, b_ref, x_ref, z1_ref,
                         star_ref, sharp_ref, *, lamda):
    k = pl.program_id(1)

    @pl.when(k == 0)
    def _():
        star_ref[...] = jnp.zeros_like(star_ref)

    star_ref[...] += jnp.dot(a_ref[...], y_ref[...],
                             preferred_element_type=jnp.float32)

    @pl.when(k == pl.num_programs(1) - 1)
    def _():
        z2 = star_ref[...] + b_ref[...]
        x = x_ref[...]
        z1 = z1_ref[...]
        star_ref[...] = (x + z1 + z2) * 0.25
        temp = (x, z1, z2)
        sharp = temp[lamda]
        for i in range(lamda + 1, 3):
            sharp = sharp + temp[i]
        sharp_ref[...] = sharp * jnp.float32(1.0 / (4.0 - lamda))


def ecge_conv_combine(adj_flat, y_flat, bias, x, z1, *, tm, tk, lamda):
    n, nr = adj_flat.shape
    d = y_flat.shape[1]
    kern = functools.partial(_conv_combine_kernel, lamda=lamda)
    return pl.pallas_call(
        kern,
        out_shape=(jax.ShapeDtypeStruct((n, d), jnp.float32),
                   jax.ShapeDtypeStruct((n, d), jnp.float32)),
        grid_spec=pltpu.PrefetchScalarGridSpec(
            num_scalar_prefetch=0,
            grid=(n // tm, nr // tk),
            in_specs=[
                pl.BlockSpec((tm, tk), lambda i, k: (i, k)),
                pl.BlockSpec((tk, d), lambda i, k: (k, 0)),
                pl.BlockSpec((1, d), lambda i, k: (0, 0)),
                pl.BlockSpec((tm, d), lambda i, k: (i, 0)),
                pl.BlockSpec((tm, d), lambda i, k: (i, 0)),
            ],
            out_specs=(pl.BlockSpec((tm, d), lambda i, k: (i, 0)),
                       pl.BlockSpec((tm, d), lambda i, k: (i, 0))),
        ),
        compiler_params=pltpu.CompilerParams(
            dimension_semantics=("parallel", "arbitrary"),
            vmem_limit_bytes=_vmem_limit_bytes(tm, tk, d, extra_f32_blocks=3)),
    )(adj_flat, y_flat, bias, x, z1)


# --------------------------------------------------------------------------
# Glue: flattened normalized adjacency, built directly in the streaming dtype.
# A_flat[dst, src*R + r] = norm * edge_weight   (interleaved-relation layout
# matching Y_flat = Y_wide.reshape(N*R, D)).
# --------------------------------------------------------------------------
def build_adjacency_flat(edge_index, edge_type, edge_weight, num_nodes,
                         num_relations, dtype=jnp.bfloat16):
    row = edge_index[0]
    col = edge_index[1]
    deg = jnp.zeros((num_nodes,), jnp.float32).at[col].add(1.0)
    deg_inv_sqrt = jnp.where(deg == 0, 1.0, deg ** -0.5)
    coeff = deg_inv_sqrt[row] * deg_inv_sqrt[col] * edge_weight
    adj = jnp.zeros((num_nodes, num_nodes * num_relations), dtype)
    return adj.at[col, row * num_relations + edge_type].add(coeff.astype(dtype))


def kcge_forward(params, x, edge_index, edge_type, edge_weight, *, lamda):
    assert 0 <= lamda <= 2, "lamda indexes the [x, z1, z2] list"
    r = params["w1"].shape[0]
    n, d = x.shape
    tm = _pick_tm(n)
    tk = _pick_tk(n * r)

    adj = build_adjacency_flat(edge_index, edge_type, edge_weight, n, r)

    def widen(w):
        # (R, D_in, D_out) -> (D_in, R*D_out): relation-concatenated RHS.
        return jnp.transpose(w, (1, 0, 2)).reshape(d, r * d).astype(jnp.bfloat16)

    w1_wide = widen(params["w1"])
    w2_wide = widen(params["w2"])

    # Layer 1
    y1 = xw_all_relations(x, w1_wide, tm=tm).reshape(n * r, d)   # free bitcast
    z1 = ecge_conv(adj, y1, params["b1"], tm=tm, tk=tk, apply_leaky=True)
    # TODO(synk): F.dropout treated as identity (inference / eval mode).

    # Layer 2 with fused combine epilogue
    y2 = xw_all_relations(z1, w2_wide, tm=tm).reshape(n * r, d)
    z_star, z_sharp = ecge_conv_combine(adj, y2, params["b2"], x, z1,
                                        tm=tm, tk=tk, lamda=lamda)
    return z_star, z_sharp


# --------------------------------------------------------------------------
# Pure-JAX reference (f32, independent per-relation formulation).
# --------------------------------------------------------------------------
def kcge_reference(params, x, edge_index, edge_type, edge_weight, *, lamda):
    r = params["w1"].shape[0]
    n = x.shape[0]
    row, col = edge_index[0], edge_index[1]
    deg = jnp.zeros((n,), jnp.float32).at[col].add(1.0)
    deg_inv_sqrt = jnp.where(deg == 0, 1.0, deg ** -0.5)
    coeff = deg_inv_sqrt[row] * deg_inv_sqrt[col] * edge_weight
    adj = jnp.zeros((r, n, n), jnp.float32).at[edge_type, col, row].add(coeff)

    def conv(h, w, b):
        y = jnp.einsum("nd,rde->rne", h, w)
        return jnp.einsum("rms,rse->me", adj, y) + b

    z1 = jax.nn.leaky_relu(conv(x, params["w1"], params["b1"]), 0.01)
    z2 = conv(z1, params["w2"], params["b2"])
    z_star = (x + z1 + z2) / 4.0
    temp = (x, z1, z2)
    z_sharp = temp[lamda]
    for i in range(lamda + 1, 3):
        z_sharp = z_sharp + temp[i]
    z_sharp = z_sharp / (4.0 - lamda)
    return z_star, z_sharp


# --------------------------------------------------------------------------
# Deterministic parameter init (kaiming_uniform with a=sqrt(5) => bound
# = 1/sqrt(fan_in), fan_in = in_channels*out_channels for the 3D tensor);
# bias = 0, matching ECGEConv.reset_parameters.
# --------------------------------------------------------------------------
def init_params(key, embedding_dim, num_relations):
    k1, k2 = jax.random.split(key)
    bound = 1.0 / math.sqrt(embedding_dim * embedding_dim)
    shape = (num_relations, embedding_dim, embedding_dim)
    w1 = jax.random.uniform(k1, shape, jnp.float32, -bound, bound)
    w2 = jax.random.uniform(k2, shape, jnp.float32, -bound, bound)
    return {"w1": w1, "b1": jnp.zeros((1, embedding_dim), jnp.float32),
            "w2": w2, "b2": jnp.zeros((1, embedding_dim), jnp.float32)}


if __name__ == "__main__":
    embedding_dim = 128       # lane-dense feature dim
    num_relations = 4
    lamda = 1
    num_nodes = 256
    num_edges = 1024

    key = jax.random.PRNGKey(0)
    kp, kx, ke1, ke2, kt, kw = jax.random.split(key, 6)

    params = init_params(kp, embedding_dim, num_relations)
    x = jax.random.normal(kx, (num_nodes, embedding_dim), jnp.float32)
    edge_index = jnp.stack([
        jax.random.randint(ke1, (num_edges,), 0, num_nodes),
        jax.random.randint(ke2, (num_edges,), 0, num_nodes),
    ])
    edge_type = jax.random.randint(kt, (num_edges,), 0, num_relations)
    edge_weight = jax.random.uniform(kw, (num_edges,), jnp.float32, 0.1, 1.0)

    fwd = jax.jit(functools.partial(kcge_forward, lamda=lamda))
    z_star, z_sharp = fwd(params, x, edge_index, edge_type, edge_weight)
    jax.block_until_ready((z_star, z_sharp))

    assert z_star.shape == (num_nodes, embedding_dim)
    assert z_sharp.shape == (num_nodes, embedding_dim)

    # Sanity check against the f32 reference (kernel streams bf16 inputs with
    # f32 accumulation, so allow a generous absolute tolerance).
    ref_star, ref_sharp = kcge_reference(params, x, edge_index, edge_type,
                                         edge_weight, lamda=lamda)
    err_star = float(jnp.max(jnp.abs(z_star - ref_star)))
    err_sharp = float(jnp.max(jnp.abs(z_sharp - ref_sharp)))
    assert err_star < 2e-2 and err_sharp < 2e-2, (err_star, err_sharp)

    print("KERNEL_OK")
</pallas_src>

<mosaic_0001>
module attributes {stable_mosaic.version = 11 : i64} {
  func.func private @main(%arg0: i32) attributes {dimension_semantics = [#tpu.dimension_semantics<core_parallel>], iteration_bounds = array<i64: 2>, tpu.core_type = #tpu.core_type<sc_scalar_subcore>, window_params = []} {
    return
  }
}

module attributes {stable_mosaic.version = 11 : i64} {
  func.func private @main(%arg0: i32) attributes {dimension_semantics = [#tpu.dimension_semantics<core_parallel>], iteration_bounds = array<i64: 2>, tpu.core_type = #tpu.core_type<sc_scalar_subcore>, window_params = []} {
    return
  }
}

module attributes {stable_mosaic.version = 11 : i64} {
  func.func @_xw_kernel(%arg0: i32, %arg1: memref<128x128xf32, #tpu.memory_space<vmem>>, %arg2: memref<128x512xbf16, #tpu.memory_space<vmem>>, %arg3: memref<128x512xbf16, #tpu.memory_space<vmem>>) attributes {dimension_semantics = [#tpu.dimension_semantics<parallel>], iteration_bounds = array<i64: 2>, scalar_prefetch = 0 : i64, scratch_operands = 0 : i64, tpu.core_type = #tpu.core_type<tc>, window_params = [{transform_indices = @transform_0, window_bounds = array<i64: 128, 128>}, {pipeline_mode = #tpu.pipeline_mode<synchronous>, transform_indices = @transform_1, window_bounds = array<i64: 128, 512>}, {transform_indices = @transform_2, window_bounds = array<i64: 128, 512>}]} {
    %c0 = arith.constant 0 : index
    %c0_0 = arith.constant 0 : index
    %0 = vector.load %arg1[%c0, %c0_0] : memref<128x128xf32, #tpu.memory_space<vmem>>, vector<128x128xf32>
    %1 = arith.truncf %0 : vector<128x128xf32> to vector<128x128xbf16>
    %c0_1 = arith.constant 0 : index
    %c0_2 = arith.constant 0 : index
    %2 = vector.load %arg2[%c0_1, %c0_2] : memref<128x512xbf16, #tpu.memory_space<vmem>>, vector<128x512xbf16>
    %cst = arith.constant dense<0.000000e+00> : vector<128x512xf32>
    %3 = tpu.matmul %1, %2, %cst {dimension_numbers = #tpu.dot_dimension_numbers<[1], [0], [0], [1], [0, 0, 1, 1], [], []>} : vector<128x128xbf16>, vector<128x512xbf16>, vector<128x512xf32> -> vector<128x512xf32>
    %4 = arith.truncf %3 : vector<128x512xf32> to vector<128x512xbf16>
    %c0_3 = arith.constant 0 : index
    %c0_4 = arith.constant 0 : index
    %5 = vector.load %arg3[%c0_3, %c0_4] : memref<128x512xbf16, #tpu.memory_space<vmem>>, vector<128x512xbf16>
    tpu.vector_store %arg3[%c0_3, %c0_4], %4 {strides = array<i32>} : memref<128x512xbf16, #tpu.memory_space<vmem>>, vector<128x512xbf16>,
    return
  }
  func.func @transform_0(%arg0: i32) -> (i32, i32) {
    %c0_i32 = arith.constant 0 : i32
    %c0_i32_0 = arith.constant 0 : i32
    return %arg0, %c0_i32 : i32, i32
  }
  func.func @transform_1(%arg0: i32) -> (i32, i32) {
    %c0_i32 = arith.constant 0 : i32
    %c0_i32_0 = arith.constant 0 : i32
    %c0_i32_1 = arith.constant 0 : i32
    return %c0_i32, %c0_i32_0 : i32, i32
  }
  func.func @transform_2(%arg0: i32) -> (i32, i32) {
    %c0_i32 = arith.constant 0 : i32
    %c0_i32_0 = arith.constant 0 : i32
    return %arg0, %c0_i32 : i32, i32
  }
}

module attributes {stable_mosaic.version = 11 : i64} {
  func.func @_conv_kernel(%arg0: i32, %arg1: i32, %arg2: memref<128x1024xbf16, #tpu.memory_space<vmem>>, %arg3: memref<1024x128xbf16, #tpu.memory_space<vmem>>, %arg4: memref<1x128xf32, #tpu.memory_space<vmem>>, %arg5: memref<128x128xf32, #tpu.memory_space<vmem>>) attributes {dimension_semantics = [#tpu.dimension_semantics<parallel>, #tpu.dimension_semantics<arbitrary>], iteration_bounds = array<i64: 2, 1>, scalar_prefetch = 0 : i64, scratch_operands = 0 : i64, tpu.core_type = #tpu.core_type<tc>, window_params = [{transform_indices = @transform_0, window_bounds = array<i64: 128, 1024>}, {transform_indices = @transform_1, window_bounds = array<i64: 1024, 128>}, {pipeline_mode = #tpu.pipeline_mode<synchronous>, transform_indices = @transform_2, window_bounds = array<i64: 1, 128>}, {transform_indices = @transform_3, window_bounds = array<i64: 128, 128>}]} {
    %c0_i32 = arith.constant 0 : i32
    %0 = arith.cmpi eq, %arg1, %c0_i32 : i32
    %1 = arith.extui %0 : i1 to i32
    %c0_i32_0 = arith.constant 0 : i32
    %2 = arith.cmpi ne, %1, %c0_i32_0 : i32
    scf.if %2 {
      %cst_10 = arith.constant 0.000000e+00 : f32
      %12 = vector.broadcast %cst_10 : f32 to vector<128x128xf32>
      %c0_11 = arith.constant 0 : index
      %c0_12 = arith.constant 0 : index
      %13 = vector.load %arg5[%c0_11, %c0_12] : memref<128x128xf32, #tpu.memory_space<vmem>>, vector<128x128xf32>
      tpu.vector_store %arg5[%c0_11, %c0_12], %12 {strides = array<i32>} : memref<128x128xf32, #tpu.memory_space<vmem>>, vector<128x128xf32>,
    } else {
    }
    %c0 = arith.constant 0 : index
    %c0_1 = arith.constant 0 : index
    %3 = vector.load %arg5[%c0, %c0_1] : memref<128x128xf32, #tpu.memory_space<vmem>>, vector<128x128xf32>
    %c0_2 = arith.constant 0 : index
    %c0_3 = arith.constant 0 : index
    %4 = vector.load %arg2[%c0_2, %c0_3] : memref<128x1024xbf16, #tpu.memory_space<vmem>>, vector<128x1024xbf16>
    %c0_4 = arith.constant 0 : index
    %c0_5 = arith.constant 0 : index
    %5 = vector.load %arg3[%c0_4, %c0_5] : memref<1024x128xbf16, #tpu.memory_space<vmem>>, vector<1024x128xbf16>
    %cst = arith.constant dense<0.000000e+00> : vector<128x128xf32>
    %6 = tpu.matmul %4, %5, %cst {dimension_numbers = #tpu.dot_dimension_numbers<[1], [0], [0], [1], [0, 0, 1, 1], [], []>} : vector<128x1024xbf16>, vector<1024x128xbf16>, vector<128x128xf32> -> vector<128x128xf32>
    %7 = arith.addf %3, %6 : vector<128x128xf32>
    %c0_6 = arith.constant 0 : index
    %c0_7 = arith.constant 0 : index
    %8 = vector.load %arg5[%c0_6, %c0_7] : memref<128x128xf32, #tpu.memory_space<vmem>>, vector<128x128xf32>
    tpu.vector_store %arg5[%c0_6, %c0_7], %7 {strides = array<i32>} : memref<128x128xf32, #tpu.memory_space<vmem>>, vector<128x128xf32>,
    %c0_i32_8 = arith.constant 0 : i32
    %9 = arith.cmpi eq, %arg1, %c0_i32_8 : i32
    %10 = arith.extui %9 : i1 to i32
    %c0_i32_9 = arith.constant 0 : i32
    %11 = arith.cmpi ne, %10, %c0_i32_9 : i32
    scf.if %11 {
      %c0_10 = arith.constant 0 : index
      %c0_11 = arith.constant 0 : index
      %12 = vector.load %arg5[%c0_10, %c0_11] : memref<128x128xf32, #tpu.memory_space<vmem>>, vector<128x128xf32>
      %c0_12 = arith.constant 0 : index
      %c0_13 = arith.constant 0 : index
      %13 = vector.load %arg4[%c0_12, %c0_13] : memref<1x128xf32, #tpu.memory_space<vmem>>, vector<1x128xf32>
      %14 = vector.broadcast %13 : vector<1x128xf32> to vector<128x128xf32>
      %15 = arith.addf %12, %14 : vector<128x128xf32>
      %cst_14 = arith.constant 0.000000e+00 : f32
      %16 = vector.broadcast %cst_14 : f32 to vector<128x128xf32>
      %17 = arith.cmpf oge, %15, %16 : vector<128x128xf32>
      %cst_15 = arith.constant 0.00999999977 : f32
      %18 = vector.broadcast %cst_15 : f32 to vector<128x128xf32>
      %19 = arith.mulf %18, %15 : vector<128x128xf32>
      %20 = arith.select %17, %15, %19 : vector<128x128xi1>, vector<128x128xf32>
      %c0_16 = arith.constant 0 : index
      %c0_17 = arith.constant 0 : index
      %21 = vector.load %arg5[%c0_16, %c0_17] : memref<128x128xf32, #tpu.memory_space<vmem>>, vector<128x128xf32>
      tpu.vector_store %arg5[%c0_16, %c0_17], %20 {strides = array<i32>} : memref<128x128xf32, #tpu.memory_space<vmem>>, vector<128x128xf32>,
    } else {
    }
    return
  }
  func.func @transform_0(%arg0: i32, %arg1: i32) -> (i32, i32) {
    %c0_i32 = arith.constant 0 : i32
    return %arg0, %arg1 : i32, i32
  }
  func.func @transform_1(%arg0: i32, %arg1: i32) -> (i32, i32) {
    %c0_i32 = arith.constant 0 : i32
    %c0_i32_0 = arith.constant 0 : i32
    return %arg1, %c0_i32 : i32, i32
  }
  func.func @transform_2(%arg0: i32, %arg1: i32) -> (i32, i32) {
    %c0_i32 = arith.constant 0 : i32
    %c0_i32_0 = arith.constant 0 : i32
    %c0_i32_1 = arith.constant 0 : i32
    return %c0_i32, %c0_i32_0 : i32, i32
  }
  func.func @transform_3(%arg0: i32, %arg1: i32) -> (i32, i32) {
    %c0_i32 = arith.constant 0 : i32
    %c0_i32_0 = arith.constant 0 : i32
    return %arg0, %c0_i32 : i32, i32
  }
}

module attributes {stable_mosaic.version = 11 : i64} {
  func.func @_conv_combine_kernel(%arg0: i32, %arg1: i32, %arg2: memref<128x1024xbf16, #tpu.memory_space<vmem>>, %arg3: memref<1024x128xbf16, #tpu.memory_space<vmem>>, %arg4: memref<1x128xf32, #tpu.memory_space<vmem>>, %arg5: memref<128x128xf32, #tpu.memory_space<vmem>>, %arg6: memref<128x128xf32, #tpu.memory_space<vmem>>, %arg7: memref<128x128xf32, #tpu.memory_space<vmem>>, %arg8: memref<128x128xf32, #tpu.memory_space<vmem>>) attributes {dimension_semantics = [#tpu.dimension_semantics<parallel>, #tpu.dimension_semantics<arbitrary>], iteration_bounds = array<i64: 2, 1>, scalar_prefetch = 0 : i64, scratch_operands = 0 : i64, tpu.core_type = #tpu.core_type<tc>, window_params = [{transform_indices = @transform_0, window_bounds = array<i64: 128, 1024>}, {transform_indices = @transform_1, window_bounds = array<i64: 1024, 128>}, {pipeline_mode = #tpu.pipeline_mode<synchronous>, transform_indices = @transform_2, window_bounds = array<i64: 1, 128>}, {transform_indices = @transform_3, window_bounds = array<i64: 128, 128>}, {transform_indices = @transform_4, window_bounds = array<i64: 128, 128>}, {transform_indices = @transform_5, window_bounds = array<i64: 128, 128>}, {transform_indices = @transform_6, window_bounds = array<i64: 128, 128>}]} {
    %c0_i32 = arith.constant 0 : i32
    %0 = arith.cmpi eq, %arg1, %c0_i32 : i32
    %1 = arith.extui %0 : i1 to i32
    %c0_i32_0 = arith.constant 0 : i32
    %2 = arith.cmpi ne, %1, %c0_i32_0 : i32
    scf.if %2 {
      %cst_10 = arith.constant 0.000000e+00 : f32
      %12 = vector.broadcast %cst_10 : f32 to vector<128x128xf32>
      %c0_11 = arith.constant 0 : index
      %c0_12 = arith.constant 0 : index
      %13 = vector.load %arg7[%c0_11, %c0_12] : memref<128x128xf32, #tpu.memory_space<vmem>>, vector<128x128xf32>
      tpu.vector_store %arg7[%c0_11, %c0_12], %12 {strides = array<i32>} : memref<128x128xf32, #tpu.memory_space<vmem>>, vector<128x128xf32>,
    } else {
    }
    %c0 = arith.constant 0 : index
    %c0_1 = arith.constant 0 : index
    %3 = vector.load %arg7[%c0, %c0_1] : memref<128x128xf32, #tpu.memory_space<vmem>>, vector<128x128xf32>
    %c0_2 = arith.constant 0 : index
    %c0_3 = arith.constant 0 : index
    %4 = vector.load %arg2[%c0_2, %c0_3] : memref<128x1024xbf16, #tpu.memory_space<vmem>>, vector<128x1024xbf16>
    %c0_4 = arith.constant 0 : index
    %c0_5 = arith.constant 0 : index
    %5 = vector.load %arg3[%c0_4, %c0_5] : memref<1024x128xbf16, #tpu.memory_space<vmem>>, vector<1024x128xbf16>
    %cst = arith.constant dense<0.000000e+00> : vector<128x128xf32>
    %6 = tpu.matmul %4, %5, %cst {dimension_numbers = #tpu.dot_dimension_numbers<[1], [0], [0], [1], [0, 0, 1, 1], [], []>} : vector<128x1024xbf16>, vector<1024x128xbf16>, vector<128x128xf32> -> vector<128x128xf32>
    %7 = arith.addf %3, %6 : vector<128x128xf32>
    %c0_6 = arith.constant 0 : index
    %c0_7 = arith.constant 0 : index
    %8 = vector.load %arg7[%c0_6, %c0_7] : memref<128x128xf32, #tpu.memory_space<vmem>>, vector<128x128xf32>
    tpu.vector_store %arg7[%c0_6, %c0_7], %7 {strides = array<i32>} : memref<128x128xf32, #tpu.memory_space<vmem>>, vector<128x128xf32>,
    %c0_i32_8 = arith.constant 0 : i32
    %9 = arith.cmpi eq, %arg1, %c0_i32_8 : i32
    %10 = arith.extui %9 : i1 to i32
    %c0_i32_9 = arith.constant 0 : i32
    %11 = arith.cmpi ne, %10, %c0_i32_9 : i32
    scf.if %11 {
      %c0_10 = arith.constant 0 : index
      %c0_11 = arith.constant 0 : index
      %12 = vector.load %arg7[%c0_10, %c0_11] : memref<128x128xf32, #tpu.memory_space<vmem>>, vector<128x128xf32>
      %c0_12 = arith.constant 0 : index
      %c0_13 = arith.constant 0 : index
      %13 = vector.load %arg4[%c0_12, %c0_13] : memref<1x128xf32, #tpu.memory_space<vmem>>, vector<1x128xf32>
      %14 = vector.broadcast %13 : vector<1x128xf32> to vector<128x128xf32>
      %15 = arith.addf %12, %14 : vector<128x128xf32>
      %c0_14 = arith.constant 0 : index
      %c0_15 = arith.constant 0 : index
      %16 = vector.load %arg5[%c0_14, %c0_15] : memref<128x128xf32, #tpu.memory_space<vmem>>, vector<128x128xf32>
      %c0_16 = arith.constant 0 : index
      %c0_17 = arith.constant 0 : index
      %17 = vector.load %arg6[%c0_16, %c0_17] : memref<128x128xf32, #tpu.memory_space<vmem>>, vector<128x128xf32>
      %18 = arith.addf %16, %17 : vector<128x128xf32>
      %19 = arith.addf %18, %15 : vector<128x128xf32>
      %cst_18 = arith.constant 2.500000e-01 : f32
      %20 = vector.broadcast %cst_18 : f32 to vector<128x128xf32>
      %21 = arith.mulf %19, %20 : vector<128x128xf32>
      %c0_19 = arith.constant 0 : index
      %c0_20 = arith.constant 0 : index
      %22 = vector.load %arg7[%c0_19, %c0_20] : memref<128x128xf32, #tpu.memory_space<vmem>>, vector<128x128xf32>
      tpu.vector_store %arg7[%c0_19, %c0_20], %21 {strides = array<i32>} : memref<128x128xf32, #tpu.memory_space<vmem>>, vector<128x128xf32>,
      %23 = arith.addf %17, %15 : vector<128x128xf32>
      %cst_21 = arith.constant 0.333333343 : f32
      %24 = vector.broadcast %cst_21 : f32 to vector<128x128xf32>
      %25 = arith.mulf %23, %24 : vector<128x128xf32>
      %c0_22 = arith.constant 0 : index
      %c0_23 = arith.constant 0 : index
      %26 = vector.load %arg8[%c0_22, %c0_23] : memref<128x128xf32, #tpu.memory_space<vmem>>, vector<128x128xf32>
      tpu.vector_store %arg8[%c0_22, %c0_23], %25 {strides = array<i32>} : memref<128x128xf32, #tpu.memory_space<vmem>>, vector<128x128xf32>,
    } else {
    }
    return
  }
  func.func @transform_0(%arg0: i32, %arg1: i32) -> (i32, i32) {
    %c0_i32 = arith.constant 0 : i32
    return %arg0, %arg1 : i32, i32
  }
  func.func @transform_1(%arg0: i32, %arg1: i32) -> (i32, i32) {
    %c0_i32 = arith.constant 0 : i32
    %c0_i32_0 = arith.constant 0 : i32
    return %arg1, %c0_i32 : i32, i32
  }
  func.func @transform_2(%arg0: i32, %arg1: i32) -> (i32, i32) {
    %c0_i32 = arith.constant 0 : i32
    %c0_i32_0 = arith.constant 0 : i32
    %c0_i32_1 = arith.constant 0 : i32
    return %c0_i32, %c0_i32_0 : i32, i32
  }
  func.func @transform_3(%arg0: i32, %arg1: i32) -> (i32, i32) {
    %c0_i32 = arith.constant 0 : i32
    %c0_i32_0 = arith.constant 0 : i32
    return %arg0, %c0_i32 : i32, i32
  }
  func.func @transform_4(%arg0: i32, %arg1: i32) -> (i32, i32) {
    %c0_i32 = arith.constant 0 : i32
    %c0_i32_0 = arith.constant 0 : i32
    return %arg0, %c0_i32 : i32, i32
  }
  func.func @transform_5(%arg0: i32, %arg1: i32) -> (i32, i32) {
    %c0_i32 = arith.constant 0 : i32
    %c0_i32_0 = arith.constant 0 : i32
    return %arg0, %c0_i32 : i32, i32
  }
  func.func @transform_6(%arg0: i32, %arg1: i32) -> (i32, i32) {
    %c0_i32 = arith.constant 0 : i32
    %c0_i32_0 = arith.constant 0 : i32
    return %arg0, %c0_i32 : i32, i32
  }
}

</mosaic_0001>

<llo_original>
// kernel: kcge_forward.4
$region0: #{kcge_forward.4}
  #allocation0 [shape = 'u32[]', space=smem, size = 0x4, offset = 0x4, fixed_abs, tag = 'smem constant byte address 0x4 - core index']
  #allocation1 [shape = 'u32[144,128]{1,0:T(1,128)}', space=vmem, size = 0x12000, scoped, tag = 'internal scratch']
  %s0 = inlined_call_operand.vmem [shape: f32[256,128], index: 0, kind: input, shape index: {}]
  %s1 = inlined_call_operand.vmem [shape: bf16[128,512], index: 1, kind: input, shape index: {}]
  %s2 = inlined_call_operand.vmem [shape: bf16[256,512], index: 2, kind: output, shape index: {}]
  %s3 = sld [smem:[#allocation0]]
  $region41: #{kcge_forward.4} parent=0
    _
  %s5 = ssub.s32 1, %s3
  %s6 = scalar_select 0, %s5, %s3
  loop: start=0, step=1, limit=4
  $region2: #{kcge_forward.4} parent=0 // loop_pre_header
    _
  $region3: #{kcge_forward.4} parent=0 // loop_header
    %s8 = sphi 0, %s12
    %p9 = scmp.ge.s32.totalorder %s8, 4
    %s18 = sphi 0, %s20
    %s21 = sphi 0, %s18
    %s22 = sphi 0, %s21
    %s38 = sphi 0, %s22
    %s42 = sphi 0, %s42
    %s44 = sphi 0, %s42
    %s45 = sphi 0, %s44
    %s59 = sphi 0, %s45
    %s65 = sphi 0, %s67
    %s68 = sphi 0, %s65
    %s69 = sphi 0, %s68
    %s85 = sphi 0, %s69
  $region4: #{kcge_forward.4} parent=0 // loop_header_branch
    %11 = sbr.rel (%p9) target = $region8
  $region5: #{kcge_forward.4} parent=0 // loop_body
    %s13 = ssub.s32 %s8, 1
    %s14 = ssub.s32 %s8, 2
    %s15 = sadd.s32 %s8, 1
    %s16 = ssub.s32 %s8, %s15
    %p17 = scmp.eq.s32.totalorder %s16, 0
    %s19 = sadd.s32 %s18, 1
    %s20 = scalar_select %p17, %s18, %s19
    %p23 = pneg %p17
    %p24 = scmp.eq.s32.totalorder %s8, 1
    %p25 = por %p23, %p24
    %p26 = scmp.ne.s32.totalorder %s18, %s21
    %p27 = scmp.eq.s32.totalorder %s8, 0
    %p28 = por %p26, %p27
    %p29 = scmp.ne.s32.totalorder %s18, %s21
    %p30 = scmp.eq.s32.totalorder %s13, 1
    %p31 = por %p29, %p30
    %p32 = scmp.ne.s32.totalorder %s21, %s22
    %p33 = scmp.eq.s32.totalorder %s13, 0
    %p34 = por %p32, %p33
    %p35 = scmp.ne.s32.totalorder %s21, %s22
    %p36 = scmp.eq.s32.totalorder %s14, 1
    %p37 = por %p35, %p36
    %p39 = scmp.ne.s32.totalorder %s22, %s38
    %p40 = scmp.eq.s32.totalorder %s14, 0
    %p41 = por %p39, %p40
    %s43 = sadd.s32 %s42, 1
    %p46 = scmp.eq.s32.totalorder %s8, 1
    %p47 = scmp.ne.s32.totalorder %s42, %s44
    %p48 = scmp.eq.s32.totalorder %s8, 0
    %p49 = por %p47, %p48
    %p50 = scmp.ne.s32.totalorder %s42, %s44
    %p51 = scmp.eq.s32.totalorder %s13, 1
    %p52 = por %p50, %p51
    %p53 = scmp.ne.s32.totalorder %s44, %s45
    %p54 = scmp.eq.s32.totalorder %s13, 0
    %p55 = por %p53, %p54
    %p56 = scmp.ne.s32.totalorder %s44, %s45
    %p57 = scmp.eq.s32.totalorder %s14, 1
    %p58 = por %p56, %p57
    %p60 = scmp.ne.s32.totalorder %s45, %s59
    %p61 = scmp.eq.s32.totalorder %s14, 0
    %p62 = por %p60, %p61
    %s63 = ssub.s32 %s8, %s15
    %p64 = scmp.eq.s32.totalorder %s63, 0
    %s66 = sadd.s32 %s65, 1
    %s67 = scalar_select %p64, %s65, %s66
    %p70 = pneg %p64
    %p71 = scmp.eq.s32.totalorder %s8, 1
    %p72 = por %p70, %p71
    %p73 = scmp.ne.s32.totalorder %s65, %s68
    %p74 = scmp.eq.s32.totalorder %s8, 0
    %p75 = por %p73, %p74
    %p76 = scmp.ne.s32.totalorder %s65, %s68
    %p77 = scmp.eq.s32.totalorder %s13, 1
    %p78 = por %p76, %p77
    %p79 = scmp.ne.s32.totalorder %s68, %s69
    %p80 = scmp.eq.s32.totalorder %s13, 0
    %p81 = por %p79, %p80
    %p82 = scmp.ne.s32.totalorder %s68, %s69
    %p83 = scmp.eq.s32.totalorder %s14, 1
    %p84 = por %p82, %p83
    %p86 = scmp.ne.s32.totalorder %s69, %s85
    %p87 = scmp.eq.s32.totalorder %s14, 0
    %p88 = por %p86, %p87
    %p89 = scmp.le.s32.totalorder 1, %s8
    %p90 = scmp.lt.s32.totalorder %s8, 3
    %p91 = pnand %p89, %p90
    %p92 = pneg %p91
    // Predicated region
    $region9: #{kcge_forward.4} parent=5 // pred_check
      _
    $region10: #{kcge_forward.4} parent=5 // pred_check_branch
      %94 = sbr.rel (%p91) target = $region12
    $region11: #{kcge_forward.4} parent=5 // pred_region
      %s95 = ssub.s32 %s8, 1
      // Predicated region
      $region13: #{kcge_forward.4} parent=11 // pred_check
        %p96 = pneg %p55
      $region14: #{kcge_forward.4} parent=11 // pred_check_branch
        %98 = sbr.rel (%p96) target = $region16
      $region15: #{kcge_forward.4} parent=11 // pred_region
        _
      $region16: #{kcge_forward.4} parent=11 // pred_fallthru
        _
    $region12: #{kcge_forward.4} parent=5 // pred_fallthru
      _
    %p99 = scmp.lt.s32.totalorder %s8, 2
    // Predicated region
    $region17: #{kcge_forward.4} parent=5 // pred_check
      %p100 = pneg %p99
    $region18: #{kcge_forward.4} parent=5 // pred_check_branch
      %102 = sbr.rel (%p100) target = $region20
    $region19: #{kcge_forward.4} parent=5 // pred_region
      // Predicated region
      $region21: #{kcge_forward.4} parent=19 // pred_check
        %p103 = pneg %p28
      $region22: #{kcge_forward.4} parent=19 // pred_check_branch
        %105 = sbr.rel (%p103) target = $region24
      $region23: #{kcge_forward.4} parent=19 // pred_region
        %s106 = smul.u32 16, %s8
        %p107 = scmp.lt.s32.totalorder %s106, 31
        %s108 = scalar_select %p107, %s106, 31
        %s109 = smul.addr %s108, 8
        %s110 = scalar_lea.vmem %s0, %s109
        %s111 = smul.u32 16, %s8
      $region24: #{kcge_forward.4} parent=19 // pred_fallthru
        _
    $region20: #{kcge_forward.4} parent=5 // pred_fallthru
      _
    %p112 = scmp.le.s32.totalorder 1, %s8
    %p113 = scmp.lt.s32.totalorder %s8, 3
    %p114 = pnand %p112, %p113
    %p115 = pneg %p114
    // Predicated region
    $region25: #{kcge_forward.4} parent=5 // pred_check
      _
    $region26: #{kcge_forward.4} parent=5 // pred_check_branch
      %117 = sbr.rel (%p114) target = $region28
    $region27: #{kcge_forward.4} parent=5 // pred_region
      %s118 = ssub.s32 %s8, 1
      %s119 = smul.u32 16, %s13
      %p120 = scmp.lt.s32.totalorder %s119, 31
      %s121 = scalar_select %p120, %s119, 31
      %s122 = smul.addr %s121, 8
      %s123 = scalar_lea.vmem %s0, %s122
      %p124 = pneg %p34
      %p125 = pneg %p31
      %p126 = pneg %p55
      %p127 = pneg %p52
      %p128 = pneg %p81
      %p129 = pneg %p78
      %s130 = smul.u32 16, %s13
      %p131 = scmp.lt.s32.totalorder %s130, 31
      %s132 = scalar_select %p131, %s130, 31
      %s133 = smul.addr %s132, 4
      %s134 = smul.addr %s133, 4
      %s135 = scalar_lea.vmem %s2, %s134
      %s136 = smul.u32 16, %s13
      %p137 = scmp.lt.s32.totalorder %s136, 31
      %s138 = scalar_select %p137, %s136, 31
      %s139 = smul.addr %s138, 8
      %s140 = scalar_lea.vmem %s0, %s139
      %s141 = smul.u32 16, %s13
      %s142 = smul.u32 16, %s13
      %p143 = scmp.lt.s32.totalorder %s142, 31
      %s144 = scalar_select %p143, %s142, 31
      %s145 = smul.addr %s144, 4
      %s146 = smul.addr %s145, 4
      %s147 = scalar_lea.vmem %s2, %s146
      %s148 = smul.u32 16, %s13
      %v150 = vld [vmem:[%s140] sm:$0xff]
      %v151 = vld [vmem:[%s140 + $0x8] sm:$0xff]
      %v152 = vld [vmem:[%s140 + $0x10] sm:$0xff]
      %v153 = vld [vmem:[%s140 + $0x18] sm:$0xff]
      %v154 = vld [vmem:[%s140 + $0x20] sm:$0xff]
      %v155 = vld [vmem:[%s140 + $0x28] sm:$0xff]
      %v156 = vld [vmem:[%s140 + $0x30] sm:$0xff]
      %v157 = vld [vmem:[%s140 + $0x38] sm:$0xff]
      %v158 = vld [vmem:[%s140 + $0x40] sm:$0xff]
      %v159 = vld [vmem:[%s140 + $0x48] sm:$0xff]
      %v160 = vld [vmem:[%s140 + $0x50] sm:$0xff]
      %v161 = vld [vmem:[%s140 + $0x58] sm:$0xff]
      %v162 = vld [vmem:[%s140 + $0x60] sm:$0xff]
      %v163 = vld [vmem:[%s140 + $0x68] sm:$0xff]
      %v164 = vld [vmem:[%s140 + $0x70] sm:$0xff]
      %v165 = vld [vmem:[%s140 + $0x78] sm:$0xff]
      %v166 = vpack.c.bf16 %v151, %v150
      %v167 = vpack.c.bf16 %v153, %v152
      %v168 = vpack.c.bf16 %v155, %v154
      %v169 = vpack.c.bf16 %v157, %v156
      %v170 = vpack.c.bf16 %v159, %v158
      %v171 = vpack.c.bf16 %v161, %v160
      %v172 = vpack.c.bf16 %v163, %v162
      %v173 = vpack.c.bf16 %v165, %v164
      %v174 = vld [vmem:[%s1] sm:$0xff]
      %v175 = vld [vmem:[%s1 + $0x8] sm:$0xff]
      %v176 = vld [vmem:[%s1 + $0x10] sm:$0xff]
      %v177 = vld [vmem:[%s1 + $0x18] sm:$0xff]
      %v178 = vld [vmem:[%s1 + $0x20] sm:$0xff]
      %v179 = vld [vmem:[%s1 + $0x28] sm:$0xff]
      %v180 = vld [vmem:[%s1 + $0x30] sm:$0xff]
      %v181 = vld [vmem:[%s1 + $0x38] sm:$0xff]
      %v182 = vld [vmem:[%s1 + $0x40] sm:$0xff]
      %v183 = vld [vmem:[%s1 + $0x48] sm:$0xff]
      %v184 = vld [vmem:[%s1 + $0x50] sm:$0xff]
      %v185 = vld [vmem:[%s1 + $0x58] sm:$0xff]
      %v186 = vld [vmem:[%s1 + $0x60] sm:$0xff]
      %v187 = vld [vmem:[%s1 + $0x68] sm:$0xff]
      %v188 = vld [vmem:[%s1 + $0x70] sm:$0xff]
      %v189 = vld [vmem:[%s1 + $0x78] sm:$0xff]
      %v190 = vld [vmem:[%s1 + $0x80] sm:$0xff]
      %v191 = vld [vmem:[%s1 + $0x88] sm:$0xff]
      %v192 = vld [vmem:[%s1 + $0x90] sm:$0xff]
      %v193 = vld [vmem:[%s1 + $0x98] sm:$0xff]
      %v194 = vld [vmem:[%s1 + $0xa0] sm:$0xff]
      %v195 = vld [vmem:[%s1 + $0xa8] sm:$0xff]
      %v196 = vld [vmem:[%s1 + $0xb0] sm:$0xff]
      %v197 = vld [vmem:[%s1 + $0xb8] sm:$0xff]
      %v198 = vld [vmem:[%s1 + $0xc0] sm:$0xff]
      %v199 = vld [vmem:[%s1 + $0xc8] sm:$0xff]
      %v200 = vld [vmem:[%s1 + $0xd0] sm:$0xff]
      %v201 = vld [vmem:[%s1 + $0xd8] sm:$0xff]
      %v202 = vld [vmem:[%s1 + $0xe0] sm:$0xff]
      %v203 = vld [vmem:[%s1 + $0xe8] sm:$0xff]
      %v204 = vld [vmem:[%s1 + $0xf0] sm:$0xff]
      %v205 = vld [vmem:[%s1 + $0xf8] sm:$0xff]
      %v238 = vunpack.c.l.b16 %v174
      %v239 = vunpack.c.h.b16 %v174
      %v240 = vunpack.c.l.b16 %v175
      %v241 = vunpack.c.h.b16 %v175
      %v242 = vunpack.c.l.b16 %v176
      %v243 = vunpack.c.h.b16 %v176
      %v244 = vunpack.c.l.b16 %v177
      %v245 = vunpack.c.h.b16 %v177
      %v246 = vunpack.c.l.b16 %v178
      %v247 = vunpack.c.h.b16 %v178
      %v248 = vunpack.c.l.b16 %v179
      %v249 = vunpack.c.h.b16 %v179
      %v250 = vunpack.c.l.b16 %v180
      %v251 = vunpack.c.h.b16 %v180
      %v252 = vunpack.c.l.b16 %v181
      %v253 = vunpack.c.h.b16 %v181
      %v254 = vunpack.c.l.b16 %v182
      %v255 = vunpack.c.h.b16 %v182
      %v256 = vunpack.c.l.b16 %v183
      %v257 = vunpack.c.h.b16 %v183
      %v258 = vunpack.c.l.b16 %v184
      %v259 = vunpack.c.h.b16 %v184
      %v260 = vunpack.c.l.b16 %v185
      %v261 = vunpack.c.h.b16 %v185
      %v262 = vunpack.c.l.b16 %v186
      %v263 = vunpack.c.h.b16 %v186
      %v264 = vunpack.c.l.b16 %v187
      %v265 = vunpack.c.h.b16 %v187
      %v266 = vunpack.c.l.b16 %v188
      %v267 = vunpack.c.h.b16 %v188
      %v268 = vunpack.c.l.b16 %v189
      %v269 = vunpack.c.h.b16 %v189
      %v270 = vunpack.c.l.b16 %v190
      %v271 = vunpack.c.h.b16 %v190
      %v272 = vunpack.c.l.b16 %v191
      %v273 = vunpack.c.h.b16 %v191
      %v274 = vunpack.c.l.b16 %v192
      %v275 = vunpack.c.h.b16 %v192
      %v276 = vunpack.c.l.b16 %v193
      %v277 = vunpack.c.h.b16 %v193
      %v278 = vunpack.c.l.b16 %v194
      %v279 = vunpack.c.h.b16 %v194
      %v280 = vunpack.c.l.b16 %v195
      %v281 = vunpack.c.h.b16 %v195
      %v282 = vunpack.c.l.b16 %v196
      %v283 = vunpack.c.h.b16 %v196
      %v284 = vunpack.c.l.b16 %v197
      %v285 = vunpack.c.h.b16 %v197
      %v286 = vunpack.c.l.b16 %v198
      %v287 = vunpack.c.h.b16 %v198
      %v288 = vunpack.c.l.b16 %v199
      %v289 = vunpack.c.h.b16 %v199
      %v290 = vunpack.c.l.b16 %v200
      %v291 = vunpack.c.h.b16 %v200
      %v292 = vunpack.c.l.b16 %v201
      %v293 = vunpack.c.h.b16 %v201
      %v294 = vunpack.c.l.b16 %v202
      %v295 = vunpack.c.h.b16 %v202
      %v296 = vunpack.c.l.b16 %v203
      %v297 = vunpack.c.h.b16 %v203
      %v298 = vunpack.c.l.b16 %v204
      %v299 = vunpack.c.h.b16 %v204
      %v300 = vunpack.c.l.b16 %v205
      %v301 = vunpack.c.h.b16 %v205
      %v302 = vpack.c.b16 %v242, %v238
      %v303 = vpack.c.b16 %v243, %v239
      %v304 = vpack.c.b16 %v244, %v240
      %v305 = vpack.c.b16 %v245, %v241
      %v306 = vpack.c.b16 %v250, %v246
      %v307 = vpack.c.b16 %v251, %v247
      %v308 = vpack.c.b16 %v252, %v248
      %v309 = vpack.c.b16 %v253, %v249
      %v310 = vpack.c.b16 %v258, %v254
      %v311 = vpack.c.b16 %v259, %v255
      %v312 = vpack.c.b16 %v260, %v256
      %v313 = vpack.c.b16 %v261, %v257
      %v314 = vpack.c.b16 %v266, %v262
      %v315 = vpack.c.b16 %v267, %v263
      %v316 = vpack.c.b16 %v268, %v264
      %v317 = vpack.c.b16 %v269, %v265
      %v318 = vpack.c.b16 %v274, %v270
      %v319 = vpack.c.b16 %v275, %v271
      %v320 = vpack.c.b16 %v276, %v272
      %v321 = vpack.c.b16 %v277, %v273
      %v322 = vpack.c.b16 %v282, %v278
      %v323 = vpack.c.b16 %v283, %v279
      %v324 = vpack.c.b16 %v284, %v280
      %v325 = vpack.c.b16 %v285, %v281
      %v326 = vpack.c.b16 %v290, %v286
      %v327 = vpack.c.b16 %v291, %v287
      %v328 = vpack.c.b16 %v292, %v288
      %v329 = vpack.c.b16 %v293, %v289
      %v330 = vpack.c.b16 %v298, %v294
      %v331 = vpack.c.b16 %v299, %v295
      %v332 = vpack.c.b16 %v300, %v296
      %v333 = vpack.c.b16 %v301, %v297
      %366 = vmatprep.subr.bf16.mxu0 %v331
      %367 = vmatpush1.bf16.msra.mxu0 %v330
      %368 = vmatprep.subr.bf16.mxu0 %v327
      %369 = vmatpush1.bf16.msra.mxu0 %v326
      %370 = vmatprep.subr.bf16.mxu0 %v323
      %371 = vmatpush1.bf16.msra.mxu0 %v322
      %372 = vmatprep.subr.bf16.mxu0 %v319
      %373 = vmatpush1.bf16.msra.mxu0 %v318
      %374 = vmatprep.subr.bf16.mxu0 %v315
      %375 = vmatpush1.bf16.msra.mxu0 %v314
      %376 = vmatprep.subr.bf16.mxu0 %v311
      %377 = vmatpush1.bf16.msra.mxu0 %v310
      %378 = vmatprep.subr.bf16.mxu0 %v307
      %379 = vmatpush1.bf16.msra.mxu0 %v306
      %380 = vmatprep.subr.bf16.mxu0 %v303
      %381 = vmatpush1.bf16.msra.mxu0 %v302
      %382 = vmatprep.subr.bf16.mxu0 0
      %383 = vmatpush2.bf16.msra.mxu0 0
      %384 = vmatprep.subr.bf16.mxu0 0
      %385 = vmatpush2.bf16.msra.mxu0 0
      %386 = vmatprep.subr.bf16.mxu0 0
      %387 = vmatpush2.bf16.msra.mxu0 0
      %388 = vmatprep.subr.bf16.mxu0 0
      %389 = vmatpush2.bf16.msra.mxu0 0
      %390 = vmatprep.subr.bf16.mxu0 0
      %391 = vmatpush2.bf16.msra.mxu0 0
      %392 = vmatprep.subr.bf16.mxu0 0
      %393 = vmatpush2.bf16.msra.mxu0 0
      %394 = vmatprep.subr.bf16.mxu0 0
      %395 = vmatpush2.bf16.msra.mxu0 0
      %396 = vmatprep.subr.bf16.mxu0 0
      %397 = vmatpush2.bf16.msra.mxu0 0
      %398 = vmatprep.mubr.bf16.mxu0 0
      %399 = vmatmul.mubr.bf16.gmra.mxu0 %v166
      %v400 = vpop.f32.mrf.mxu0
      %v401 = vadd.f32 0.0, %v400
      %v402 = vpop.f32.mrf.mxu0
      %v403 = vadd.f32 0.0, %v402
      %v404 = vpop.f32.mrf.mxu0
      %v405 = vadd.f32 0.0, %v404
      %v406 = vpop.f32.mrf.mxu0
      %v407 = vadd.f32 0.0, %v406
      %408 = vmatprep.mubr.bf16.mxu0 0
      %409 = vmatmul.mubr.bf16.gmra.mxu0 %v167
      %v410 = vpop.f32.mrf.mxu0
      %v411 = vadd.f32 0.0, %v410
      %v412 = vpop.f32.mrf.mxu0
      %v413 = vadd.f32 0.0, %v412
      %v414 = vpop.f32.mrf.mxu0
      %v415 = vadd.f32 0.0, %v414
      %v416 = vpop.f32.mrf.mxu0
      %v417 = vadd.f32 0.0, %v416
      %418 = vmatprep.mubr.bf16.mxu0 0
      %419 = vmatmul.mubr.bf16.gmra.mxu0 %v168
      %v420 = vpop.f32.mrf.mxu0
      %v421 = vadd.f32 0.0, %v420
      %v422 = vpop.f32.mrf.mxu0
      %v423 = vadd.f32 0.0, %v422
      %v424 = vpop.f32.mrf.mxu0
      %v425 = vadd.f32 0.0, %v424
      %v426 = vpop.f32.mrf.mxu0
      %v427 = vadd.f32 0.0, %v426
      %428 = vmatprep.mubr.bf16.mxu0 0
      %429 = vmatmul.mubr.bf16.gmra.mxu0 %v169
      %v430 = vpop.f32.mrf.mxu0
      %v431 = vadd.f32 0.0, %v430
      %v432 = vpop.f32.mrf.mxu0
      %v433 = vadd.f32 0.0, %v432
      %v434 = vpop.f32.mrf.mxu0
      %v435 = vadd.f32 0.0, %v434
      %v436 = vpop.f32.mrf.mxu0
      %v437 = vadd.f32 0.0, %v436
      %438 = vmatprep.mubr.bf16.mxu0 0
      %439 = vmatmul.mubr.bf16.gmra.mxu0 %v170
      %v440 = vpop.f32.mrf.mxu0
      %v441 = vadd.f32 0.0, %v440
      %v442 = vpop.f32.mrf.mxu0
      %v443 = vadd.f32 0.0, %v442
      %v444 = vpop.f32.mrf.mxu0
      %v445 = vadd.f32 0.0, %v444
      %v446 = vpop.f32.mrf.mxu0
      %v447 = vadd.f32 0.0, %v446
      %448 = vmatprep.mubr.bf16.mxu0 0
      %449 = vmatmul.mubr.bf16.gmra.mxu0 %v171
      %v450 = vpop.f32.mrf.mxu0
      %v451 = vadd.f32 0.0, %v450
      %v452 = vpop.f32.mrf.mxu0
      %v453 = vadd.f32 0.0, %v452
      %v454 = vpop.f32.mrf.mxu0
      %v455 = vadd.f32 0.0, %v454
      %v456 = vpop.f32.mrf.mxu0
      %v457 = vadd.f32 0.0, %v456
      %458 = vmatprep.mubr.bf16.mxu0 0
      %459 = vmatmul.mubr.bf16.gmra.mxu0 %v172
      %v460 = vpop.f32.mrf.mxu0
      %v461 = vadd.f32 0.0, %v460
      %v462 = vpop.f32.mrf.mxu0
      %v463 = vadd.f32 0.0, %v462
      %v464 = vpop.f32.mrf.mxu0
      %v465 = vadd.f32 0.0, %v464
      %v466 = vpop.f32.mrf.mxu0
      %v467 = vadd.f32 0.0, %v466
      %468 = vmatprep.mubr.bf16.mxu0 0
      %469 = vmatmul.mubr.bf16.gmra.mxu0 %v173
      %v470 = vpop.f32.mrf.mxu0
      %v471 = vadd.f32 0.0, %v470
      %v472 = vpop.f32.mrf.mxu0
      %v473 = vadd.f32 0.0, %v472
      %v474 = vpop.f32.mrf.mxu0
      %v475 = vadd.f32 0.0, %v474
      %v476 = vpop.f32.mrf.mxu0
      %v477 = vadd.f32 0.0, %v476
      %478 = vdwg.mxu0
      %479 = vmatprep.subr.bf16.mxu0 %v333
      %480 = vmatpush1.bf16.msra.mxu0 %v332
      %481 = vmatprep.subr.bf16.mxu0 %v329
      %482 = vmatpush1.bf16.msra.mxu0 %v328
      %483 = vmatprep.subr.bf16.mxu0 %v325
      %484 = vmatpush1.bf16.msra.mxu0 %v324
      %485 = vmatprep.subr.bf16.mxu0 %v321
      %486 = vmatpush1.bf16.msra.mxu0 %v320
      %487 = vmatprep.subr.bf16.mxu0 %v317
      %488 = vmatpush1.bf16.msra.mxu0 %v316
      %489 = vmatprep.subr.bf16.mxu0 %v313
      %490 = vmatpush1.bf16.msra.mxu0 %v312
      %491 = vmatprep.subr.bf16.mxu0 %v309
      %492 = vmatpush1.bf16.msra.mxu0 %v308
      %493 = vmatprep.subr.bf16.mxu0 %v305
      %494 = vmatpush1.bf16.msra.mxu0 %v304
      %495 = vmatprep.subr.bf16.mxu0 0
      %496 = vmatpush2.bf16.msra.mxu0 0
      %497 = vmatprep.subr.bf16.mxu0 0
      %498 = vmatpush2.bf16.msra.mxu0 0
      %499 = vmatprep.subr.bf16.mxu0 0
      %500 = vmatpush2.bf16.msra.mxu0 0
      %501 = vmatprep.subr.bf16.mxu0 0
      %502 = vmatpush2.bf16.msra.mxu0 0
      %503 = vmatprep.subr.bf16.mxu0 0
      %504 = vmatpush2.bf16.msra.mxu0 0
      %505 = vmatprep.subr.bf16.mxu0 0
      %506 = vmatpush2.bf16.msra.mxu0 0
      %507 = vmatprep.subr.bf16.mxu0 0
      %508 = vmatpush2.bf16.msra.mxu0 0
      %509 = vmatprep.subr.bf16.mxu0 0
      %510 = vmatpush2.bf16.msra.mxu0 0
      %511 = vmatprep.mubr.bf16.mxu0 0
      %512 = vmatmul.mubr.bf16.gmra.mxu0 %v166
      %v513 = vpop.f32.mrf.mxu0
      %v514 = vadd.f32 0.0, %v513
      %v515 = vpop.f32.mrf.mxu0
      %v516 = vadd.f32 0.0, %v515
      %v517 = vpop.f32.mrf.mxu0
      %v518 = vadd.f32 0.0, %v517
      %v519 = vpop.f32.mrf.mxu0
      %v520 = vadd.f32 0.0, %v519
      %521 = vmatprep.mubr.bf16.mxu0 0
      %522 = vmatmul.mubr.bf16.gmra.mxu0 %v167
      %v523 = vpop.f32.mrf.mxu0
      %v524 = vadd.f32 0.0, %v523
      %v525 = vpop.f32.mrf.mxu0
      %v526 = vadd.f32 0.0, %v525
      %v527 = vpop.f32.mrf.mxu0
      %v528 = vadd.f32 0.0, %v527
      %v529 = vpop.f32.mrf.mxu0
      %v530 = vadd.f32 0.0, %v529
      %531 = vmatprep.mubr.bf16.mxu0 0
      %532 = vmatmul.mubr.bf16.gmra.mxu0 %v168
      %v533 = vpop.f32.mrf.mxu0
      %v534 = vadd.f32 0.0, %v533
      %v535 = vpop.f32.mrf.mxu0
      %v536 = vadd.f32 0.0, %v535
      %v537 = vpop.f32.mrf.mxu0
      %v538 = vadd.f32 0.0, %v537
      %v539 = vpop.f32.mrf.mxu0
      %v540 = vadd.f32 0.0, %v539
      %541 = vmatprep.mubr.bf16.mxu0 0
      %542 = vmatmul.mubr.bf16.gmra.mxu0 %v169
      %v543 = vpop.f32.mrf.mxu0
      %v544 = vadd.f32 0.0, %v543
      %v545 = vpop.f32.mrf.mxu0
      %v546 = vadd.f32 0.0, %v545
      %v547 = vpop.f32.mrf.mxu0
      %v548 = vadd.f32 0.0, %v547
      %v549 = vpop.f32.mrf.mxu0
      %v550 = vadd.f32 0.0, %v549
      %551 = vmatprep.mubr.bf16.mxu0 0
      %552 = vmatmul.mubr.bf16.gmra.mxu0 %v170
      %v553 = vpop.f32.mrf.mxu0
      %v554 = vadd.f32 0.0, %v553
      %v555 = vpop.f32.mrf.mxu0
      %v556 = vadd.f32 0.0, %v555
      %v557 = vpop.f32.mrf.mxu0
      %v558 = vadd.f32 0.0, %v557
      %v559 = vpop.f32.mrf.mxu0
      %v560 = vadd.f32 0.0, %v559
      %561 = vmatprep.mubr.bf16.mxu0 0
      %562 = vmatmul.mubr.bf16.gmra.mxu0 %v171
      %v563 = vpop.f32.mrf.mxu0
      %v564 = vadd.f32 0.0, %v563
      %v565 = vpop.f32.mrf.mxu0
      %v566 = vadd.f32 0.0, %v565
      %v567 = vpop.f32.mrf.mxu0
      %v568 = vadd.f32 0.0, %v567
      %v569 = vpop.f32.mrf.mxu0
      %v570 = vadd.f32 0.0, %v569
      %571 = vmatprep.mubr.bf16.mxu0 0
      %572 = vmatmul.mubr.bf16.gmra.mxu0 %v172
      %v573 = vpop.f32.mrf.mxu0
      %v574 = vadd.f32 0.0, %v573
      %v575 = vpop.f32.mrf.mxu0
      %v576 = vadd.f32 0.0, %v575
      %v577 = vpop.f32.mrf.mxu0
      %v578 = vadd.f32 0.0, %v577
      %v579 = vpop.f32.mrf.mxu0
      %v580 = vadd.f32 0.0, %v579
      %581 = vmatprep.mubr.bf16.mxu0 0
      %582 = vmatmul.mubr.bf16.gmra.mxu0 %v173
      %v583 = vpop.f32.mrf.mxu0
      %v584 = vadd.f32 0.0, %v583
      %v585 = vpop.f32.mrf.mxu0
      %v586 = vadd.f32 0.0, %v585
      %v587 = vpop.f32.mrf.mxu0
      %v588 = vadd.f32 0.0, %v587
      %v589 = vpop.f32.mrf.mxu0
      %v590 = vadd.f32 0.0, %v589
      %591 = vdwg.mxu0
      %v592 = vpack.c.bf16 %v405, %v401
      %v593 = vpack.c.bf16 %v407, %v403
      %v594 = vpack.c.bf16 %v518, %v514
      %v595 = vpack.c.bf16 %v520, %v516
      %v596 = vpack.c.bf16 %v415, %v411
      %v597 = vpack.c.bf16 %v417, %v413
      %v598 = vpack.c.bf16 %v528, %v524
      %v599 = vpack.c.bf16 %v530, %v526
      %v600 = vpack.c.bf16 %v425, %v421
      %v601 = vpack.c.bf16 %v427, %v423
      %v602 = vpack.c.bf16 %v538, %v534
      %v603 = vpack.c.bf16 %v540, %v536
      %v604 = vpack.c.bf16 %v435, %v431
      %v605 = vpack.c.bf16 %v437, %v433
      %v606 = vpack.c.bf16 %v548, %v544
      %v607 = vpack.c.bf16 %v550, %v546
      %v608 = vpack.c.bf16 %v445, %v441
      %v609 = vpack.c.bf16 %v447, %v443
      %v610 = vpack.c.bf16 %v558, %v554
      %v611 = vpack.c.bf16 %v560, %v556
      %v612 = vpack.c.bf16 %v455, %v451
      %v613 = vpack.c.bf16 %v457, %v453
      %v614 = vpack.c.bf16 %v568, %v564
      %v615 = vpack.c.bf16 %v570, %v566
      %v616 = vpack.c.bf16 %v465, %v461
      %v617 = vpack.c.bf16 %v467, %v463
      %v618 = vpack.c.bf16 %v578, %v574
      %v619 = vpack.c.bf16 %v580, %v576
      %v620 = vpack.c.bf16 %v475, %v471
      %v621 = vpack.c.bf16 %v477, %v473
      %v622 = vpack.c.bf16 %v588, %v584
      %v623 = vpack.c.bf16 %v590, %v586
      %v656 = vunpack.c.l.b16 %v592
      %v657 = vunpack.c.l.b16 %v593
      %v658 = vunpack.c.l.b16 %v594
      %v659 = vunpack.c.l.b16 %v595
      %v660 = vunpack.c.h.b16 %v592
      %v661 = vunpack.c.h.b16 %v593
      %v662 = vunpack.c.h.b16 %v594
      %v663 = vunpack.c.h.b16 %v595
      %v664 = vunpack.c.l.b16 %v596
      %v665 = vunpack.c.l.b16 %v597
      %v666 = vunpack.c.l.b16 %v598
      %v667 = vunpack.c.l.b16 %v599
      %v668 = vunpack.c.h.b16 %v596
      %v669 = vunpack.c.h.b16 %v597
      %v670 = vunpack.c.h.b16 %v598
      %v671 = vunpack.c.h.b16 %v599
      %v672 = vunpack.c.l.b16 %v600
      %v673 = vunpack.c.l.b16 %v601
      %v674 = vunpack.c.l.b16 %v602
      %v675 = vunpack.c.l.b16 %v603
      %v676 = vunpack.c.h.b16 %v600
      %v677 = vunpack.c.h.b16 %v601
      %v678 = vunpack.c.h.b16 %v602
      %v679 = vunpack.c.h.b16 %v603
      %v680 = vunpack.c.l.b16 %v604
      %v681 = vunpack.c.l.b16 %v605
      %v682 = vunpack.c.l.b16 %v606
      %v683 = vunpack.c.l.b16 %v607
      %v684 = vunpack.c.h.b16 %v604
      %v685 = vunpack.c.h.b16 %v605
      %v686 = vunpack.c.h.b16 %v606
      %v687 = vunpack.c.h.b16 %v607
      %v688 = vunpack.c.l.b16 %v608
      %v689 = vunpack.c.l.b16 %v609
      %v690 = vunpack.c.l.b16 %v610
      %v691 = vunpack.c.l.b16 %v611
      %v692 = vunpack.c.h.b16 %v608
      %v693 = vunpack.c.h.b16 %v609
      %v694 = vunpack.c.h.b16 %v610
      %v695 = vunpack.c.h.b16 %v611
      %v696 = vunpack.c.l.b16 %v612
      %v697 = vunpack.c.l.b16 %v613
      %v698 = vunpack.c.l.b16 %v614
      %v699 = vunpack.c.l.b16 %v615
      %v700 = vunpack.c.h.b16 %v612
      %v701 = vunpack.c.h.b16 %v613
      %v702 = vunpack.c.h.b16 %v614
      %v703 = vunpack.c.h.b16 %v615
      %v704 = vunpack.c.l.b16 %v616
      %v705 = vunpack.c.l.b16 %v617
      %v706 = vunpack.c.l.b16 %v618
      %v707 = vunpack.c.l.b16 %v619
      %v708 = vunpack.c.h.b16 %v616
      %v709 = vunpack.c.h.b16 %v617
      %v710 = vunpack.c.h.b16 %v618
      %v711 = vunpack.c.h.b16 %v619
      %v712 = vunpack.c.l.b16 %v620
      %v713 = vunpack.c.l.b16 %v621
      %v714 = vunpack.c.l.b16 %v622
      %v715 = vunpack.c.l.b16 %v623
      %v716 = vunpack.c.h.b16 %v620
      %v717 = vunpack.c.h.b16 %v621
      %v718 = vunpack.c.h.b16 %v622
      %v719 = vunpack.c.h.b16 %v623
      %v720 = vpack.c.b16 %v657, %v656
      %v721 = vpack.c.b16 %v659, %v658
      %v722 = vpack.c.b16 %v661, %v660
      %v723 = vpack.c.b16 %v663, %v662
      %v724 = vpack.c.b16 %v665, %v664
      %v725 = vpack.c.b16 %v667, %v666
      %v726 = vpack.c.b16 %v669, %v668
      %v727 = vpack.c.b16 %v671, %v670
      %v728 = vpack.c.b16 %v673, %v672
      %v729 = vpack.c.b16 %v675, %v674
      %v730 = vpack.c.b16 %v677, %v676
      %v731 = vpack.c.b16 %v679, %v678
      %v732 = vpack.c.b16 %v681, %v680
      %v733 = vpack.c.b16 %v683, %v682
      %v734 = vpack.c.b16 %v685, %v684
      %v735 = vpack.c.b16 %v687, %v686
      %v736 = vpack.c.b16 %v689, %v688
      %v737 = vpack.c.b16 %v691, %v690
      %v738 = vpack.c.b16 %v693, %v692
      %v739 = vpack.c.b16 %v695, %v694
      %v740 = vpack.c.b16 %v697, %v696
      %v741 = vpack.c.b16 %v699, %v698
      %v742 = vpack.c.b16 %v701, %v700
      %v743 = vpack.c.b16 %v703, %v702
      %v744 = vpack.c.b16 %v705, %v704
      %v745 = vpack.c.b16 %v707, %v706
      %v746 = vpack.c.b16 %v709, %v708
      %v747 = vpack.c.b16 %v711, %v710
      %v748 = vpack.c.b16 %v713, %v712
      %v749 = vpack.c.b16 %v715, %v714
      %v750 = vpack.c.b16 %v717, %v716
      %v751 = vpack.c.b16 %v719, %v718
      %784 = vst [vmem:[%s147] sm:$0xff] %v720
      %785 = vst [vmem:[%s147 + $0x8] sm:$0xff] %v721
      %786 = vst [vmem:[%s147 + $0x10] sm:$0xff] %v722
      %787 = vst [vmem:[%s147 + $0x18] sm:$0xff] %v723
      %788 = vst [vmem:[%s147 + $0x20] sm:$0xff] %v724
      %789 = vst [vmem:[%s147 + $0x28] sm:$0xff] %v725
      %790 = vst [vmem:[%s147 + $0x30] sm:$0xff] %v726
      %791 = vst [vmem:[%s147 + $0x38] sm:$0xff] %v727
      %792 = vst [vmem:[%s147 + $0x40] sm:$0xff] %v728
      %793 = vst [vmem:[%s147 + $0x48] sm:$0xff] %v729
      %794 = vst [vmem:[%s147 + $0x50] sm:$0xff] %v730
      %795 = vst [vmem:[%s147 + $0x58] sm:$0xff] %v731
      %796 = vst [vmem:[%s147 + $0x60] sm:$0xff] %v732
      %797 = vst [vmem:[%s147 + $0x68] sm:$0xff] %v733
      %798 = vst [vmem:[%s147 + $0x70] sm:$0xff] %v734
      %799 = vst [vmem:[%s147 + $0x78] sm:$0xff] %v735
      %800 = vst [vmem:[%s147 + $0x80] sm:$0xff] %v736
      %801 = vst [vmem:[%s147 + $0x88] sm:$0xff] %v737
      %802 = vst [vmem:[%s147 + $0x90] sm:$0xff] %v738
      %803 = vst [vmem:[%s147 + $0x98] sm:$0xff] %v739
      %804 = vst [vmem:[%s147 + $0xa0] sm:$0xff] %v740
      %805 = vst [vmem:[%s147 + $0xa8] sm:$0xff] %v741
      %806 = vst [vmem:[%s147 + $0xb0] sm:$0xff] %v742
      %807 = vst [vmem:[%s147 + $0xb8] sm:$0xff] %v743
      %808 = vst [vmem:[%s147 + $0xc0] sm:$0xff] %v744
      %809 = vst [vmem:[%s147 + $0xc8] sm:$0xff] %v745
      %810 = vst [vmem:[%s147 + $0xd0] sm:$0xff] %v746
      %811 = vst [vmem:[%s147 + $0xd8] sm:$0xff] %v747
      %812 = vst [vmem:[%s147 + $0xe0] sm:$0xff] %v748
      %813 = vst [vmem:[%s147 + $0xe8] sm:$0xff] %v749
      %814 = vst [vmem:[%s147 + $0xf0] sm:$0xff] %v750
      %815 = vst [vmem:[%s147 + $0xf8] sm:$0xff] %v751
      %s816 = smul.u32 16, %s13
      %p817 = scmp.lt.s32.totalorder %s816, 31
      %s818 = scalar_select %p817, %s816, 31
      %s819 = smul.addr %s818, 4
      %s820 = smul.addr %s819, 4
      %s821 = scalar_lea.vmem %s2, %s820
      // Predicated region
      $region29: #{kcge_forward.4} parent=27 // pred_check
        %p822 = pneg %p78
      $region30: #{kcge_forward.4} parent=27 // pred_check_branch
        %824 = sbr.rel (%p822) target = $region32
      $region31: #{kcge_forward.4} parent=27 // pred_region
        %s825 = smul.u32 16, %s13
      $region32: #{kcge_forward.4} parent=27 // pred_fallthru
        _
    $region28: #{kcge_forward.4} parent=5 // pred_fallthru
      _
    %p826 = scmp.le.s32.totalorder 2, %s8
    // Predicated region
    $region33: #{kcge_forward.4} parent=5 // pred_check
      %p827 = pneg %p826
    $region34: #{kcge_forward.4} parent=5 // pred_check_branch
      %829 = sbr.rel (%p827) target = $region36
    $region35: #{kcge_forward.4} parent=5 // pred_region
      %s830 = ssub.s32 %s8, 2
      // Predicated region
      $region37: #{kcge_forward.4} parent=35 // pred_check
        %p831 = pneg %p84
      $region38: #{kcge_forward.4} parent=35 // pred_check_branch
        %833 = sbr.rel (%p831) target = $region40
      $region39: #{kcge_forward.4} parent=35 // pred_region
        %s834 = smul.u32 16, %s14
        %p835 = scmp.lt.s32.totalorder %s834, 31
        %s836 = scalar_select %p835, %s834, 31
        %s837 = smul.addr %s836, 4
        %s838 = smul.addr %s837, 4
        %s839 = scalar_lea.vmem %s2, %s838
      $region40: #{kcge_forward.4} parent=35 // pred_fallthru
        _
    $region36: #{kcge_forward.4} parent=5 // pred_fallthru
      _
  $region6: #{kcge_forward.4} parent=0 // loop_footer
    %s12 = sadd.s32 1, %s8
  $region7: #{kcge_forward.4} parent=0 // loop_footer_branch
    %7 = sbr.rel target = $region3
  $region8: #{kcge_forward.4} parent=0 // loop_exit
    _

// kernel: kcge_forward.5
$region0: #{kcge_forward.5}
  #allocation0 [shape = 'u32[]', space=smem, size = 0x4, offset = 0x4, fixed_abs, tag = 'smem constant byte address 0x4 - core index']
  #allocation1 [shape = 'u32[144,128]{1,0:T(1,128)}', space=vmem, size = 0x12000, scoped, tag = 'internal scratch']
  %s0 = inlined_call_operand.vmem [shape: bf16[256,1024], index: 0, kind: input, shape index: {}]
  %s1 = inlined_call_operand.vmem [shape: bf16[1024,128], index: 1, kind: input, shape index: {}]
  %s2 = inlined_call_operand.vmem [shape: f32[1,128], index: 2, kind: input, shape index: {}]
  %s3 = inlined_call_operand.vmem [shape: f32[256,128], index: 3, kind: output, shape index: {}]
  %s4 = sld [smem:[#allocation0]]
  $region53: #{kcge_forward.5} parent=0
    _
  %s6 = ssub.s32 1, %s4
  %s7 = scalar_select 0, %s6, %s4
  loop: start=0, step=1, limit=4
  $region2: #{kcge_forward.5} parent=0 // loop_pre_header
    _
  $region3: #{kcge_forward.5} parent=0 // loop_header
    %s9 = sphi 0, %s13
    %p10 = scmp.ge.s32.totalorder %s9, 4
    %s16 = sphi 0, %s28
    %s17 = sphi 0, %s24
    %s18 = sphi 0, %s16
    %s19 = sphi 0, %s17
    %s20 = sphi 0, %s18
    %s21 = sphi 0, %s19
    %s33 = sphi 0, %s35
    %s36 = sphi 0, %s33
    %s37 = sphi 0, %s36
    %s53 = sphi 0, %s37
    %s59 = sphi 0, %s61
    %s62 = sphi 0, %s59
    %s63 = sphi 0, %s62
    %s79 = sphi 0, %s63
    %s83 = sphi 0, %s83
    %s85 = sphi 0, %s83
    %s86 = sphi 0, %s85
    %s100 = sphi 0, %s86
    %s106 = sphi 0, %s108
    %s109 = sphi 0, %s106
    %s110 = sphi 0, %s109
    %s126 = sphi 0, %s110
  $region4: #{kcge_forward.5} parent=0 // loop_header_branch
    %12 = sbr.rel (%p10) target = $region8
  $region5: #{kcge_forward.5} parent=0 // loop_body
    %s14 = ssub.s32 %s9, 1
    %s15 = ssub.s32 %s9, 2
    %s22 = sadd.s32 1, %s17
    %p23 = scmp.ge.s32.totalorder %s22, 1
    %s24 = scalar_select %p23, 0, %s22
    %s25 = sadd.s32 1, %s16
    %s26 = scalar_select %p23, %s25, %s16
    %p27 = scmp.ge.s32.totalorder %s26, 2
    %s28 = scalar_select %p27, 0, %s26
    %s29 = ssub.s32 %s16, %s28
    %s30 = ssub.s32 %s17, %s24
    %s31 = sor.u32 %s29, %s30
    %p32 = scmp.eq.s32.totalorder %s31, 0
    %s34 = sadd.s32 %s33, 1
    %s35 = scalar_select %p32, %s33, %s34
    %p38 = pneg %p32
    %p39 = scmp.eq.s32.totalorder %s9, 1
    %p40 = por %p38, %p39
    %p41 = scmp.ne.s32.totalorder %s33, %s36
    %p42 = scmp.eq.s32.totalorder %s9, 0
    %p43 = por %p41, %p42
    %p44 = scmp.ne.s32.totalorder %s33, %s36
    %p45 = scmp.eq.s32.totalorder %s14, 1
    %p46 = por %p44, %p45
    %p47 = scmp.ne.s32.totalorder %s36, %s37
    %p48 = scmp.eq.s32.totalorder %s14, 0
    %p49 = por %p47, %p48
    %p50 = scmp.ne.s32.totalorder %s36, %s37
    %p51 = scmp.eq.s32.totalorder %s15, 1
    %p52 = por %p50, %p51
    %p54 = scmp.ne.s32.totalorder %s37, %s53
    %p55 = scmp.eq.s32.totalorder %s15, 0
    %p56 = por %p54, %p55
    %s57 = ssub.s32 %s17, %s24
    %p58 = scmp.eq.s32.totalorder %s57, 0
    %s60 = sadd.s32 %s59, 1
    %s61 = scalar_select %p58, %s59, %s60
    %p64 = pneg %p58
    %p65 = scmp.eq.s32.totalorder %s9, 1
    %p66 = por %p64, %p65
    %p67 = scmp.ne.s32.totalorder %s59, %s62
    %p68 = scmp.eq.s32.totalorder %s9, 0
    %p69 = por %p67, %p68
    %p70 = scmp.ne.s32.totalorder %s59, %s62
    %p71 = scmp.eq.s32.totalorder %s14, 1
    %p72 = por %p70, %p71
    %p73 = scmp.ne.s32.totalorder %s62, %s63
    %p74 = scmp.eq.s32.totalorder %s14, 0
    %p75 = por %p73, %p74
    %p76 = scmp.ne.s32.totalorder %s62, %s63
    %p77 = scmp.eq.s32.totalorder %s15, 1
    %p78 = por %p76, %p77
    %p80 = scmp.ne.s32.totalorder %s63, %s79
    %p81 = scmp.eq.s32.totalorder %s15, 0
    %p82 = por %p80, %p81
    %s84 = sadd.s32 %s83, 1
    %p87 = scmp.eq.s32.totalorder %s9, 1
    %p88 = scmp.ne.s32.totalorder %s83, %s85
    %p89 = scmp.eq.s32.totalorder %s9, 0
    %p90 = por %p88, %p89
    %p91 = scmp.ne.s32.totalorder %s83, %s85
    %p92 = scmp.eq.s32.totalorder %s14, 1
    %p93 = por %p91, %p92
    %p94 = scmp.ne.s32.totalorder %s85, %s86
    %p95 = scmp.eq.s32.totalorder %s14, 0
    %p96 = por %p94, %p95
    %p97 = scmp.ne.s32.totalorder %s85, %s86
    %p98 = scmp.eq.s32.totalorder %s15, 1
    %p99 = por %p97, %p98
    %p101 = scmp.ne.s32.totalorder %s86, %s100
    %p102 = scmp.eq.s32.totalorder %s15, 0
    %p103 = por %p101, %p102
    %s104 = ssub.s32 %s16, %s28
    %p105 = scmp.eq.s32.totalorder %s104, 0
    %s107 = sadd.s32 %s106, 1
    %s108 = scalar_select %p105, %s106, %s107
    %p111 = pneg %p105
    %p112 = scmp.eq.s32.totalorder %s9, 1
    %p113 = por %p111, %p112
    %p114 = scmp.ne.s32.totalorder %s106, %s109
    %p115 = scmp.eq.s32.totalorder %s9, 0
    %p116 = por %p114, %p115
    %p117 = scmp.ne.s32.totalorder %s106, %s109
    %p118 = scmp.eq.s32.totalorder %s14, 1
    %p119 = por %p117, %p118
    %p120 = scmp.ne.s32.totalorder %s109, %s110
    %p121 = scmp.eq.s32.totalorder %s14, 0
    %p122 = por %p120, %p121
    %p123 = scmp.ne.s32.totalorder %s109, %s110
    %p124 = scmp.eq.s32.totalorder %s15, 1
    %p125 = por %p123, %p124
    %p127 = scmp.ne.s32.totalorder %s110, %s126
    %p128 = scmp.eq.s32.totalorder %s15, 0
    %p129 = por %p127, %p128
    %p130 = scmp.le.s32.totalorder 1, %s9
    %p131 = scmp.lt.s32.totalorder %s9, 3
    %p132 = pnand %p130, %p131
    %p133 = pneg %p132
    // Predicated region
    $region9: #{kcge_forward.5} parent=5 // pred_check
      _
    $region10: #{kcge_forward.5} parent=5 // pred_check_branch
      %135 = sbr.rel (%p132) target = $region12
    $region11: #{kcge_forward.5} parent=5 // pred_region
      %s136 = ssub.s32 %s9, 1
      // Predicated region
      $region13: #{kcge_forward.5} parent=11 // pred_check
        %p137 = pneg %p75
      $region14: #{kcge_forward.5} parent=11 // pred_check_branch
        %139 = sbr.rel (%p137) target = $region16
      $region15: #{kcge_forward.5} parent=11 // pred_region
        %s140 = smul.u32 128, %s19
        %p141 = scmp.lt.s32.totalorder %s140, 127
        %s142 = scalar_select %p141, %s140, 127
        %s143 = smul.addr %s142, 4
        %s144 = scalar_lea.vmem %s1, %s143
        %s145 = smul.u32 128, %s19
      $region16: #{kcge_forward.5} parent=11 // pred_fallthru
        _
      // Predicated region
      $region17: #{kcge_forward.5} parent=11 // pred_check
        %p146 = pneg %p96
      $region18: #{kcge_forward.5} parent=11 // pred_check_branch
        %148 = sbr.rel (%p146) target = $region20
      $region19: #{kcge_forward.5} parent=11 // pred_region
        _
      $region20: #{kcge_forward.5} parent=11 // pred_fallthru
        _
    $region12: #{kcge_forward.5} parent=5 // pred_fallthru
      _
    %p149 = scmp.lt.s32.totalorder %s9, 2
    // Predicated region
    $region21: #{kcge_forward.5} parent=5 // pred_check
      %p150 = pneg %p149
    $region22: #{kcge_forward.5} parent=5 // pred_check_branch
      %152 = sbr.rel (%p150) target = $region24
    $region23: #{kcge_forward.5} parent=5 // pred_region
      // Predicated region
      $region25: #{kcge_forward.5} parent=23 // pred_check
        %p153 = pneg %p43
      $region26: #{kcge_forward.5} parent=23 // pred_check_branch
        %155 = sbr.rel (%p153) target = $region28
      $region27: #{kcge_forward.5} parent=23 // pred_region
        %s156 = smul.u32 16, %s16
        %s157 = smul.u32 8, %s17
        %p158 = scmp.lt.s32.totalorder %s156, 31
        %s159 = scalar_select %p158, %s156, 31
        %p160 = scmp.lt.s32.totalorder %s157, 7
        %s161 = scalar_select %p160, %s157, 7
        %s162 = smul.addr %s159, 8
        %s163 = sadd.s32 %s161, %s162
        %s164 = smul.addr %s163, 4
        %s165 = scalar_lea.vmem %s0, %s164
        %s166 = smul.u32 16, %s16
        %s167 = smul.u32 8, %s17
      $region28: #{kcge_forward.5} parent=23 // pred_fallthru
        _
    $region24: #{kcge_forward.5} parent=5 // pred_fallthru
      _
    %p168 = scmp.le.s32.totalorder 1, %s9
    %p169 = scmp.lt.s32.totalorder %s9, 3
    %p170 = pnand %p168, %p169
    %p171 = pneg %p170
    // Predicated region
    $region29: #{kcge_forward.5} parent=5 // pred_check
      _
    $region30: #{kcge_forward.5} parent=5 // pred_check_branch
      %173 = sbr.rel (%p170) target = $region32
    $region31: #{kcge_forward.5} parent=5 // pred_region
      %s174 = ssub.s32 %s9, 1
      %s175 = smul.u32 16, %s18
      %s176 = smul.u32 8, %s19
      %p177 = scmp.lt.s32.totalorder %s175, 31
      %s178 = scalar_select %p177, %s175, 31
      %p179 = scmp.lt.s32.totalorder %s176, 7
      %s180 = scalar_select %p179, %s176, 7
      %s181 = smul.addr %s178, 8
      %s182 = sadd.s32 %s180, %s181
      %s183 = smul.addr %s182, 4
      %s184 = scalar_lea.vmem %s0, %s183
      %p185 = pneg %p49
      %p186 = pneg %p46
      %s187 = smul.u32 128, %s19
      %p188 = scmp.lt.s32.totalorder %s187, 127
      %s189 = scalar_select %p188, %s187, 127
      %s190 = smul.addr %s189, 4
      %s191 = scalar_lea.vmem %s1, %s190
      %p192 = pneg %p75
      %p193 = pneg %p72
      %p194 = pneg %p96
      %p195 = pneg %p93
      %p196 = pneg %p122
      %p197 = pneg %p119
      %s198 = smul.u32 16, %s18
      %p199 = scmp.lt.s32.totalorder %s198, 31
      %s200 = scalar_select %p199, %s198, 31
      %s201 = smul.addr %s200, 8
      %s202 = scalar_lea.vmem %s3, %s201
      %s203 = smul.u32 16, %s18
      %s204 = smul.u32 8, %s19
      %p205 = scmp.lt.s32.totalorder %s203, 31
      %s206 = scalar_select %p205, %s203, 31
      %p207 = scmp.lt.s32.totalorder %s204, 7
      %s208 = scalar_select %p207, %s204, 7
      %s209 = smul.addr %s206, 8
      %s210 = sadd.s32 %s208, %s209
      %s211 = smul.addr %s210, 4
      %s212 = scalar_lea.vmem %s0, %s211
      %s213 = smul.u32 16, %s18
      %s214 = smul.u32 8, %s19
      %s215 = smul.u32 128, %s19
      %p216 = scmp.lt.s32.totalorder %s215, 127
      %s217 = scalar_select %p216, %s215, 127
      %s218 = smul.addr %s217, 4
      %s219 = scalar_lea.vmem %s1, %s218
      %s220 = smul.u32 128, %s19
      %s221 = smul.u32 16, %s18
      %p222 = scmp.lt.s32.totalorder %s221, 31
      %s223 = scalar_select %p222, %s221, 31
      %s224 = smul.addr %s223, 8
      %s225 = scalar_lea.vmem %s3, %s224
      %s226 = smul.u32 16, %s18
      %p228 = scmp.eq.s32.totalorder %s19, 0
      // Predicated region
      $region33: #{kcge_forward.5} parent=31 // pred_check
        %p229 = pneg %p228
      $region34: #{kcge_forward.5} parent=31 // pred_check_branch
        %231 = sbr.rel (%p229) target = $region36
      $region35: #{kcge_forward.5} parent=31 // pred_region
        %232 = vst [vmem:[%s225] sm:$0xff] 0.0
        %233 = vst [vmem:[%s225 + $0x8] sm:$0xff] 0.0
        %234 = vst [vmem:[%s225 + $0x10] sm:$0xff] 0.0
        %235 = vst [vmem:[%s225 + $0x18] sm:$0xff] 0.0
        %236 = vst [vmem:[%s225 + $0x20] sm:$0xff] 0.0
        %237 = vst [vmem:[%s225 + $0x28] sm:$0xff] 0.0
        %238 = vst [vmem:[%s225 + $0x30] sm:$0xff] 0.0
        %239 = vst [vmem:[%s225 + $0x38] sm:$0xff] 0.0
        %240 = vst [vmem:[%s225 + $0x40] sm:$0xff] 0.0
        %241 = vst [vmem:[%s225 + $0x48] sm:$0xff] 0.0
        %242 = vst [vmem:[%s225 + $0x50] sm:$0xff] 0.0
        %243 = vst [vmem:[%s225 + $0x58] sm:$0xff] 0.0
        %244 = vst [vmem:[%s225 + $0x60] sm:$0xff] 0.0
        %245 = vst [vmem:[%s225 + $0x68] sm:$0xff] 0.0
        %246 = vst [vmem:[%s225 + $0x70] sm:$0xff] 0.0
        %247 = vst [vmem:[%s225 + $0x78] sm:$0xff] 0.0
      $region36: #{kcge_forward.5} parent=31 // pred_fallthru
        _
      %v248 = vld [vmem:[%s225] sm:$0xff]
      %v249 = vld [vmem:[%s225 + $0x8] sm:$0xff]
      %v250 = vld [vmem:[%s225 + $0x10] sm:$0xff]
      %v251 = vld [vmem:[%s225 + $0x18] sm:$0xff]
      %v252 = vld [vmem:[%s225 + $0x20] sm:$0xff]
      %v253 = vld [vmem:[%s225 + $0x28] sm:$0xff]
      %v254 = vld [vmem:[%s225 + $0x30] sm:$0xff]
      %v255 = vld [vmem:[%s225 + $0x38] sm:$0xff]
      %v256 = vld [vmem:[%s225 + $0x40] sm:$0xff]
      %v257 = vld [vmem:[%s225 + $0x48] sm:$0xff]
      %v258 = vld [vmem:[%s225 + $0x50] sm:$0xff]
      %v259 = vld [vmem:[%s225 + $0x58] sm:$0xff]
      %v260 = vld [vmem:[%s225 + $0x60] sm:$0xff]
      %v261 = vld [vmem:[%s225 + $0x68] sm:$0xff]
      %v262 = vld [vmem:[%s225 + $0x70] sm:$0xff]
      %v263 = vld [vmem:[%s225 + $0x78] sm:$0xff]
      %v264 = vld [vmem:[%s212] sm:$0xff]
      %v265 = vld [vmem:[%s212 + $0x8] sm:$0xff]
      %v266 = vld [vmem:[%s212 + $0x10] sm:$0xff]
      %v267 = vld [vmem:[%s212 + $0x18] sm:$0xff]
      %v268 = vld [vmem:[%s212 + $0x20] sm:$0xff]
      %v269 = vld [vmem:[%s212 + $0x28] sm:$0xff]
      %v270 = vld [vmem:[%s212 + $0x30] sm:$0xff]
      %v271 = vld [vmem:[%s212 + $0x38] sm:$0xff]
      %v272 = vld [vmem:[%s212 + $0x40] sm:$0xff]
      %v273 = vld [vmem:[%s212 + $0x48] sm:$0xff]
      %v274 = vld [vmem:[%s212 + $0x50] sm:$0xff]
      %v275 = vld [vmem:[%s212 + $0x58] sm:$0xff]
      %v276 = vld [vmem:[%s212 + $0x60] sm:$0xff]
      %v277 = vld [vmem:[%s212 + $0x68] sm:$0xff]
      %v278 = vld [vmem:[%s212 + $0x70] sm:$0xff]
      %v279 = vld [vmem:[%s212 + $0x78] sm:$0xff]
      %v280 = vld [vmem:[%s212 + $0x80] sm:$0xff]
      %v281 = vld [vmem:[%s212 + $0x88] sm:$0xff]
      %v282 = vld [vmem:[%s212 + $0x90] sm:$0xff]
      %v283 = vld [vmem:[%s212 + $0x98] sm:$0xff]
      %v284 = vld [vmem:[%s212 + $0xa0] sm:$0xff]
      %v285 = vld [vmem:[%s212 + $0xa8] sm:$0xff]
      %v286 = vld [vmem:[%s212 + $0xb0] sm:$0xff]
      %v287 = vld [vmem:[%s212 + $0xb8] sm:$0xff]
      %v288 = vld [vmem:[%s212 + $0xc0] sm:$0xff]
      %v289 = vld [vmem:[%s212 + $0xc8] sm:$0xff]
      %v290 = vld [vmem:[%s212 + $0xd0] sm:$0xff]
      %v291 = vld [vmem:[%s212 + $0xd8] sm:$0xff]
      %v292 = vld [vmem:[%s212 + $0xe0] sm:$0xff]
      %v293 = vld [vmem:[%s212 + $0xe8] sm:$0xff]
      %v294 = vld [vmem:[%s212 + $0xf0] sm:$0xff]
      %v295 = vld [vmem:[%s212 + $0xf8] sm:$0xff]
      %v296 = vld [vmem:[%s212 + $0x100] sm:$0xff]
      %v297 = vld [vmem:[%s212 + $0x108] sm:$0xff]
      %v298 = vld [vmem:[%s212 + $0x110] sm:$0xff]
      %v299 = vld [vmem:[%s212 + $0x118] sm:$0xff]
      %v300 = vld [vmem:[%s212 + $0x120] sm:$0xff]
      %v301 = vld [vmem:[%s212 + $0x128] sm:$0xff]
      %v302 = vld [vmem:[%s212 + $0x130] sm:$0xff]
      %v303 = vld [vmem:[%s212 + $0x138] sm:$0xff]
      %v304 = vld [vmem:[%s212 + $0x140] sm:$0xff]
      %v305 = vld [vmem:[%s212 + $0x148] sm:$0xff]
      %v306 = vld [vmem:[%s212 + $0x150] sm:$0xff]
      %v307 = vld [vmem:[%s212 + $0x158] sm:$0xff]
      %v308 = vld [vmem:[%s212 + $0x160] sm:$0xff]
      %v309 = vld [vmem:[%s212 + $0x168] sm:$0xff]
      %v310 = vld [vmem:[%s212 + $0x170] sm:$0xff]
      %v311 = vld [vmem:[%s212 + $0x178] sm:$0xff]
      %v312 = vld [vmem:[%s212 + $0x180] sm:$0xff]
      %v313 = vld [vmem:[%s212 + $0x188] sm:$0xff]
      %v314 = vld [vmem:[%s212 + $0x190] sm:$0xff]
      %v315 = vld [vmem:[%s212 + $0x198] sm:$0xff]
      %v316 = vld [vmem:[%s212 + $0x1a0] sm:$0xff]
      %v317 = vld [vmem:[%s212 + $0x1a8] sm:$0xff]
      %v318 = vld [vmem:[%s212 + $0x1b0] sm:$0xff]
      %v319 = vld [vmem:[%s212 + $0x1b8] sm:$0xff]
      %v320 = vld [vmem:[%s212 + $0x1c0] sm:$0xff]
      %v321 = vld [vmem:[%s212 + $0x1c8] sm:$0xff]
      %v322 = vld [vmem:[%s212 + $0x1d0] sm:$0xff]
      %v323 = vld [vmem:[%s212 + $0x1d8] sm:$0xff]
      %v324 = vld [vmem:[%s212 + $0x1e0] sm:$0xff]
      %v325 = vld [vmem:[%s212 + $0x1e8] sm:$0xff]
      %v326 = vld [vmem:[%s212 + $0x1f0] sm:$0xff]
      %v327 = vld [vmem:[%s212 + $0x1f8] sm:$0xff]
      %v328 = vld [vmem:[%s219] sm:$0xf]
      %v329 = vld [vmem:[%s219 + $0x4] sm:$0xf]
      %v330 = vld [vmem:[%s219 + $0x8] sm:$0xf]
      %v331 = vld [vmem:[%s219 + $0xc] sm:$0xf]
      %v332 = vld [vmem:[%s219 + $0x10] sm:$0xf]
      %v333 = vld [vmem:[%s219 + $0x14] sm:$0xf]
      %v334 = vld [vmem:[%s219 + $0x18] sm:$0xf]
      %v335 = vld [vmem:[%s219 + $0x1c] sm:$0xf]
      %v336 = vld [vmem:[%s219 + $0x20] sm:$0xf]
      %v337 = vld [vmem:[%s219 + $0x24] sm:$0xf]
      %v338 = vld [vmem:[%s219 + $0x28] sm:$0xf]
      %v339 = vld [vmem:[%s219 + $0x2c] sm:$0xf]
      %v340 = vld [vmem:[%s219 + $0x30] sm:$0xf]
      %v341 = vld [vmem:[%s219 + $0x34] sm:$0xf]
      %v342 = vld [vmem:[%s219 + $0x38] sm:$0xf]
      %v343 = vld [vmem:[%s219 + $0x3c] sm:$0xf]
      %v344 = vld [vmem:[%s219 + $0x40] sm:$0xf]
      %v345 = vld [vmem:[%s219 + $0x44] sm:$0xf]
      %v346 = vld [vmem:[%s219 + $0x48] sm:$0xf]
      %v347 = vld [vmem:[%s219 + $0x4c] sm:$0xf]
      %v348 = vld [vmem:[%s219 + $0x50] sm:$0xf]
      %v349 = vld [vmem:[%s219 + $0x54] sm:$0xf]
      %v350 = vld [vmem:[%s219 + $0x58] sm:$0xf]
      %v351 = vld [vmem:[%s219 + $0x5c] sm:$0xf]
      %v352 = vld [vmem:[%s219 + $0x60] sm:$0xf]
      %v353 = vld [vmem:[%s219 + $0x64] sm:$0xf]
      %v354 = vld [vmem:[%s219 + $0x68] sm:$0xf]
      %v355 = vld [vmem:[%s219 + $0x6c] sm:$0xf]
      %v356 = vld [vmem:[%s219 + $0x70] sm:$0xf]
      %v357 = vld [vmem:[%s219 + $0x74] sm:$0xf]
      %v358 = vld [vmem:[%s219 + $0x78] sm:$0xf]
      %v359 = vld [vmem:[%s219 + $0x7c] sm:$0xf]
      %v360 = vld [vmem:[%s219 + $0x80] sm:$0xf]
      %v361 = vld [vmem:[%s219 + $0x84] sm:$0xf]
      %v362 = vld [vmem:[%s219 + $0x88] sm:$0xf]
      %v363 = vld [vmem:[%s219 + $0x8c] sm:$0xf]
      %v364 = vld [vmem:[%s219 + $0x90] sm:$0xf]
      %v365 = vld [vmem:[%s219 + $0x94] sm:$0xf]
      %v366 = vld [vmem:[%s219 + $0x98] sm:$0xf]
      %v367 = vld [vmem:[%s219 + $0x9c] sm:$0xf]
      %v368 = vld [vmem:[%s219 + $0xa0] sm:$0xf]
      %v369 = vld [vmem:[%s219 + $0xa4] sm:$0xf]
      %v370 = vld [vmem:[%s219 + $0xa8] sm:$0xf]
      %v371 = vld [vmem:[%s219 + $0xac] sm:$0xf]
      %v372 = vld [vmem:[%s219 + $0xb0] sm:$0xf]
      %v373 = vld [vmem:[%s219 + $0xb4] sm:$0xf]
      %v374 = vld [vmem:[%s219 + $0xb8] sm:$0xf]
      %v375 = vld [vmem:[%s219 + $0xbc] sm:$0xf]
      %v376 = vld [vmem:[%s219 + $0xc0] sm:$0xf]
      %v377 = vld [vmem:[%s219 + $0xc4] sm:$0xf]
      %v378 = vld [vmem:[%s219 + $0xc8] sm:$0xf]
      %v379 = vld [vmem:[%s219 + $0xcc] sm:$0xf]
      %v380 = vld [vmem:[%s219 + $0xd0] sm:$0xf]
      %v381 = vld [vmem:[%s219 + $0xd4] sm:$0xf]
      %v382 = vld [vmem:[%s219 + $0xd8] sm:$0xf]
      %v383 = vld [vmem:[%s219 + $0xdc] sm:$0xf]
      %v384 = vld [vmem:[%s219 + $0xe0] sm:$0xf]
      %v385 = vld [vmem:[%s219 + $0xe4] sm:$0xf]
      %v386 = vld [vmem:[%s219 + $0xe8] sm:$0xf]
      %v387 = vld [vmem:[%s219 + $0xec] sm:$0xf]
      %v388 = vld [vmem:[%s219 + $0xf0] sm:$0xf]
      %v389 = vld [vmem:[%s219 + $0xf4] sm:$0xf]
      %v390 = vld [vmem:[%s219 + $0xf8] sm:$0xf]
      %v391 = vld [vmem:[%s219 + $0xfc] sm:$0xf]
      %v392 = vld [vmem:[%s219 + $0x100] sm:$0xf]
      %v393 = vld [vmem:[%s219 + $0x104] sm:$0xf]
      %v394 = vld [vmem:[%s219 + $0x108] sm:$0xf]
      %v395 = vld [vmem:[%s219 + $0x10c] sm:$0xf]
      %v396 = vld [vmem:[%s219 + $0x110] sm:$0xf]
      %v397 = vld [vmem:[%s219 + $0x114] sm:$0xf]
      %v398 = vld [vmem:[%s219 + $0x118] sm:$0xf]
      %v399 = vld [vmem:[%s219 + $0x11c] sm:$0xf]
      %v400 = vld [vmem:[%s219 + $0x120] sm:$0xf]
      %v401 = vld [vmem:[%s219 + $0x124] sm:$0xf]
      %v402 = vld [vmem:[%s219 + $0x128] sm:$0xf]
      %v403 = vld [vmem:[%s219 + $0x12c] sm:$0xf]
      %v404 = vld [vmem:[%s219 + $0x130] sm:$0xf]
      %v405 = vld [vmem:[%s219 + $0x134] sm:$0xf]
      %v406 = vld [vmem:[%s219 + $0x138] sm:$0xf]
      %v407 = vld [vmem:[%s219 + $0x13c] sm:$0xf]
      %v408 = vld [vmem:[%s219 + $0x140] sm:$0xf]
      %v409 = vld [vmem:[%s219 + $0x144] sm:$0xf]
      %v410 = vld [vmem:[%s219 + $0x148] sm:$0xf]
      %v411 = vld [vmem:[%s219 + $0x14c] sm:$0xf]
      %v412 = vld [vmem:[%s219 + $0x150] sm:$0xf]
      %v413 = vld [vmem:[%s219 + $0x154] sm:$0xf]
      %v414 = vld [vmem:[%s219 + $0x158] sm:$0xf]
      %v415 = vld [vmem:[%s219 + $0x15c] sm:$0xf]
      %v416 = vld [vmem:[%s219 + $0x160] sm:$0xf]
      %v417 = vld [vmem:[%s219 + $0x164] sm:$0xf]
      %v418 = vld [vmem:[%s219 + $0x168] sm:$0xf]
      %v419 = vld [vmem:[%s219 + $0x16c] sm:$0xf]
      %v420 = vld [vmem:[%s219 + $0x170] sm:$0xf]
      %v421 = vld [vmem:[%s219 + $0x174] sm:$0xf]
      %v422 = vld [vmem:[%s219 + $0x178] sm:$0xf]
      %v423 = vld [vmem:[%s219 + $0x17c] sm:$0xf]
      %v424 = vld [vmem:[%s219 + $0x180] sm:$0xf]
      %v425 = vld [vmem:[%s219 + $0x184] sm:$0xf]
      %v426 = vld [vmem:[%s219 + $0x188] sm:$0xf]
      %v427 = vld [vmem:[%s219 + $0x18c] sm:$0xf]
      %v428 = vld [vmem:[%s219 + $0x190] sm:$0xf]
      %v429 = vld [vmem:[%s219 + $0x194] sm:$0xf]
      %v430 = vld [vmem:[%s219 + $0x198] sm:$0xf]
      %v431 = vld [vmem:[%s219 + $0x19c] sm:$0xf]
      %v432 = vld [vmem:[%s219 + $0x1a0] sm:$0xf]
      %v433 = vld [vmem:[%s219 + $0x1a4] sm:$0xf]
      %v434 = vld [vmem:[%s219 + $0x1a8] sm:$0xf]
      %v435 = vld [vmem:[%s219 + $0x1ac] sm:$0xf]
      %v436 = vld [vmem:[%s219 + $0x1b0] sm:$0xf]
      %v437 = vld [vmem:[%s219 + $0x1b4] sm:$0xf]
      %v438 = vld [vmem:[%s219 + $0x1b8] sm:$0xf]
      %v439 = vld [vmem:[%s219 + $0x1bc] sm:$0xf]
      %v440 = vld [vmem:[%s219 + $0x1c0] sm:$0xf]
      %v441 = vld [vmem:[%s219 + $0x1c4] sm:$0xf]
      %v442 = vld [vmem:[%s219 + $0x1c8] sm:$0xf]
      %v443 = vld [vmem:[%s219 + $0x1cc] sm:$0xf]
      %v444 = vld [vmem:[%s219 + $0x1d0] sm:$0xf]
      %v445 = vld [vmem:[%s219 + $0x1d4] sm:$0xf]
      %v446 = vld [vmem:[%s219 + $0x1d8] sm:$0xf]
      %v447 = vld [vmem:[%s219 + $0x1dc] sm:$0xf]
      %v448 = vld [vmem:[%s219 + $0x1e0] sm:$0xf]
      %v449 = vld [vmem:[%s219 + $0x1e4] sm:$0xf]
      %v450 = vld [vmem:[%s219 + $0x1e8] sm:$0xf]
      %v451 = vld [vmem:[%s219 + $0x1ec] sm:$0xf]
      %v452 = vld [vmem:[%s219 + $0x1f0] sm:$0xf]
      %v453 = vld [vmem:[%s219 + $0x1f4] sm:$0xf]
      %v454 = vld [vmem:[%s219 + $0x1f8] sm:$0xf]
      %v455 = vld [vmem:[%s219 + $0x1fc] sm:$0xf]
      %v520 = vunpack.c.l.b16 %v264
      %v521 = vunpack.c.h.b16 %v264
      %v522 = vunpack.c.l.b16 %v265
      %v523 = vunpack.c.h.b16 %v265
      %v524 = vunpack.c.l.b16 %v266
      %v525 = vunpack.c.h.b16 %v266
      %v526 = vunpack.c.l.b16 %v267
      %v527 = vunpack.c.h.b16 %v267
      %v528 = vunpack.c.l.b16 %v268
      %v529 = vunpack.c.h.b16 %v268
      %v530 = vunpack.c.l.b16 %v269
      %v531 = vunpack.c.h.b16 %v269
      %v532 = vunpack.c.l.b16 %v270
      %v533 = vunpack.c.h.b16 %v270
      %v534 = vunpack.c.l.b16 %v271
      %v535 = vunpack.c.h.b16 %v271
      %v536 = vunpack.c.l.b16 %v272
      %v537 = vunpack.c.h.b16 %v272
      %v538 = vunpack.c.l.b16 %v273
      %v539 = vunpack.c.h.b16 %v273
      %v540 = vunpack.c.l.b16 %v274
      %v541 = vunpack.c.h.b16 %v274
      %v542 = vunpack.c.l.b16 %v275
      %v543 = vunpack.c.h.b16 %v275
      %v544 = vunpack.c.l.b16 %v276
      %v545 = vunpack.c.h.b16 %v276
      %v546 = vunpack.c.l.b16 %v277
      %v547 = vunpack.c.h.b16 %v277
      %v548 = vunpack.c.l.b16 %v278
      %v549 = vunpack.c.h.b16 %v278
      %v550 = vunpack.c.l.b16 %v279
      %v551 = vunpack.c.h.b16 %v279
      %v552 = vunpack.c.l.b16 %v280
      %v553 = vunpack.c.h.b16 %v280
      %v554 = vunpack.c.l.b16 %v281
      %v555 = vunpack.c.h.b16 %v281
      %v556 = vunpack.c.l.b16 %v282
      %v557 = vunpack.c.h.b16 %v282
      %v558 = vunpack.c.l.b16 %v283
      %v559 = vunpack.c.h.b16 %v283
      %v560 = vunpack.c.l.b16 %v284
      %v561 = vunpack.c.h.b16 %v284
      %v562 = vunpack.c.l.b16 %v285
      %v563 = vunpack.c.h.b16 %v285
      %v564 = vunpack.c.l.b16 %v286
      %v565 = vunpack.c.h.b16 %v286
      %v566 = vunpack.c.l.b16 %v287
      %v567 = vunpack.c.h.b16 %v287
      %v568 = vunpack.c.l.b16 %v288
      %v569 = vunpack.c.h.b16 %v288
      %v570 = vunpack.c.l.b16 %v289
      %v571 = vunpack.c.h.b16 %v289
      %v572 = vunpack.c.l.b16 %v290
      %v573 = vunpack.c.h.b16 %v290
      %v574 = vunpack.c.l.b16 %v291
      %v575 = vunpack.c.h.b16 %v291
      %v576 = vunpack.c.l.b16 %v292
      %v577 = vunpack.c.h.b16 %v292
      %v578 = vunpack.c.l.b16 %v293
      %v579 = vunpack.c.h.b16 %v293
      %v580 = vunpack.c.l.b16 %v294
      %v581 = vunpack.c.h.b16 %v294
      %v582 = vunpack.c.l.b16 %v295
      %v583 = vunpack.c.h.b16 %v295
      %v584 = vunpack.c.l.b16 %v296
      %v585 = vunpack.c.h.b16 %v296
      %v586 = vunpack.c.l.b16 %v297
      %v587 = vunpack.c.h.b16 %v297
      %v588 = vunpack.c.l.b16 %v298
      %v589 = vunpack.c.h.b16 %v298
      %v590 = vunpack.c.l.b16 %v299
      %v591 = vunpack.c.h.b16 %v299
      %v592 = vunpack.c.l.b16 %v300
      %v593 = vunpack.c.h.b16 %v300
      %v594 = vunpack.c.l.b16 %v301
      %v595 = vunpack.c.h.b16 %v301
      %v596 = vunpack.c.l.b16 %v302
      %v597 = vunpack.c.h.b16 %v302
      %v598 = vunpack.c.l.b16 %v303
      %v599 = vunpack.c.h.b16 %v303
      %v600 = vunpack.c.l.b16 %v304
      %v601 = vunpack.c.h.b16 %v304
      %v602 = vunpack.c.l.b16 %v305
      %v603 = vunpack.c.h.b16 %v305
      %v604 = vunpack.c.l.b16 %v306
      %v605 = vunpack.c.h.b16 %v306
      %v606 = vunpack.c.l.b16 %v307
      %v607 = vunpack.c.h.b16 %v307
      %v608 = vunpack.c.l.b16 %v308
      %v609 = vunpack.c.h.b16 %v308
      %v610 = vunpack.c.l.b16 %v309
      %v611 = vunpack.c.h.b16 %v309
      %v612 = vunpack.c.l.b16 %v310
      %v613 = vunpack.c.h.b16 %v310
      %v614 = vunpack.c.l.b16 %v311
      %v615 = vunpack.c.h.b16 %v311
      %v616 = vunpack.c.l.b16 %v312
      %v617 = vunpack.c.h.b16 %v312
      %v618 = vunpack.c.l.b16 %v313
      %v619 = vunpack.c.h.b16 %v313
      %v620 = vunpack.c.l.b16 %v314
      %v621 = vunpack.c.h.b16 %v314
      %v622 = vunpack.c.l.b16 %v315
      %v623 = vunpack.c.h.b16 %v315
      %v624 = vunpack.c.l.b16 %v316
      %v625 = vunpack.c.h.b16 %v316
      %v626 = vunpack.c.l.b16 %v317
      %v627 = vunpack.c.h.b16 %v317
      %v628 = vunpack.c.l.b16 %v318
      %v629 = vunpack.c.h.b16 %v318
      %v630 = vunpack.c.l.b16 %v319
      %v631 = vunpack.c.h.b16 %v319
      %v632 = vunpack.c.l.b16 %v320
      %v633 = vunpack.c.h.b16 %v320
      %v634 = vunpack.c.l.b16 %v321
      %v635 = vunpack.c.h.b16 %v321
      %v636 = vunpack.c.l.b16 %v322
      %v637 = vunpack.c.h.b16 %v322
      %v638 = vunpack.c.l.b16 %v323
      %v639 = vunpack.c.h.b16 %v323
      %v640 = vunpack.c.l.b16 %v324
      %v641 = vunpack.c.h.b16 %v324
      %v642 = vunpack.c.l.b16 %v325
      %v643 = vunpack.c.h.b16 %v325
      %v644 = vunpack.c.l.b16 %v326
      %v645 = vunpack.c.h.b16 %v326
      %v646 = vunpack.c.l.b16 %v327
      %v647 = vunpack.c.h.b16 %v327
      %v648 = vpack.c.b16 %v528, %v520
      %v649 = vpack.c.b16 %v529, %v521
      %v650 = vpack.c.b16 %v530, %v522
      %v651 = vpack.c.b16 %v531, %v523
      %v652 = vpack.c.b16 %v532, %v524
      %v653 = vpack.c.b16 %v533, %v525
      %v654 = vpack.c.b16 %v534, %v526
      %v655 = vpack.c.b16 %v535, %v527
      %v656 = vpack.c.b16 %v544, %v536
      %v657 = vpack.c.b16 %v545, %v537
      %v658 = vpack.c.b16 %v546, %v538
      %v659 = vpack.c.b16 %v547, %v539
      %v660 = vpack.c.b16 %v548, %v540
      %v661 = vpack.c.b16 %v549, %v541
      %v662 = vpack.c.b16 %v550, %v542
      %v663 = vpack.c.b16 %v551, %v543
      %v664 = vpack.c.b16 %v560, %v552
      %v665 = vpack.c.b16 %v561, %v553
      %v666 = vpack.c.b16 %v562, %v554
      %v667 = vpack.c.b16 %v563, %v555
      %v668 = vpack.c.b16 %v564, %v556
      %v669 = vpack.c.b16 %v565, %v557
      %v670 = vpack.c.b16 %v566, %v558
      %v671 = vpack.c.b16 %v567, %v559
      %v672 = vpack.c.b16 %v576, %v568
      %v673 = vpack.c.b16 %v577, %v569
      %v674 = vpack.c.b16 %v578, %v570
      %v675 = vpack.c.b16 %v579, %v571
      %v676 = vpack.c.b16 %v580, %v572
      %v677 = vpack.c.b16 %v581, %v573
      %v678 = vpack.c.b16 %v582, %v574
      %v679 = vpack.c.b16 %v583, %v575
      %v680 = vpack.c.b16 %v592, %v584
      %v681 = vpack.c.b16 %v593, %v585
      %v682 = vpack.c.b16 %v594, %v586
      %v683 = vpack.c.b16 %v595, %v587
      %v684 = vpack.c.b16 %v596, %v588
      %v685 = vpack.c.b16 %v597, %v589
      %v686 = vpack.c.b16 %v598, %v590
      %v687 = vpack.c.b16 %v599, %v591
      %v688 = vpack.c.b16 %v608, %v600
      %v689 = vpack.c.b16 %v609, %v601
      %v690 = vpack.c.b16 %v610, %v602
      %v691 = vpack.c.b16 %v611, %v603
      %v692 = vpack.c.b16 %v612, %v604
      %v693 = vpack.c.b16 %v613, %v605
      %v694 = vpack.c.b16 %v614, %v606
      %v695 = vpack.c.b16 %v615, %v607
      %v696 = vpack.c.b16 %v624, %v616
      %v697 = vpack.c.b16 %v625, %v617
      %v698 = vpack.c.b16 %v626, %v618
      %v699 = vpack.c.b16 %v627, %v619
      %v700 = vpack.c.b16 %v628, %v620
      %v701 = vpack.c.b16 %v629, %v621
      %v702 = vpack.c.b16 %v630, %v622
      %v703 = vpack.c.b16 %v631, %v623
      %v704 = vpack.c.b16 %v640, %v632
      %v705 = vpack.c.b16 %v641, %v633
      %v706 = vpack.c.b16 %v642, %v634
      %v707 = vpack.c.b16 %v643, %v635
      %v708 = vpack.c.b16 %v644, %v636
      %v709 = vpack.c.b16 %v645, %v637
      %v710 = vpack.c.b16 %v646, %v638
      %v711 = vpack.c.b16 %v647, %v639
      %v904 = vunpack.c.l.b16 %v328
      %v905 = vunpack.c.l.b16 %v329
      %v906 = vunpack.c.l.b16 %v330
      %v907 = vunpack.c.l.b16 %v331
      %v908 = vunpack.c.l.b16 %v332
      %v909 = vunpack.c.l.b16 %v333
      %v910 = vunpack.c.l.b16 %v334
      %v911 = vunpack.c.l.b16 %v335
      %v912 = vunpack.c.l.b16 %v336
      %v913 = vunpack.c.l.b16 %v337
      %v914 = vunpack.c.l.b16 %v338
      %v915 = vunpack.c.l.b16 %v339
      %v916 = vunpack.c.l.b16 %v340
      %v917 = vunpack.c.l.b16 %v341
      %v918 = vunpack.c.l.b16 %v342
      %v919 = vunpack.c.l.b16 %v343
      %v920 = vunpack.c.l.b16 %v344
      %v921 = vunpack.c.l.b16 %v345
      %v922 = vunpack.c.l.b16 %v346
      %v923 = vunpack.c.l.b16 %v347
      %v924 = vunpack.c.l.b16 %v348
      %v925 = vunpack.c.l.b16 %v349
      %v926 = vunpack.c.l.b16 %v350
      %v927 = vunpack.c.l.b16 %v351
      %v928 = vunpack.c.l.b16 %v352
      %v929 = vunpack.c.l.b16 %v353
      %v930 = vunpack.c.l.b16 %v354
      %v931 = vunpack.c.l.b16 %v355
      %v932 = vunpack.c.l.b16 %v356
      %v933 = vunpack.c.l.b16 %v357
      %v934 = vunpack.c.l.b16 %v358
      %v935 = vunpack.c.l.b16 %v359
      %v936 = vunpack.c.l.b16 %v360
      %v937 = vunpack.c.l.b16 %v361
      %v938 = vunpack.c.l.b16 %v362
      %v939 = vunpack.c.l.b16 %v363
      %v940 = vunpack.c.l.b16 %v364
      %v941 = vunpack.c.l.b16 %v365
      %v942 = vunpack.c.l.b16 %v366
      %v943 = vunpack.c.l.b16 %v367
      %v944 = vunpack.c.l.b16 %v368
      %v945 = vunpack.c.l.b16 %v369
      %v946 = vunpack.c.l.b16 %v370
      %v947 = vunpack.c.l.b16 %v371
      %v948 = vunpack.c.l.b16 %v372
      %v949 = vunpack.c.l.b16 %v373
      %v950 = vunpack.c.l.b16 %v374
      %v951 = vunpack.c.l.b16 %v375
      %v952 = vunpack.c.l.b16 %v376
      %v953 = vunpack.c.l.b16 %v377
      %v954 = vunpack.c.l.b16 %v378
      %v955 = vunpack.c.l.b16 %v379
      %v956 = vunpack.c.l.b16 %v380
      %v957 = vunpack.c.l.b16 %v381
      %v958 = vunpack.c.l.b16 %v382
      %v959 = vunpack.c.l.b16 %v383
      %v960 = vunpack.c.l.b16 %v384
      %v961 = vunpack.c.l.b16 %v385
      %v962 = vunpack.c.l.b16 %v386
      %v963 = vunpack.c.l.b16 %v387
      %v964 = vunpack.c.l.b16 %v388
      %v965 = vunpack.c.l.b16 %v389
      %v966 = vunpack.c.l.b16 %v390
      %v967 = vunpack.c.l.b16 %v391
      %v968 = vunpack.c.l.b16 %v392
      %v969 = vunpack.c.l.b16 %v393
      %v970 = vunpack.c.l.b16 %v394
      %v971 = vunpack.c.l.b16 %v395
      %v972 = vunpack.c.l.b16 %v396
      %v973 = vunpack.c.l.b16 %v397
      %v974 = vunpack.c.l.b16 %v398
      %v975 = vunpack.c.l.b16 %v399
      %v976 = vunpack.c.l.b16 %v400
      %v977 = vunpack.c.l.b16 %v401
      %v978 = vunpack.c.l.b16 %v402
      %v979 = vunpack.c.l.b16 %v403
      %v980 = vunpack.c.l.b16 %v404
      %v981 = vunpack.c.l.b16 %v405
      %v982 = vunpack.c.l.b16 %v406
      %v983 = vunpack.c.l.b16 %v407
      %v984 = vunpack.c.l.b16 %v408
      %v985 = vunpack.c.l.b16 %v409
      %v986 = vunpack.c.l.b16 %v410
      %v987 = vunpack.c.l.b16 %v411
      %v988 = vunpack.c.l.b16 %v412
      %v989 = vunpack.c.l.b16 %v413
      %v990 = vunpack.c.l.b16 %v414
      %v991 = vunpack.c.l.b16 %v415
      %v992 = vunpack.c.l.b16 %v416
      %v993 = vunpack.c.l.b16 %v417
      %v994 = vunpack.c.l.b16 %v418
      %v995 = vunpack.c.l.b16 %v419
      %v996 = vunpack.c.l.b16 %v420
      %v997 = vunpack.c.l.b16 %v421
      %v998 = vunpack.c.l.b16 %v422
      %v999 = vunpack.c.l.b16 %v423
      %v1000 = vunpack.c.l.b16 %v424
      %v1001 = vunpack.c.l.b16 %v425
      %v1002 = vunpack.c.l.b16 %v426
      %v1003 = vunpack.c.l.b16 %v427
      %v1004 = vunpack.c.l.b16 %v428
      %v1005 = vunpack.c.l.b16 %v429
      %v1006 = vunpack.c.l.b16 %v430
      %v1007 = vunpack.c.l.b16 %v431
      %v1008 = vunpack.c.l.b16 %v432
      %v1009 = vunpack.c.l.b16 %v433
      %v1010 = vunpack.c.l.b16 %v434
      %v1011 = vunpack.c.l.b16 %v435
      %v1012 = vunpack.c.l.b16 %v436
      %v1013 = vunpack.c.l.b16 %v437
      %v1014 = vunpack.c.l.b16 %v438
      %v1015 = vunpack.c.l.b16 %v439
      %v1016 = vunpack.c.l.b16 %v440
      %v1017 = vunpack.c.l.b16 %v441
      %v1018 = vunpack.c.l.b16 %v442
      %v1019 = vunpack.c.l.b16 %v443
      %v1020 = vunpack.c.l.b16 %v444
      %v1021 = vunpack.c.l.b16 %v445
      %v1022 = vunpack.c.l.b16 %v446
      %v1023 = vunpack.c.l.b16 %v447
      %v1024 = vunpack.c.l.b16 %v448
      %v1025 = vunpack.c.l.b16 %v449
      %v1026 = vunpack.c.l.b16 %v450
      %v1027 = vunpack.c.l.b16 %v451
      %v1028 = vunpack.c.l.b16 %v452
      %v1029 = vunpack.c.l.b16 %v453
      %v1030 = vunpack.c.l.b16 %v454
      %v1031 = vunpack.c.l.b16 %v455
      %v1032 = vpack.c.b16 %v905, %v904
      %v1033 = vpack.c.b16 %v907, %v906
      %v1034 = vpack.c.b16 %v909, %v908
      %v1035 = vpack.c.b16 %v911, %v910
      %v1036 = vpack.c.b16 %v913, %v912
      %v1037 = vpack.c.b16 %v915, %v914
      %v1038 = vpack.c.b16 %v917, %v916
      %v1039 = vpack.c.b16 %v919, %v918
      %v1040 = vpack.c.b16 %v921, %v920
      %v1041 = vpack.c.b16 %v923, %v922
      %v1042 = vpack.c.b16 %v925, %v924
      %v1043 = vpack.c.b16 %v927, %v926
      %v1044 = vpack.c.b16 %v929, %v928
      %v1045 = vpack.c.b16 %v931, %v930
      %v1046 = vpack.c.b16 %v933, %v932
      %v1047 = vpack.c.b16 %v935, %v934
      %v1048 = vpack.c.b16 %v937, %v936
      %v1049 = vpack.c.b16 %v939, %v938
      %v1050 = vpack.c.b16 %v941, %v940
      %v1051 = vpack.c.b16 %v943, %v942
      %v1052 = vpack.c.b16 %v945, %v944
      %v1053 = vpack.c.b16 %v947, %v946
      %v1054 = vpack.c.b16 %v949, %v948
      %v1055 = vpack.c.b16 %v951, %v950
      %v1056 = vpack.c.b16 %v953, %v952
      %v1057 = vpack.c.b16 %v955, %v954
      %v1058 = vpack.c.b16 %v957, %v956
      %v1059 = vpack.c.b16 %v959, %v958
      %v1060 = vpack.c.b16 %v961, %v960
      %v1061 = vpack.c.b16 %v963, %v962
      %v1062 = vpack.c.b16 %v965, %v964
      %v1063 = vpack.c.b16 %v967, %v966
      %v1064 = vpack.c.b16 %v969, %v968
      %v1065 = vpack.c.b16 %v971, %v970
      %v1066 = vpack.c.b16 %v973, %v972
      %v1067 = vpack.c.b16 %v975, %v974
      %v1068 = vpack.c.b16 %v977, %v976
      %v1069 = vpack.c.b16 %v979, %v978
      %v1070 = vpack.c.b16 %v981, %v980
      %v1071 = vpack.c.b16 %v983, %v982
      %v1072 = vpack.c.b16 %v985, %v984
      %v1073 = vpack.c.b16 %v987, %v986
      %v1074 = vpack.c.b16 %v989, %v988
      %v1075 = vpack.c.b16 %v991, %v990
      %v1076 = vpack.c.b16 %v993, %v992
      %v1077 = vpack.c.b16 %v995, %v994
      %v1078 = vpack.c.b16 %v997, %v996
      %v1079 = vpack.c.b16 %v999, %v998
      %v1080 = vpack.c.b16 %v1001, %v1000
      %v1081 = vpack.c.b16 %v1003, %v1002
      %v1082 = vpack.c.b16 %v1005, %v1004
      %v1083 = vpack.c.b16 %v1007, %v1006
      %v1084 = vpack.c.b16 %v1009, %v1008
      %v1085 = vpack.c.b16 %v1011, %v1010
      %v1086 = vpack.c.b16 %v1013, %v1012
      %v1087 = vpack.c.b16 %v1015, %v1014
      %v1088 = vpack.c.b16 %v1017, %v1016
      %v1089 = vpack.c.b16 %v1019, %v1018
      %v1090 = vpack.c.b16 %v1021, %v1020
      %v1091 = vpack.c.b16 %v1023, %v1022
      %v1092 = vpack.c.b16 %v1025, %v1024
      %v1093 = vpack.c.b16 %v1027, %v1026
      %v1094 = vpack.c.b16 %v1029, %v1028
      %v1095 = vpack.c.b16 %v1031, %v1030
      %1160 = vmatprep.subr.bf16.mxu0 0
      %1161 = vmatpush1.bf16.msra.mxu0 %v1039
      %1162 = vmatprep.subr.bf16.mxu0 0
      %1163 = vmatpush1.bf16.msra.mxu0 %v1038
      %1164 = vmatprep.subr.bf16.mxu0 0
      %1165 = vmatpush1.bf16.msra.mxu0 %v1037
      %1166 = vmatprep.subr.bf16.mxu0 0
      %1167 = vmatpush1.bf16.msra.mxu0 %v1036
      %1168 = vmatprep.subr.bf16.mxu0 0
      %1169 = vmatpush1.bf16.msra.mxu0 %v1035
      %1170 = vmatprep.subr.bf16.mxu0 0
      %1171 = vmatpush1.bf16.msra.mxu0 %v1034
      %1172 = vmatprep.subr.bf16.mxu0 0
      %1173 = vmatpush1.bf16.msra.mxu0 %v1033
      %1174 = vmatprep.subr.bf16.mxu0 0
      %1175 = vmatpush1.bf16.msra.mxu0 %v1032
      %1176 = vmatprep.subr.bf16.mxu0 0
      %1177 = vmatpush2.bf16.msra.mxu0 %v1047
      %1178 = vmatprep.subr.bf16.mxu0 0
      %1179 = vmatpush2.bf16.msra.mxu0 %v1046
      %1180 = vmatprep.subr.bf16.mxu0 0
      %1181 = vmatpush2.bf16.msra.mxu0 %v1045
      %1182 = vmatprep.subr.bf16.mxu0 0
      %1183 = vmatpush2.bf16.msra.mxu0 %v1044
      %1184 = vmatprep.subr.bf16.mxu0 0
      %1185 = vmatpush2.bf16.msra.mxu0 %v1043
      %1186 = vmatprep.subr.bf16.mxu0 0
      %1187 = vmatpush2.bf16.msra.mxu0 %v1042
      %1188 = vmatprep.subr.bf16.mxu0 0
      %1189 = vmatpush2.bf16.msra.mxu0 %v1041
      %1190 = vmatprep.subr.bf16.mxu0 0
      %1191 = vmatpush2.bf16.msra.mxu0 %v1040
      %1192 = vmatprep.mubr.bf16.mxu0 %v649
      %1193 = vmatmul.mubr.bf16.gmra.mxu0 %v648
      %v1194 = vpop.f32.mrf.mxu0
      %v1195 = vadd.f32 0.0, %v1194
      %v1196 = vpop.f32.mrf.mxu0
      %v1197 = vpop.f32.mrf.mxu0
      %v1198 = vadd.f32 0.0, %v1197
      %v1199 = vpop.f32.mrf.mxu0
      %1200 = vmatprep.mubr.bf16.mxu0 %v657
      %1201 = vmatmul.mubr.bf16.gmra.mxu0 %v656
      %v1202 = vpop.f32.mrf.mxu0
      %v1203 = vadd.f32 0.0, %v1202
      %v1204 = vpop.f32.mrf.mxu0
      %v1205 = vpop.f32.mrf.mxu0
      %v1206 = vadd.f32 0.0, %v1205
      %v1207 = vpop.f32.mrf.mxu0
      %1208 = vmatprep.mubr.bf16.mxu0 %v665
      %1209 = vmatmul.mubr.bf16.gmra.mxu0 %v664
      %v1210 = vpop.f32.mrf.mxu0
      %v1211 = vadd.f32 0.0, %v1210
      %v1212 = vpop.f32.mrf.mxu0
      %v1213 = vpop.f32.mrf.mxu0
      %v1214 = vadd.f32 0.0, %v1213
      %v1215 = vpop.f32.mrf.mxu0
      %1216 = vmatprep.mubr.bf16.mxu0 %v673
      %1217 = vmatmul.mubr.bf16.gmra.mxu0 %v672
      %v1218 = vpop.f32.mrf.mxu0
      %v1219 = vadd.f32 0.0, %v1218
      %v1220 = vpop.f32.mrf.mxu0
      %v1221 = vpop.f32.mrf.mxu0
      %v1222 = vadd.f32 0.0, %v1221
      %v1223 = vpop.f32.mrf.mxu0
      %1224 = vmatprep.mubr.bf16.mxu0 %v681
      %1225 = vmatmul.mubr.bf16.gmra.mxu0 %v680
      %v1226 = vpop.f32.mrf.mxu0
      %v1227 = vadd.f32 0.0, %v1226
      %v1228 = vpop.f32.mrf.mxu0
      %v1229 = vpop.f32.mrf.mxu0
      %v1230 = vadd.f32 0.0, %v1229
      %v1231 = vpop.f32.mrf.mxu0
      %1232 = vmatprep.mubr.bf16.mxu0 %v689
      %1233 = vmatmul.mubr.bf16.gmra.mxu0 %v688
      %v1234 = vpop.f32.mrf.mxu0
      %v1235 = vadd.f32 0.0, %v1234
      %v1236 = vpop.f32.mrf.mxu0
      %v1237 = vpop.f32.mrf.mxu0
      %v1238 = vadd.f32 0.0, %v1237
      %v1239 = vpop.f32.mrf.mxu0
      %1240 = vmatprep.mubr.bf16.mxu0 %v697
      %1241 = vmatmul.mubr.bf16.gmra.mxu0 %v696
      %v1242 = vpop.f32.mrf.mxu0
      %v1243 = vadd.f32 0.0, %v1242
      %v1244 = vpop.f32.mrf.mxu0
      %v1245 = vpop.f32.mrf.mxu0
      %v1246 = vadd.f32 0.0, %v1245
      %v1247 = vpop.f32.mrf.mxu0
      %1248 = vmatprep.mubr.bf16.mxu0 %v705
      %1249 = vmatmul.mubr.bf16.gmra.mxu0 %v704
      %v1250 = vpop.f32.mrf.mxu0
      %v1251 = vadd.f32 0.0, %v1250
      %v1252 = vpop.f32.mrf.mxu0
      %v1253 = vpop.f32.mrf.mxu0
      %v1254 = vadd.f32 0.0, %v1253
      %v1255 = vpop.f32.mrf.mxu0
      %1256 = vdwg.mxu0
      %1257 = vmatprep.subr.bf16.mxu0 0
      %1258 = vmatpush1.bf16.msra.mxu0 %v1055
      %1259 = vmatprep.subr.bf16.mxu0 0
      %1260 = vmatpush1.bf16.msra.mxu0 %v1054
      %1261 = vmatprep.subr.bf16.mxu0 0
      %1262 = vmatpush1.bf16.msra.mxu0 %v1053
      %1263 = vmatprep.subr.bf16.mxu0 0
      %1264 = vmatpush1.bf16.msra.mxu0 %v1052
      %1265 = vmatprep.subr.bf16.mxu0 0
      %1266 = vmatpush1.bf16.msra.mxu0 %v1051
      %1267 = vmatprep.subr.bf16.mxu0 0
      %1268 = vmatpush1.bf16.msra.mxu0 %v1050
      %1269 = vmatprep.subr.bf16.mxu0 0
      %1270 = vmatpush1.bf16.msra.mxu0 %v1049
      %1271 = vmatprep.subr.bf16.mxu0 0
      %1272 = vmatpush1.bf16.msra.mxu0 %v1048
      %1273 = vmatprep.subr.bf16.mxu0 0
      %1274 = vmatpush2.bf16.msra.mxu0 %v1063
      %1275 = vmatprep.subr.bf16.mxu0 0
      %1276 = vmatpush2.bf16.msra.mxu0 %v1062
      %1277 = vmatprep.subr.bf16.mxu0 0
      %1278 = vmatpush2.bf16.msra.mxu0 %v1061
      %1279 = vmatprep.subr.bf16.mxu0 0
      %1280 = vmatpush2.bf16.msra.mxu0 %v1060
      %1281 = vmatprep.subr.bf16.mxu0 0
      %1282 = vmatpush2.bf16.msra.mxu0 %v1059
      %1283 = vmatprep.subr.bf16.mxu0 0
      %1284 = vmatpush2.bf16.msra.mxu0 %v1058
      %1285 = vmatprep.subr.bf16.mxu0 0
      %1286 = vmatpush2.bf16.msra.mxu0 %v1057
      %1287 = vmatprep.subr.bf16.mxu0 0
      %1288 = vmatpush2.bf16.msra.mxu0 %v1056
      %1289 = vmatprep.mubr.bf16.mxu0 %v651
      %1290 = vmatmul.mubr.bf16.gmra.mxu0 %v650
      %v1291 = vpop.f32.mrf.mxu0
      %v1292 = vadd.f32 %v1195, %v1291
      %v1293 = vpop.f32.mrf.mxu0
      %v1294 = vpop.f32.mrf.mxu0
      %v1295 = vadd.f32 %v1198, %v1294
      %v1296 = vpop.f32.mrf.mxu0
      %1297 = vmatprep.mubr.bf16.mxu0 %v659
      %1298 = vmatmul.mubr.bf16.gmra.mxu0 %v658
      %v1299 = vpop.f32.mrf.mxu0
      %v1300 = vadd.f32 %v1203, %v1299
      %v1301 = vpop.f32.mrf.mxu0
      %v1302 = vpop.f32.mrf.mxu0
      %v1303 = vadd.f32 %v1206, %v1302
      %v1304 = vpop.f32.mrf.mxu0
      %1305 = vmatprep.mubr.bf16.mxu0 %v667
      %1306 = vmatmul.mubr.bf16.gmra.mxu0 %v666
      %v1307 = vpop.f32.mrf.mxu0
      %v1308 = vadd.f32 %v1211, %v1307
      %v1309 = vpop.f32.mrf.mxu0
      %v1310 = vpop.f32.mrf.mxu0
      %v1311 = vadd.f32 %v1214, %v1310
      %v1312 = vpop.f32.mrf.mxu0
      %1313 = vmatprep.mubr.bf16.mxu0 %v675
      %1314 = vmatmul.mubr.bf16.gmra.mxu0 %v674
      %v1315 = vpop.f32.mrf.mxu0
      %v1316 = vadd.f32 %v1219, %v1315
      %v1317 = vpop.f32.mrf.mxu0
      %v1318 = vpop.f32.mrf.mxu0
      %v1319 = vadd.f32 %v1222, %v1318
      %v1320 = vpop.f32.mrf.mxu0
      %1321 = vmatprep.mubr.bf16.mxu0 %v683
      %1322 = vmatmul.mubr.bf16.gmra.mxu0 %v682
      %v1323 = vpop.f32.mrf.mxu0
      %v1324 = vadd.f32 %v1227, %v1323
      %v1325 = vpop.f32.mrf.mxu0
      %v1326 = vpop.f32.mrf.mxu0
      %v1327 = vadd.f32 %v1230, %v1326
      %v1328 = vpop.f32.mrf.mxu0
      %1329 = vmatprep.mubr.bf16.mxu0 %v691
      %1330 = vmatmul.mubr.bf16.gmra.mxu0 %v690
      %v1331 = vpop.f32.mrf.mxu0
      %v1332 = vadd.f32 %v1235, %v1331
      %v1333 = vpop.f32.mrf.mxu0
      %v1334 = vpop.f32.mrf.mxu0
      %v1335 = vadd.f32 %v1238, %v1334
      %v1336 = vpop.f32.mrf.mxu0
      %1337 = vmatprep.mubr.bf16.mxu0 %v699
      %1338 = vmatmul.mubr.bf16.gmra.mxu0 %v698
      %v1339 = vpop.f32.mrf.mxu0
      %v1340 = vadd.f32 %v1243, %v1339
      %v1341 = vpop.f32.mrf.mxu0
      %v1342 = vpop.f32.mrf.mxu0
      %v1343 = vadd.f32 %v1246, %v1342
      %v1344 = vpop.f32.mrf.mxu0
      %1345 = vmatprep.mubr.bf16.mxu0 %v707
      %1346 = vmatmul.mubr.bf16.gmra.mxu0 %v706
      %v1347 = vpop.f32.mrf.mxu0
      %v1348 = vadd.f32 %v1251, %v1347
      %v1349 = vpop.f32.mrf.mxu0
      %v1350 = vpop.f32.mrf.mxu0
      %v1351 = vadd.f32 %v1254, %v1350
      %v1352 = vpop.f32.mrf.mxu0
      %1353 = vdwg.mxu0
      %1354 = vmatprep.subr.bf16.mxu0 0
      %1355 = vmatpush1.bf16.msra.mxu0 %v1071
      %1356 = vmatprep.subr.bf16.mxu0 0
      %1357 = vmatpush1.bf16.msra.mxu0 %v1070
      %1358 = vmatprep.subr.bf16.mxu0 0
      %1359 = vmatpush1.bf16.msra.mxu0 %v1069
      %1360 = vmatprep.subr.bf16.mxu0 0
      %1361 = vmatpush1.bf16.msra.mxu0 %v1068
      %1362 = vmatprep.subr.bf16.mxu0 0
      %1363 = vmatpush1.bf16.msra.mxu0 %v1067
      %1364 = vmatprep.subr.bf16.mxu0 0
      %1365 = vmatpush1.bf16.msra.mxu0 %v1066
      %1366 = vmatprep.subr.bf16.mxu0 0
      %1367 = vmatpush1.bf16.msra.mxu0 %v1065
      %1368 = vmatprep.subr.bf16.mxu0 0
      %1369 = vmatpush1.bf16.msra.mxu0 %v1064
      %1370 = vmatprep.subr.bf16.mxu0 0
      %1371 = vmatpush2.bf16.msra.mxu0 %v1079
      %1372 = vmatprep.subr.bf16.mxu0 0
      %1373 = vmatpush2.bf16.msra.mxu0 %v1078
      %1374 = vmatprep.subr.bf16.mxu0 0
      %1375 = vmatpush2.bf16.msra.mxu0 %v1077
      %1376 = vmatprep.subr.bf16.mxu0 0
      %1377 = vmatpush2.bf16.msra.mxu0 %v1076
      %1378 = vmatprep.subr.bf16.mxu0 0
      %1379 = vmatpush2.bf16.msra.mxu0 %v1075
      %1380 = vmatprep.subr.bf16.mxu0 0
      %1381 = vmatpush2.bf16.msra.mxu0 %v1074
      %1382 = vmatprep.subr.bf16.mxu0 0
      %1383 = vmatpush2.bf16.msra.mxu0 %v1073
      %1384 = vmatprep.subr.bf16.mxu0 0
      %1385 = vmatpush2.bf16.msra.mxu0 %v1072
      %1386 = vmatprep.mubr.bf16.mxu0 %v653
      %1387 = vmatmul.mubr.bf16.gmra.mxu0 %v652
      %v1388 = vpop.f32.mrf.mxu0
      %v1389 = vadd.f32 %v1292, %v1388
      %v1390 = vpop.f32.mrf.mxu0
      %v1391 = vpop.f32.mrf.mxu0
      %v1392 = vadd.f32 %v1295, %v1391
      %v1393 = vpop.f32.mrf.mxu0
      %1394 = vmatprep.mubr.bf16.mxu0 %v661
      %1395 = vmatmul.mubr.bf16.gmra.mxu0 %v660
      %v1396 = vpop.f32.mrf.mxu0
      %v1397 = vadd.f32 %v1300, %v1396
      %v1398 = vpop.f32.mrf.mxu0
      %v1399 = vpop.f32.mrf.mxu0
      %v1400 = vadd.f32 %v1303, %v1399
      %v1401 = vpop.f32.mrf.mxu0
      %1402 = vmatprep.mubr.bf16.mxu0 %v669
      %1403 = vmatmul.mubr.bf16.gmra.mxu0 %v668
      %v1404 = vpop.f32.mrf.mxu0
      %v1405 = vadd.f32 %v1308, %v1404
      %v1406 = vpop.f32.mrf.mxu0
      %v1407 = vpop.f32.mrf.mxu0
      %v1408 = vadd.f32 %v1311, %v1407
      %v1409 = vpop.f32.mrf.mxu0
      %1410 = vmatprep.mubr.bf16.mxu0 %v677
      %1411 = vmatmul.mubr.bf16.gmra.mxu0 %v676
      %v1412 = vpop.f32.mrf.mxu0
      %v1413 = vadd.f32 %v1316, %v1412
      %v1414 = vpop.f32.mrf.mxu0
      %v1415 = vpop.f32.mrf.mxu0
      %v1416 = vadd.f32 %v1319, %v1415
      %v1417 = vpop.f32.mrf.mxu0
      %1418 = vmatprep.mubr.bf16.mxu0 %v685
      %1419 = vmatmul.mubr.bf16.gmra.mxu0 %v684
      %v1420 = vpop.f32.mrf.mxu0
      %v1421 = vadd.f32 %v1324, %v1420
      %v1422 = vpop.f32.mrf.mxu0
      %v1423 = vpop.f32.mrf.mxu0
      %v1424 = vadd.f32 %v1327, %v1423
      %v1425 = vpop.f32.mrf.mxu0
      %1426 = vmatprep.mubr.bf16.mxu0 %v693
      %1427 = vmatmul.mubr.bf16.gmra.mxu0 %v692
      %v1428 = vpop.f32.mrf.mxu0
      %v1429 = vadd.f32 %v1332, %v1428
      %v1430 = vpop.f32.mrf.mxu0
      %v1431 = vpop.f32.mrf.mxu0
      %v1432 = vadd.f32 %v1335, %v1431
      %v1433 = vpop.f32.mrf.mxu0
      %1434 = vmatprep.mubr.bf16.mxu0 %v701
      %1435 = vmatmul.mubr.bf16.gmra.mxu0 %v700
      %v1436 = vpop.f32.mrf.mxu0
      %v1437 = vadd.f32 %v1340, %v1436
      %v1438 = vpop.f32.mrf.mxu0
      %v1439 = vpop.f32.mrf.mxu0
      %v1440 = vadd.f32 %v1343, %v1439
      %v1441 = vpop.f32.mrf.mxu0
      %1442 = vmatprep.mubr.bf16.mxu0 %v709
      %1443 = vmatmul.mubr.bf16.gmra.mxu0 %v708
      %v1444 = vpop.f32.mrf.mxu0
      %v1445 = vadd.f32 %v1348, %v1444
      %v1446 = vpop.f32.mrf.mxu0
      %v1447 = vpop.f32.mrf.mxu0
      %v1448 = vadd.f32 %v1351, %v1447
      %v1449 = vpop.f32.mrf.mxu0
      %1450 = vdwg.mxu0
      %1451 = vmatprep.subr.bf16.mxu0 0
      %1452 = vmatpush1.bf16.msra.mxu0 %v1087
      %1453 = vmatprep.subr.bf16.mxu0 0
      %1454 = vmatpush1.bf16.msra.mxu0 %v1086
      %1455 = vmatprep.subr.bf16.mxu0 0
      %1456 = vmatpush1.bf16.msra.mxu0 %v1085
      %1457 = vmatprep.subr.bf16.mxu0 0
      %1458 = vmatpush1.bf16.msra.mxu0 %v1084
      %1459 = vmatprep.subr.bf16.mxu0 0
      %1460 = vmatpush1.bf16.msra.mxu0 %v1083
      %1461 = vmatprep.subr.bf16.mxu0 0
      %1462 = vmatpush1.bf16.msra.mxu0 %v1082
      %1463 = vmatprep.subr.bf16.mxu0 0
      %1464 = vmatpush1.bf16.msra.mxu0 %v1081
      %1465 = vmatprep.subr.bf16.mxu0 0
      %1466 = vmatpush1.bf16.msra.mxu0 %v1080
      %1467 = vmatprep.subr.bf16.mxu0 0
      %1468 = vmatpush2.bf16.msra.mxu0 %v1095
      %1469 = vmatprep.subr.bf16.mxu0 0
      %1470 = vmatpush2.bf16.msra.mxu0 %v1094
      %1471 = vmatprep.subr.bf16.mxu0 0
      %1472 = vmatpush2.bf16.msra.mxu0 %v1093
      %1473 = vmatprep.subr.bf16.mxu0 0
      %1474 = vmatpush2.bf16.msra.mxu0 %v1092
      %1475 = vmatprep.subr.bf16.mxu0 0
      %1476 = vmatpush2.bf16.msra.mxu0 %v1091
      %1477 = vmatprep.subr.bf16.mxu0 0
      %1478 = vmatpush2.bf16.msra.mxu0 %v1090
      %1479 = vmatprep.subr.bf16.mxu0 0
      %1480 = vmatpush2.bf16.msra.mxu0 %v1089
      %1481 = vmatprep.subr.bf16.mxu0 0
      %1482 = vmatpush2.bf16.msra.mxu0 %v1088
      %1483 = vmatprep.mubr.bf16.mxu0 %v655
      %1484 = vmatmul.mubr.bf16.gmra.mxu0 %v654
      %v1485 = vpop.f32.mrf.mxu0
      %v1486 = vadd.f32 %v1389, %v1485
      %v1487 = vpop.f32.mrf.mxu0
      %v1488 = vpop.f32.mrf.mxu0
      %v1489 = vadd.f32 %v1392, %v1488
      %v1490 = vpop.f32.mrf.mxu0
      %1491 = vmatprep.mubr.bf16.mxu0 %v663
      %1492 = vmatmul.mubr.bf16.gmra.mxu0 %v662
      %v1493 = vpop.f32.mrf.mxu0
      %v1494 = vadd.f32 %v1397, %v1493
      %v1495 = vpop.f32.mrf.mxu0
      %v1496 = vpop.f32.mrf.mxu0
      %v1497 = vadd.f32 %v1400, %v1496
      %v1498 = vpop.f32.mrf.mxu0
      %1499 = vmatprep.mubr.bf16.mxu0 %v671
      %1500 = vmatmul.mubr.bf16.gmra.mxu0 %v670
      %v1501 = vpop.f32.mrf.mxu0
      %v1502 = vadd.f32 %v1405, %v1501
      %v1503 = vpop.f32.mrf.mxu0
      %v1504 = vpop.f32.mrf.mxu0
      %v1505 = vadd.f32 %v1408, %v1504
      %v1506 = vpop.f32.mrf.mxu0
      %1507 = vmatprep.mubr.bf16.mxu0 %v679
      %1508 = vmatmul.mubr.bf16.gmra.mxu0 %v678
      %v1509 = vpop.f32.mrf.mxu0
      %v1510 = vadd.f32 %v1413, %v1509
      %v1511 = vpop.f32.mrf.mxu0
      %v1512 = vpop.f32.mrf.mxu0
      %v1513 = vadd.f32 %v1416, %v1512
      %v1514 = vpop.f32.mrf.mxu0
      %1515 = vmatprep.mubr.bf16.mxu0 %v687
      %1516 = vmatmul.mubr.bf16.gmra.mxu0 %v686
      %v1517 = vpop.f32.mrf.mxu0
      %v1518 = vadd.f32 %v1421, %v1517
      %v1519 = vpop.f32.mrf.mxu0
      %v1520 = vpop.f32.mrf.mxu0
      %v1521 = vadd.f32 %v1424, %v1520
      %v1522 = vpop.f32.mrf.mxu0
      %1523 = vmatprep.mubr.bf16.mxu0 %v695
      %1524 = vmatmul.mubr.bf16.gmra.mxu0 %v694
      %v1525 = vpop.f32.mrf.mxu0
      %v1526 = vadd.f32 %v1429, %v1525
      %v1527 = vpop.f32.mrf.mxu0
      %v1528 = vpop.f32.mrf.mxu0
      %v1529 = vadd.f32 %v1432, %v1528
      %v1530 = vpop.f32.mrf.mxu0
      %1531 = vmatprep.mubr.bf16.mxu0 %v703
      %1532 = vmatmul.mubr.bf16.gmra.mxu0 %v702
      %v1533 = vpop.f32.mrf.mxu0
      %v1534 = vadd.f32 %v1437, %v1533
      %v1535 = vpop.f32.mrf.mxu0
      %v1536 = vpop.f32.mrf.mxu0
      %v1537 = vadd.f32 %v1440, %v1536
      %v1538 = vpop.f32.mrf.mxu0
      %1539 = vmatprep.mubr.bf16.mxu0 %v711
      %1540 = vmatmul.mubr.bf16.gmra.mxu0 %v710
      %v1541 = vpop.f32.mrf.mxu0
      %v1542 = vadd.f32 %v1445, %v1541
      %v1543 = vpop.f32.mrf.mxu0
      %v1544 = vpop.f32.mrf.mxu0
      %v1545 = vadd.f32 %v1448, %v1544
      %v1546 = vpop.f32.mrf.mxu0
      %1547 = vdwg.mxu0
      %v1548 = vadd.f32 %v248, %v1486
      %v1549 = vadd.f32 %v249, %v1489
      %v1550 = vadd.f32 %v250, %v1494
      %v1551 = vadd.f32 %v251, %v1497
      %v1552 = vadd.f32 %v252, %v1502
      %v1553 = vadd.f32 %v253, %v1505
      %v1554 = vadd.f32 %v254, %v1510
      %v1555 = vadd.f32 %v255, %v1513
      %v1556 = vadd.f32 %v256, %v1518
      %v1557 = vadd.f32 %v257, %v1521
      %v1558 = vadd.f32 %v258, %v1526
      %v1559 = vadd.f32 %v259, %v1529
      %v1560 = vadd.f32 %v260, %v1534
      %v1561 = vadd.f32 %v261, %v1537
      %v1562 = vadd.f32 %v262, %v1542
      %v1563 = vadd.f32 %v263, %v1545
      %1564 = vst [vmem:[%s225] sm:$0xff] %v1548
      %1565 = vst [vmem:[%s225 + $0x8] sm:$0xff] %v1549
      %1566 = vst [vmem:[%s225 + $0x10] sm:$0xff] %v1550
      %1567 = vst [vmem:[%s225 + $0x18] sm:$0xff] %v1551
      %1568 = vst [vmem:[%s225 + $0x20] sm:$0xff] %v1552
      %1569 = vst [vmem:[%s225 + $0x28] sm:$0xff] %v1553
      %1570 = vst [vmem:[%s225 + $0x30] sm:$0xff] %v1554
      %1571 = vst [vmem:[%s225 + $0x38] sm:$0xff] %v1555
      %1572 = vst [vmem:[%s225 + $0x40] sm:$0xff] %v1556
      %1573 = vst [vmem:[%s225 + $0x48] sm:$0xff] %v1557
      %1574 = vst [vmem:[%s225 + $0x50] sm:$0xff] %v1558
      %1575 = vst [vmem:[%s225 + $0x58] sm:$0xff] %v1559
      %1576 = vst [vmem:[%s225 + $0x60] sm:$0xff] %v1560
      %1577 = vst [vmem:[%s225 + $0x68] sm:$0xff] %v1561
      %1578 = vst [vmem:[%s225 + $0x70] sm:$0xff] %v1562
      %1579 = vst [vmem:[%s225 + $0x78] sm:$0xff] %v1563
      // Predicated region
      $region37: #{kcge_forward.5} parent=31 // pred_check
        %p1580 = pneg %p228
      $region38: #{kcge_forward.5} parent=31 // pred_check_branch
        %1582 = sbr.rel (%p1580) target = $region40
      $region39: #{kcge_forward.5} parent=31 // pred_region
        %v1583 = vld [vmem:[%s225] sm:$0xff]
        %v1584 = vld [vmem:[%s225 + $0x8] sm:$0xff]
        %v1585 = vld [vmem:[%s225 + $0x10] sm:$0xff]
        %v1586 = vld [vmem:[%s225 + $0x18] sm:$0xff]
        %v1587 = vld [vmem:[%s225 + $0x20] sm:$0xff]
        %v1588 = vld [vmem:[%s225 + $0x28] sm:$0xff]
        %v1589 = vld [vmem:[%s225 + $0x30] sm:$0xff]
        %v1590 = vld [vmem:[%s225 + $0x38] sm:$0xff]
        %v1591 = vld [vmem:[%s225 + $0x40] sm:$0xff]
        %v1592 = vld [vmem:[%s225 + $0x48] sm:$0xff]
        %v1593 = vld [vmem:[%s225 + $0x50] sm:$0xff]
        %v1594 = vld [vmem:[%s225 + $0x58] sm:$0xff]
        %v1595 = vld [vmem:[%s225 + $0x60] sm:$0xff]
        %v1596 = vld [vmem:[%s225 + $0x68] sm:$0xff]
        %v1597 = vld [vmem:[%s225 + $0x70] sm:$0xff]
        %v1598 = vld [vmem:[%s225 + $0x78] sm:$0xff]
        %v1599 = vld [vmem:[%s2] sm:$0x1]
        %v1601 = vlaneseq
        %v1602 = vshrl.u32 %v1601, 7
        %v1603 = vsub.s32 0, %v1602
        %v1604 = vrot.slane %v1599, %v1603
        %v1606 = vadd.f32 %v1583, %v1604
        %v1607 = vadd.f32 %v1584, %v1604
        %v1608 = vadd.f32 %v1585, %v1604
        %v1609 = vadd.f32 %v1586, %v1604
        %v1610 = vadd.f32 %v1587, %v1604
        %v1611 = vadd.f32 %v1588, %v1604
        %v1612 = vadd.f32 %v1589, %v1604
        %v1613 = vadd.f32 %v1590, %v1604
        %v1614 = vadd.f32 %v1591, %v1604
        %v1615 = vadd.f32 %v1592, %v1604
        %v1616 = vadd.f32 %v1593, %v1604
        %v1617 = vadd.f32 %v1594, %v1604
        %v1618 = vadd.f32 %v1595, %v1604
        %v1619 = vadd.f32 %v1596, %v1604
        %v1620 = vadd.f32 %v1597, %v1604
        %v1621 = vadd.f32 %v1598, %v1604
        %vm1622 = vcmp.ge.f32.partialorder %v1606, 0.0
        %vm1623 = vcmp.ge.f32.partialorder %v1607, 0.0
        %vm1624 = vcmp.ge.f32.partialorder %v1608, 0.0
        %vm1625 = vcmp.ge.f32.partialorder %v1609, 0.0
        %vm1626 = vcmp.ge.f32.partialorder %v1610, 0.0
        %vm1627 = vcmp.ge.f32.partialorder %v1611, 0.0
        %vm1628 = vcmp.ge.f32.partialorder %v1612, 0.0
        %vm1629 = vcmp.ge.f32.partialorder %v1613, 0.0
        %vm1630 = vcmp.ge.f32.partialorder %v1614, 0.0
        %vm1631 = vcmp.ge.f32.partialorder %v1615, 0.0
        %vm1632 = vcmp.ge.f32.partialorder %v1616, 0.0
        %vm1633 = vcmp.ge.f32.partialorder %v1617, 0.0
        %vm1634 = vcmp.ge.f32.partialorder %v1618, 0.0
        %vm1635 = vcmp.ge.f32.partialorder %v1619, 0.0
        %vm1636 = vcmp.ge.f32.partialorder %v1620, 0.0
        %vm1637 = vcmp.ge.f32.partialorder %v1621, 0.0
        %v1638 = vmul.f32 %v1606, 0.01
        %v1639 = vmul.f32 %v1607, 0.01
        %v1640 = vmul.f32 %v1608, 0.01
        %v1641 = vmul.f32 %v1609, 0.01
        %v1642 = vmul.f32 %v1610, 0.01
        %v1643 = vmul.f32 %v1611, 0.01
        %v1644 = vmul.f32 %v1612, 0.01
        %v1645 = vmul.f32 %v1613, 0.01
        %v1646 = vmul.f32 %v1614, 0.01
        %v1647 = vmul.f32 %v1615, 0.01
        %v1648 = vmul.f32 %v1616, 0.01
        %v1649 = vmul.f32 %v1617, 0.01
        %v1650 = vmul.f32 %v1618, 0.01
        %v1651 = vmul.f32 %v1619, 0.01
        %v1652 = vmul.f32 %v1620, 0.01
        %v1653 = vmul.f32 %v1621, 0.01
        %v1654 = vsel %vm1622, %v1606, %v1638
        %v1655 = vsel %vm1623, %v1607, %v1639
        %v1656 = vsel %vm1624, %v1608, %v1640
        %v1657 = vsel %vm1625, %v1609, %v1641
        %v1658 = vsel %vm1626, %v1610, %v1642
        %v1659 = vsel %vm1627, %v1611, %v1643
        %v1660 = vsel %vm1628, %v1612, %v1644
        %v1661 = vsel %vm1629, %v1613, %v1645
        %v1662 = vsel %vm1630, %v1614, %v1646
        %v1663 = vsel %vm1631, %v1615, %v1647
        %v1664 = vsel %vm1632, %v1616, %v1648
        %v1665 = vsel %vm1633, %v1617, %v1649
        %v1666 = vsel %vm1634, %v1618, %v1650
        %v1667 = vsel %vm1635, %v1619, %v1651
        %v1668 = vsel %vm1636, %v1620, %v1652
        %v1669 = vsel %vm1637, %v1621, %v1653
        %1670 = vst [vmem:[%s225] sm:$0xff] %v1654
        %1671 = vst [vmem:[%s225 + $0x8] sm:$0xff] %v1655
        %1672 = vst [vmem:[%s225 + $0x10] sm:$0xff] %v1656
        %1673 = vst [vmem:[%s225 + $0x18] sm:$0xff] %v1657
        %1674 = vst [vmem:[%s225 + $0x20] sm:$0xff] %v1658
        %1675 = vst [vmem:[%s225 + $0x28] sm:$0xff] %v1659
        %1676 = vst [vmem:[%s225 + $0x30] sm:$0xff] %v1660
        %1677 = vst [vmem:[%s225 + $0x38] sm:$0xff] %v1661
        %1678 = vst [vmem:[%s225 + $0x40] sm:$0xff] %v1662
        %1679 = vst [vmem:[%s225 + $0x48] sm:$0xff] %v1663
        %1680 = vst [vmem:[%s225 + $0x50] sm:$0xff] %v1664
        %1681 = vst [vmem:[%s225 + $0x58] sm:$0xff] %v1665
        %1682 = vst [vmem:[%s225 + $0x60] sm:$0xff] %v1666
        %1683 = vst [vmem:[%s225 + $0x68] sm:$0xff] %v1667
        %1684 = vst [vmem:[%s225 + $0x70] sm:$0xff] %v1668
        %1685 = vst [vmem:[%s225 + $0x78] sm:$0xff] %v1669
      $region40: #{kcge_forward.5} parent=31 // pred_fallthru
        _
      %s1686 = smul.u32 16, %s18
      %p1687 = scmp.lt.s32.totalorder %s1686, 31
      %s1688 = scalar_select %p1687, %s1686, 31
      %s1689 = smul.addr %s1688, 8
      %s1690 = scalar_lea.vmem %s3, %s1689
      // Predicated region
      $region41: #{kcge_forward.5} parent=31 // pred_check
        %p1691 = pneg %p119
      $region42: #{kcge_forward.5} parent=31 // pred_check_branch
        %1693 = sbr.rel (%p1691) target = $region44
      $region43: #{kcge_forward.5} parent=31 // pred_region
        %s1694 = smul.u32 16, %s18
      $region44: #{kcge_forward.5} parent=31 // pred_fallthru
        _
    $region32: #{kcge_forward.5} parent=5 // pred_fallthru
      _
    %p1695 = scmp.le.s32.totalorder 2, %s9
    // Predicated region
    $region45: #{kcge_forward.5} parent=5 // pred_check
      %p1696 = pneg %p1695
    $region46: #{kcge_forward.5} parent=5 // pred_check_branch
      %1698 = sbr.rel (%p1696) target = $region48
    $region47: #{kcge_forward.5} parent=5 // pred_region
      %s1699 = ssub.s32 %s9, 2
      // Predicated region
      $region49: #{kcge_forward.5} parent=47 // pred_check
        %p1700 = pneg %p125
      $region50: #{kcge_forward.5} parent=47 // pred_check_branch
        %1702 = sbr.rel (%p1700) target = $region52
      $region51: #{kcge_forward.5} parent=47 // pred_region
        %s1703 = smul.u32 16, %s20
        %p1704 = scmp.lt.s32.totalorder %s1703, 31
        %s1705 = scalar_select %p1704, %s1703, 31
        %s1706 = smul.addr %s1705, 8
        %s1707 = scalar_lea.vmem %s3, %s1706
      $region52: #{kcge_forward.5} parent=47 // pred_fallthru
        _
    $region48: #{kcge_forward.5} parent=5 // pred_fallthru
      _
  $region6: #{kcge_forward.5} parent=0 // loop_footer
    %s13 = sadd.s32 1, %s9
  $region7: #{kcge_forward.5} parent=0 // loop_footer_branch
    %8 = sbr.rel target = $region3
  $region8: #{kcge_forward.5} parent=0 // loop_exit
    _

// kernel: kcge_forward.7
$region0: #{kcge_forward.7}
  #allocation0 [shape = 'u32[]', space=smem, size = 0x4, offset = 0x4, fixed_abs, tag = 'smem constant byte address 0x4 - core index']
  #allocation1 [shape = 'u32[144,128]{1,0:T(1,128)}', space=vmem, size = 0x12000, scoped, tag = 'internal scratch']
  %s0 = inlined_call_operand.vmem [shape: bf16[256,1024], index: 0, kind: input, shape index: {}]
  %s1 = inlined_call_operand.vmem [shape: bf16[1024,128], index: 1, kind: input, shape index: {}]
  %s2 = inlined_call_operand.vmem [shape: f32[1,128], index: 2, kind: input, shape index: {}]
  %s3 = inlined_call_operand.vmem [shape: f32[256,128], index: 3, kind: input, shape index: {}]
  %s4 = inlined_call_operand.vmem [shape: f32[256,128], index: 4, kind: input, shape index: {}]
  %s5 = inlined_call_operand.hbm [shape: f32[256,128], index: 5, kind: output, shape index: {0}]
  %s6 = inlined_call_operand.hbm [shape: f32[256,128], index: 6, kind: output, shape index: {1}]
  %7 = xla_tuple %s5, %s6
  %s8 = sld [smem:[#allocation0]]
  $region69: #{kcge_forward.7} parent=0
    _
  %s10 = ssub.s32 1, %s8
  %s11 = scalar_select 0, %s10, %s8
  $region1: #{kcge_forward.7} parent=0
    #allocation2 [shape = 'u8[131072]{0}', space=vmem, size = 0x20000, scoped, tag = 'output window, operand 0']
    #allocation3 [shape = 's32[2]{0}', space=sflag, size = 0x8, scoped, tag = 'scoped memory for kcge_forward.7']
    #allocation4 [shape = 'u8[131072]{0}', space=vmem, size = 0x20000, scoped, tag = 'output window, operand 1']
    #allocation5 [shape = 's32[2]{0}', space=sflag, size = 0x8, scoped, tag = 'scoped memory for kcge_forward.7']
    %12 = vsyncpa [#allocation3], 0
    %s13 = scalar_lea.sflag [#allocation3], 1
    %14 = vsyncpa %s13, 0
    %15 = vsyncpa [#allocation5], 0
    %s16 = scalar_lea.sflag [#allocation5], 1
    %17 = vsyncpa %s16, 0
    loop: start=0, step=1, limit=4
    $region2: #{kcge_forward.7} parent=1 // loop_pre_header
      _
    $region3: #{kcge_forward.7} parent=1 // loop_header
      %s19 = sphi 0, %s23
      %p20 = scmp.ge.s32.totalorder %s19, 4
      %s26 = sphi 0, %s38
      %s27 = sphi 0, %s34
      %s28 = sphi 0, %s26
      %s29 = sphi 0, %s27
      %s30 = sphi 0, %s28
      %s31 = sphi 0, %s29
      %s43 = sphi 0, %s45
      %s46 = sphi 0, %s43
      %s47 = sphi 0, %s46
      %s63 = sphi 0, %s47
      %s69 = sphi 0, %s71
      %s72 = sphi 0, %s69
      %s73 = sphi 0, %s72
      %s89 = sphi 0, %s73
      %s93 = sphi 0, %s93
      %s95 = sphi 0, %s93
      %s96 = sphi 0, %s95
      %s110 = sphi 0, %s96
      %s116 = sphi 0, %s118
      %s119 = sphi 0, %s116
      %s120 = sphi 0, %s119
      %s136 = sphi 0, %s120
      %s142 = sphi 0, %s144
      %s145 = sphi 0, %s142
      %s146 = sphi 0, %s145
      %s162 = sphi 0, %s146
      %s168 = sphi 0, %s170
      %s171 = sphi 0, %s168
      %s172 = sphi 0, %s171
      %s188 = sphi 0, %s172
      %s194 = sphi 0, %s196
      %s197 = sphi 0, %s194
      %s198 = sphi 0, %s197
      %s214 = sphi 0, %s198
    $region4: #{kcge_forward.7} parent=1 // loop_header_branch
      %22 = sbr.rel (%p20) target = $region8
    $region5: #{kcge_forward.7} parent=1 // loop_body
      %s24 = ssub.s32 %s19, 1
      %s25 = ssub.s32 %s19, 2
      %s32 = sadd.s32 1, %s27
      %p33 = scmp.ge.s32.totalorder %s32, 1
      %s34 = scalar_select %p33, 0, %s32
      %s35 = sadd.s32 1, %s26
      %s36 = scalar_select %p33, %s35, %s26
      %p37 = scmp.ge.s32.totalorder %s36, 2
      %s38 = scalar_select %p37, 0, %s36
      %s39 = ssub.s32 %s26, %s38
      %s40 = ssub.s32 %s27, %s34
      %s41 = sor.u32 %s39, %s40
      %p42 = scmp.eq.s32.totalorder %s41, 0
      %s44 = sadd.s32 %s43, 1
      %s45 = scalar_select %p42, %s43, %s44
      %p48 = pneg %p42
      %p49 = scmp.eq.s32.totalorder %s19, 1
      %p50 = por %p48, %p49
      %p51 = scmp.ne.s32.totalorder %s43, %s46
      %p52 = scmp.eq.s32.totalorder %s19, 0
      %p53 = por %p51, %p52
      %p54 = scmp.ne.s32.totalorder %s43, %s46
      %p55 = scmp.eq.s32.totalorder %s24, 1
      %p56 = por %p54, %p55
      %p57 = scmp.ne.s32.totalorder %s46, %s47
      %p58 = scmp.eq.s32.totalorder %s24, 0
      %p59 = por %p57, %p58
      %p60 = scmp.ne.s32.totalorder %s46, %s47
      %p61 = scmp.eq.s32.totalorder %s25, 1
      %p62 = por %p60, %p61
      %p64 = scmp.ne.s32.totalorder %s47, %s63
      %p65 = scmp.eq.s32.totalorder %s25, 0
      %p66 = por %p64, %p65
      %s67 = ssub.s32 %s27, %s34
      %p68 = scmp.eq.s32.totalorder %s67, 0
      %s70 = sadd.s32 %s69, 1
      %s71 = scalar_select %p68, %s69, %s70
      %p74 = pneg %p68
      %p75 = scmp.eq.s32.totalorder %s19, 1
      %p76 = por %p74, %p75
      %p77 = scmp.ne.s32.totalorder %s69, %s72
      %p78 = scmp.eq.s32.totalorder %s19, 0
      %p79 = por %p77, %p78
      %p80 = scmp.ne.s32.totalorder %s69, %s72
      %p81 = scmp.eq.s32.totalorder %s24, 1
      %p82 = por %p80, %p81
      %p83 = scmp.ne.s32.totalorder %s72, %s73
      %p84 = scmp.eq.s32.totalorder %s24, 0
      %p85 = por %p83, %p84
      %p86 = scmp.ne.s32.totalorder %s72, %s73
      %p87 = scmp.eq.s32.totalorder %s25, 1
      %p88 = por %p86, %p87
      %p90 = scmp.ne.s32.totalorder %s73, %s89
      %p91 = scmp.eq.s32.totalorder %s25, 0
      %p92 = por %p90, %p91
      %s94 = sadd.s32 %s93, 1
      %p97 = scmp.eq.s32.totalorder %s19, 1
      %p98 = scmp.ne.s32.totalorder %s93, %s95
      %p99 = scmp.eq.s32.totalorder %s19, 0
      %p100 = por %p98, %p99
      %p101 = scmp.ne.s32.totalorder %s93, %s95
      %p102 = scmp.eq.s32.totalorder %s24, 1
      %p103 = por %p101, %p102
      %p104 = scmp.ne.s32.totalorder %s95, %s96
      %p105 = scmp.eq.s32.totalorder %s24, 0
      %p106 = por %p104, %p105
      %p107 = scmp.ne.s32.totalorder %s95, %s96
      %p108 = scmp.eq.s32.totalorder %s25, 1
      %p109 = por %p107, %p108
      %p111 = scmp.ne.s32.totalorder %s96, %s110
      %p112 = scmp.eq.s32.totalorder %s25, 0
      %p113 = por %p111, %p112
      %s114 = ssub.s32 %s26, %s38
      %p115 = scmp.eq.s32.totalorder %s114, 0
      %s117 = sadd.s32 %s116, 1
      %s118 = scalar_select %p115, %s116, %s117
      %p121 = pneg %p115
      %p122 = scmp.eq.s32.totalorder %s19, 1
      %p123 = por %p121, %p122
      %p124 = scmp.ne.s32.totalorder %s116, %s119
      %p125 = scmp.eq.s32.totalorder %s19, 0
      %p126 = por %p124, %p125
      %p127 = scmp.ne.s32.totalorder %s116, %s119
      %p128 = scmp.eq.s32.totalorder %s24, 1
      %p129 = por %p127, %p128
      %p130 = scmp.ne.s32.totalorder %s119, %s120
      %p131 = scmp.eq.s32.totalorder %s24, 0
      %p132 = por %p130, %p131
      %p133 = scmp.ne.s32.totalorder %s119, %s120
      %p134 = scmp.eq.s32.totalorder %s25, 1
      %p135 = por %p133, %p134
      %p137 = scmp.ne.s32.totalorder %s120, %s136
      %p138 = scmp.eq.s32.totalorder %s25, 0
      %p139 = por %p137, %p138
      %s140 = ssub.s32 %s26, %s38
      %p141 = scmp.eq.s32.totalorder %s140, 0
      %s143 = sadd.s32 %s142, 1
      %s144 = scalar_select %p141, %s142, %s143
      %p147 = pneg %p141
      %p148 = scmp.eq.s32.totalorder %s19, 1
      %p149 = por %p147, %p148
      %p150 = scmp.ne.s32.totalorder %s142, %s145
      %p151 = scmp.eq.s32.totalorder %s19, 0
      %p152 = por %p150, %p151
      %p153 = scmp.ne.s32.totalorder %s142, %s145
      %p154 = scmp.eq.s32.totalorder %s24, 1
      %p155 = por %p153, %p154
      %p156 = scmp.ne.s32.totalorder %s145, %s146
      %p157 = scmp.eq.s32.totalorder %s24, 0
      %p158 = por %p156, %p157
      %p159 = scmp.ne.s32.totalorder %s145, %s146
      %p160 = scmp.eq.s32.totalorder %s25, 1
      %p161 = por %p159, %p160
      %p163 = scmp.ne.s32.totalorder %s146, %s162
      %p164 = scmp.eq.s32.totalorder %s25, 0
      %p165 = por %p163, %p164
      %s166 = ssub.s32 %s26, %s38
      %p167 = scmp.eq.s32.totalorder %s166, 0
      %s169 = sadd.s32 %s168, 1
      %s170 = scalar_select %p167, %s168, %s169
      %p173 = pneg %p167
      %p174 = scmp.eq.s32.totalorder %s19, 1
      %p175 = por %p173, %p174
      %p176 = scmp.ne.s32.totalorder %s168, %s171
      %p177 = scmp.eq.s32.totalorder %s19, 0
      %p178 = por %p176, %p177
      %p179 = scmp.ne.s32.totalorder %s168, %s171
      %p180 = scmp.eq.s32.totalorder %s24, 1
      %p181 = por %p179, %p180
      %p182 = scmp.ne.s32.totalorder %s171, %s172
      %p183 = scmp.eq.s32.totalorder %s24, 0
      %p184 = por %p182, %p183
      %p185 = scmp.ne.s32.totalorder %s171, %s172
      %p186 = scmp.eq.s32.totalorder %s25, 1
      %p187 = por %p185, %p186
      %p189 = scmp.ne.s32.totalorder %s172, %s188
      %p190 = scmp.eq.s32.totalorder %s25, 0
      %p191 = por %p189, %p190
      %s192 = ssub.s32 %s26, %s38
      %p193 = scmp.eq.s32.totalorder %s192, 0
      %s195 = sadd.s32 %s194, 1
      %s196 = scalar_select %p193, %s194, %s195
      %p199 = pneg %p193
      %p200 = scmp.eq.s32.totalorder %s19, 1
      %p201 = por %p199, %p200
      %p202 = scmp.ne.s32.totalorder %s194, %s197
      %p203 = scmp.eq.s32.totalorder %s19, 0
      %p204 = por %p202, %p203
      %p205 = scmp.ne.s32.totalorder %s194, %s197
      %p206 = scmp.eq.s32.totalorder %s24, 1
      %p207 = por %p205, %p206
      %p208 = scmp.ne.s32.totalorder %s197, %s198
      %p209 = scmp.eq.s32.totalorder %s24, 0
      %p210 = por %p208, %p209
      %p211 = scmp.ne.s32.totalorder %s197, %s198
      %p212 = scmp.eq.s32.totalorder %s25, 1
      %p213 = por %p211, %p212
      %p215 = scmp.ne.s32.totalorder %s198, %s214
      %p216 = scmp.eq.s32.totalorder %s25, 0
      %p217 = por %p215, %p216
      %p218 = scmp.le.s32.totalorder 1, %s19
      %p219 = scmp.lt.s32.totalorder %s19, 3
      %p220 = pnand %p218, %p219
      %p221 = pneg %p220
      // Predicated region
      $region9: #{kcge_forward.7} parent=5 // pred_check
        _
      $region10: #{kcge_forward.7} parent=5 // pred_check_branch
        %223 = sbr.rel (%p220) target = $region12
      $region11: #{kcge_forward.7} parent=5 // pred_region
        %s224 = ssub.s32 %s19, 1
        // Predicated region
        $region13: #{kcge_forward.7} parent=11 // pred_check
          %p225 = pneg %p85
        $region14: #{kcge_forward.7} parent=11 // pred_check_branch
          %227 = sbr.rel (%p225) target = $region16
        $region15: #{kcge_forward.7} parent=11 // pred_region
          %s228 = smul.u32 128, %s29
          %p229 = scmp.lt.s32.totalorder %s228, 127
          %s230 = scalar_select %p229, %s228, 127
          %s231 = smul.addr %s230, 4
          %s232 = scalar_lea.vmem %s1, %s231
          %s233 = smul.u32 128, %s29
        $region16: #{kcge_forward.7} parent=11 // pred_fallthru
          _
        // Predicated region
        $region17: #{kcge_forward.7} parent=11 // pred_check
          %p234 = pneg %p106
        $region18: #{kcge_forward.7} parent=11 // pred_check_branch
          %236 = sbr.rel (%p234) target = $region20
        $region19: #{kcge_forward.7} parent=11 // pred_region
          _
        $region20: #{kcge_forward.7} parent=11 // pred_fallthru
          _
      $region12: #{kcge_forward.7} parent=5 // pred_fallthru
        _
      %p237 = scmp.lt.s32.totalorder %s19, 2
      // Predicated region
      $region21: #{kcge_forward.7} parent=5 // pred_check
        %p238 = pneg %p237
      $region22: #{kcge_forward.7} parent=5 // pred_check_branch
        %240 = sbr.rel (%p238) target = $region24
      $region23: #{kcge_forward.7} parent=5 // pred_region
        // Predicated region
        $region25: #{kcge_forward.7} parent=23 // pred_check
          %p241 = pneg %p53
        $region26: #{kcge_forward.7} parent=23 // pred_check_branch
          %243 = sbr.rel (%p241) target = $region28
        $region27: #{kcge_forward.7} parent=23 // pred_region
          %s244 = smul.u32 16, %s26
          %s245 = smul.u32 8, %s27
          %p246 = scmp.lt.s32.totalorder %s244, 31
          %s247 = scalar_select %p246, %s244, 31
          %p248 = scmp.lt.s32.totalorder %s245, 7
          %s249 = scalar_select %p248, %s245, 7
          %s250 = smul.addr %s247, 8
          %s251 = sadd.s32 %s249, %s250
          %s252 = smul.addr %s251, 4
          %s253 = scalar_lea.vmem %s0, %s252
          %s254 = smul.u32 16, %s26
          %s255 = smul.u32 8, %s27
        $region28: #{kcge_forward.7} parent=23 // pred_fallthru
          _
        // Predicated region
        $region29: #{kcge_forward.7} parent=23 // pred_check
          %p256 = pneg %p126
        $region30: #{kcge_forward.7} parent=23 // pred_check_branch
          %258 = sbr.rel (%p256) target = $region32
        $region31: #{kcge_forward.7} parent=23 // pred_region
          %s259 = smul.u32 16, %s26
          %p260 = scmp.lt.s32.totalorder %s259, 31
          %s261 = scalar_select %p260, %s259, 31
          %s262 = smul.addr %s261, 8
          %s263 = scalar_lea.vmem %s3, %s262
          %s264 = smul.u32 16, %s26
        $region32: #{kcge_forward.7} parent=23 // pred_fallthru
          _
        // Predicated region
        $region33: #{kcge_forward.7} parent=23 // pred_check
          %p265 = pneg %p152
        $region34: #{kcge_forward.7} parent=23 // pred_check_branch
          %267 = sbr.rel (%p265) target = $region36
        $region35: #{kcge_forward.7} parent=23 // pred_region
          %s268 = smul.u32 16, %s26
          %p269 = scmp.lt.s32.totalorder %s268, 31
          %s270 = scalar_select %p269, %s268, 31
          %s271 = smul.addr %s270, 8
          %s272 = scalar_lea.vmem %s4, %s271
          %s273 = smul.u32 16, %s26
        $region36: #{kcge_forward.7} parent=23 // pred_fallthru
          _
      $region24: #{kcge_forward.7} parent=5 // pred_fallthru
        _
      %p274 = scmp.le.s32.totalorder 1, %s19
      %p275 = scmp.lt.s32.totalorder %s19, 3
      %p276 = pnand %p274, %p275
      %p277 = pneg %p276
      // Predicated region
      $region37: #{kcge_forward.7} parent=5 // pred_check
        _
      $region38: #{kcge_forward.7} parent=5 // pred_check_branch
        %279 = sbr.rel (%p276) target = $region40
      $region39: #{kcge_forward.7} parent=5 // pred_region
        %s280 = ssub.s32 %s19, 1
        %s281 = smul.u32 16, %s28
        %s282 = smul.u32 8, %s29
        %p283 = scmp.lt.s32.totalorder %s281, 31
        %s284 = scalar_select %p283, %s281, 31
        %p285 = scmp.lt.s32.totalorder %s282, 7
        %s286 = scalar_select %p285, %s282, 7
        %s287 = smul.addr %s284, 8
        %s288 = sadd.s32 %s286, %s287
        %s289 = smul.addr %s288, 4
        %s290 = scalar_lea.vmem %s0, %s289
        %p291 = pneg %p59
        %p292 = pneg %p56
        %s293 = smul.u32 128, %s29
        %p294 = scmp.lt.s32.totalorder %s293, 127
        %s295 = scalar_select %p294, %s293, 127
        %s296 = smul.addr %s295, 4
        %s297 = scalar_lea.vmem %s1, %s296
        %p298 = pneg %p85
        %p299 = pneg %p82
        %p300 = pneg %p106
        %p301 = pneg %p103
        %s302 = smul.u32 16, %s28
        %p303 = scmp.lt.s32.totalorder %s302, 31
        %s304 = scalar_select %p303, %s302, 31
        %s305 = smul.addr %s304, 8
        %s306 = scalar_lea.vmem %s3, %s305
        %p307 = pneg %p132
        %p308 = pneg %p129
        %s309 = smul.u32 16, %s28
        %p310 = scmp.lt.s32.totalorder %s309, 31
        %s311 = scalar_select %p310, %s309, 31
        %s312 = smul.addr %s311, 8
        %s313 = scalar_lea.vmem %s4, %s312
        %p314 = pneg %p158
        %p315 = pneg %p155
        %p316 = pneg %p184
        %p317 = pneg %p181
        %s318 = sand.u32 %s171, 1
        %s319 = scalar_lea.sflag [#allocation3], %s318
        %s320 = sand.u32 %s171, 1
        %s321 = smul.addr %s320, 128
        %s322 = scalar_lea.vmem [#allocation2], %s321
        %p323 = pneg %p210
        %p324 = pneg %p207
        %s325 = sand.u32 %s197, 1
        %s326 = scalar_lea.sflag [#allocation5], %s325
        %s327 = sand.u32 %s197, 1
        %s328 = smul.addr %s327, 128
        %s329 = scalar_lea.vmem [#allocation4], %s328
        %s330 = smul.u32 16, %s28
        %s331 = smul.u32 8, %s29
        %p332 = scmp.lt.s32.totalorder %s330, 31
        %s333 = scalar_select %p332, %s330, 31
        %p334 = scmp.lt.s32.totalorder %s331, 7
        %s335 = scalar_select %p334, %s331, 7
        %s336 = smul.addr %s333, 8
        %s337 = sadd.s32 %s335, %s336
        %s338 = smul.addr %s337, 4
        %s339 = scalar_lea.vmem %s0, %s338
        %s340 = smul.u32 16, %s28
        %s341 = smul.u32 8, %s29
        %s342 = smul.u32 128, %s29
        %p343 = scmp.lt.s32.totalorder %s342, 127
        %s344 = scalar_select %p343, %s342, 127
        %s345 = smul.addr %s344, 4
        %s346 = scalar_lea.vmem %s1, %s345
        %s347 = smul.u32 128, %s29
        %s348 = smul.u32 16, %s28
        %p349 = scmp.lt.s32.totalorder %s348, 31
        %s350 = scalar_select %p349, %s348, 31
        %s351 = smul.addr %s350, 8
        %s352 = scalar_lea.vmem %s3, %s351
        %s353 = smul.u32 16, %s28
        %s354 = smul.u32 16, %s28
        %p355 = scmp.lt.s32.totalorder %s354, 31
        %s356 = scalar_select %p355, %s354, 31
        %s357 = smul.addr %s356, 8
        %s358 = scalar_lea.vmem %s4, %s357
        %s359 = smul.u32 16, %s28
        %s360 = smul.u32 16, %s28
        %s361 = smul.u32 16, %s28
        %p363 = scmp.eq.s32.totalorder %s29, 0
        // Predicated region
        $region41: #{kcge_forward.7} parent=39 // pred_check
          %p364 = pneg %p363
        $region42: #{kcge_forward.7} parent=39 // pred_check_branch
          %366 = sbr.rel (%p364) target = $region44
        $region43: #{kcge_forward.7} parent=39 // pred_region
          %367 = vst [vmem:[%s322] sm:$0xff] 0.0
          %368 = vst [vmem:[%s322 + $0x8] sm:$0xff] 0.0
          %369 = vst [vmem:[%s322 + $0x10] sm:$0xff] 0.0
          %370 = vst [vmem:[%s322 + $0x18] sm:$0xff] 0.0
          %371 = vst [vmem:[%s322 + $0x20] sm:$0xff] 0.0
          %372 = vst [vmem:[%s322 + $0x28] sm:$0xff] 0.0
          %373 = vst [vmem:[%s322 + $0x30] sm:$0xff] 0.0
          %374 = vst [vmem:[%s322 + $0x38] sm:$0xff] 0.0
          %375 = vst [vmem:[%s322 + $0x40] sm:$0xff] 0.0
          %376 = vst [vmem:[%s322 + $0x48] sm:$0xff] 0.0
          %377 = vst [vmem:[%s322 + $0x50] sm:$0xff] 0.0
          %378 = vst [vmem:[%s322 + $0x58] sm:$0xff] 0.0
          %379 = vst [vmem:[%s322 + $0x60] sm:$0xff] 0.0
          %380 = vst [vmem:[%s322 + $0x68] sm:$0xff] 0.0
          %381 = vst [vmem:[%s322 + $0x70] sm:$0xff] 0.0
          %382 = vst [vmem:[%s322 + $0x78] sm:$0xff] 0.0
        $region44: #{kcge_forward.7} parent=39 // pred_fallthru
          _
        %v383 = vld [vmem:[%s322] sm:$0xff]
        %v384 = vld [vmem:[%s322 + $0x8] sm:$0xff]
        %v385 = vld [vmem:[%s322 + $0x10] sm:$0xff]
        %v386 = vld [vmem:[%s322 + $0x18] sm:$0xff]
        %v387 = vld [vmem:[%s322 + $0x20] sm:$0xff]
        %v388 = vld [vmem:[%s322 + $0x28] sm:$0xff]
        %v389 = vld [vmem:[%s322 + $0x30] sm:$0xff]
        %v390 = vld [vmem:[%s322 + $0x38] sm:$0xff]
        %v391 = vld [vmem:[%s322 + $0x40] sm:$0xff]
        %v392 = vld [vmem:[%s322 + $0x48] sm:$0xff]
        %v393 = vld [vmem:[%s322 + $0x50] sm:$0xff]
        %v394 = vld [vmem:[%s322 + $0x58] sm:$0xff]
        %v395 = vld [vmem:[%s322 + $0x60] sm:$0xff]
        %v396 = vld [vmem:[%s322 + $0x68] sm:$0xff]
        %v397 = vld [vmem:[%s322 + $0x70] sm:$0xff]
        %v398 = vld [vmem:[%s322 + $0x78] sm:$0xff]
        %v399 = vld [vmem:[%s339] sm:$0xff]
        %v400 = vld [vmem:[%s339 + $0x8] sm:$0xff]
        %v401 = vld [vmem:[%s339 + $0x10] sm:$0xff]
        %v402 = vld [vmem:[%s339 + $0x18] sm:$0xff]
        %v403 = vld [vmem:[%s339 + $0x20] sm:$0xff]
        %v404 = vld [vmem:[%s339 + $0x28] sm:$0xff]
        %v405 = vld [vmem:[%s339 + $0x30] sm:$0xff]
        %v406 = vld [vmem:[%s339 + $0x38] sm:$0xff]
        %v407 = vld [vmem:[%s339 + $0x40] sm:$0xff]
        %v408 = vld [vmem:[%s339 + $0x48] sm:$0xff]
        %v409 = vld [vmem:[%s339 + $0x50] sm:$0xff]
        %v410 = vld [vmem:[%s339 + $0x58] sm:$0xff]
        %v411 = vld [vmem:[%s339 + $0x60] sm:$0xff]
        %v412 = vld [vmem:[%s339 + $0x68] sm:$0xff]
        %v413 = vld [vmem:[%s339 + $0x70] sm:$0xff]
        %v414 = vld [vmem:[%s339 + $0x78] sm:$0xff]
        %v415 = vld [vmem:[%s339 + $0x80] sm:$0xff]
        %v416 = vld [vmem:[%s339 + $0x88] sm:$0xff]
        %v417 = vld [vmem:[%s339 + $0x90] sm:$0xff]
        %v418 = vld [vmem:[%s339 + $0x98] sm:$0xff]
        %v419 = vld [vmem:[%s339 + $0xa0] sm:$0xff]
        %v420 = vld [vmem:[%s339 + $0xa8] sm:$0xff]
        %v421 = vld [vmem:[%s339 + $0xb0] sm:$0xff]
        %v422 = vld [vmem:[%s339 + $0xb8] sm:$0xff]
        %v423 = vld [vmem:[%s339 + $0xc0] sm:$0xff]
        %v424 = vld [vmem:[%s339 + $0xc8] sm:$0xff]
        %v425 = vld [vmem:[%s339 + $0xd0] sm:$0xff]
        %v426 = vld [vmem:[%s339 + $0xd8] sm:$0xff]
        %v427 = vld [vmem:[%s339 + $0xe0] sm:$0xff]
        %v428 = vld [vmem:[%s339 + $0xe8] sm:$0xff]
        %v429 = vld [vmem:[%s339 + $0xf0] sm:$0xff]
        %v430 = vld [vmem:[%s339 + $0xf8] sm:$0xff]
        %v431 = vld [vmem:[%s339 + $0x100] sm:$0xff]
        %v432 = vld [vmem:[%s339 + $0x108] sm:$0xff]
        %v433 = vld [vmem:[%s339 + $0x110] sm:$0xff]
        %v434 = vld [vmem:[%s339 + $0x118] sm:$0xff]
        %v435 = vld [vmem:[%s339 + $0x120] sm:$0xff]
        %v436 = vld [vmem:[%s339 + $0x128] sm:$0xff]
        %v437 = vld [vmem:[%s339 + $0x130] sm:$0xff]
        %v438 = vld [vmem:[%s339 + $0x138] sm:$0xff]
        %v439 = vld [vmem:[%s339 + $0x140] sm:$0xff]
        %v440 = vld [vmem:[%s339 + $0x148] sm:$0xff]
        %v441 = vld [vmem:[%s339 + $0x150] sm:$0xff]
        %v442 = vld [vmem:[%s339 + $0x158] sm:$0xff]
        %v443 = vld [vmem:[%s339 + $0x160] sm:$0xff]
        %v444 = vld [vmem:[%s339 + $0x168] sm:$0xff]
        %v445 = vld [vmem:[%s339 + $0x170] sm:$0xff]
        %v446 = vld [vmem:[%s339 + $0x178] sm:$0xff]
        %v447 = vld [vmem:[%s339 + $0x180] sm:$0xff]
        %v448 = vld [vmem:[%s339 + $0x188] sm:$0xff]
        %v449 = vld [vmem:[%s339 + $0x190] sm:$0xff]
        %v450 = vld [vmem:[%s339 + $0x198] sm:$0xff]
        %v451 = vld [vmem:[%s339 + $0x1a0] sm:$0xff]
        %v452 = vld [vmem:[%s339 + $0x1a8] sm:$0xff]
        %v453 = vld [vmem:[%s339 + $0x1b0] sm:$0xff]
        %v454 = vld [vmem:[%s339 + $0x1b8] sm:$0xff]
        %v455 = vld [vmem:[%s339 + $0x1c0] sm:$0xff]
        %v456 = vld [vmem:[%s339 + $0x1c8] sm:$0xff]
        %v457 = vld [vmem:[%s339 + $0x1d0] sm:$0xff]
        %v458 = vld [vmem:[%s339 + $0x1d8] sm:$0xff]
        %v459 = vld [vmem:[%s339 + $0x1e0] sm:$0xff]
        %v460 = vld [vmem:[%s339 + $0x1e8] sm:$0xff]
        %v461 = vld [vmem:[%s339 + $0x1f0] sm:$0xff]
        %v462 = vld [vmem:[%s339 + $0x1f8] sm:$0xff]
        %v463 = vld [vmem:[%s346] sm:$0xf]
        %v464 = vld [vmem:[%s346 + $0x4] sm:$0xf]
        %v465 = vld [vmem:[%s346 + $0x8] sm:$0xf]
        %v466 = vld [vmem:[%s346 + $0xc] sm:$0xf]
        %v467 = vld [vmem:[%s346 + $0x10] sm:$0xf]
        %v468 = vld [vmem:[%s346 + $0x14] sm:$0xf]
        %v469 = vld [vmem:[%s346 + $0x18] sm:$0xf]
        %v470 = vld [vmem:[%s346 + $0x1c] sm:$0xf]
        %v471 = vld [vmem:[%s346 + $0x20] sm:$0xf]
        %v472 = vld [vmem:[%s346 + $0x24] sm:$0xf]
        %v473 = vld [vmem:[%s346 + $0x28] sm:$0xf]
        %v474 = vld [vmem:[%s346 + $0x2c] sm:$0xf]
        %v475 = vld [vmem:[%s346 + $0x30] sm:$0xf]
        %v476 = vld [vmem:[%s346 + $0x34] sm:$0xf]
        %v477 = vld [vmem:[%s346 + $0x38] sm:$0xf]
        %v478 = vld [vmem:[%s346 + $0x3c] sm:$0xf]
        %v479 = vld [vmem:[%s346 + $0x40] sm:$0xf]
        %v480 = vld [vmem:[%s346 + $0x44] sm:$0xf]
        %v481 = vld [vmem:[%s346 + $0x48] sm:$0xf]
        %v482 = vld [vmem:[%s346 + $0x4c] sm:$0xf]
        %v483 = vld [vmem:[%s346 + $0x50] sm:$0xf]
        %v484 = vld [vmem:[%s346 + $0x54] sm:$0xf]
        %v485 = vld [vmem:[%s346 + $0x58] sm:$0xf]
        %v486 = vld [vmem:[%s346 + $0x5c] sm:$0xf]
        %v487 = vld [vmem:[%s346 + $0x60] sm:$0xf]
        %v488 = vld [vmem:[%s346 + $0x64] sm:$0xf]
        %v489 = vld [vmem:[%s346 + $0x68] sm:$0xf]
        %v490 = vld [vmem:[%s346 + $0x6c] sm:$0xf]
        %v491 = vld [vmem:[%s346 + $0x70] sm:$0xf]
        %v492 = vld [vmem:[%s346 + $0x74] sm:$0xf]
        %v493 = vld [vmem:[%s346 + $0x78] sm:$0xf]
        %v494 = vld [vmem:[%s346 + $0x7c] sm:$0xf]
        %v495 = vld [vmem:[%s346 + $0x80] sm:$0xf]
        %v496 = vld [vmem:[%s346 + $0x84] sm:$0xf]
        %v497 = vld [vmem:[%s346 + $0x88] sm:$0xf]
        %v498 = vld [vmem:[%s346 + $0x8c] sm:$0xf]
        %v499 = vld [vmem:[%s346 + $0x90] sm:$0xf]
        %v500 = vld [vmem:[%s346 + $0x94] sm:$0xf]
        %v501 = vld [vmem:[%s346 + $0x98] sm:$0xf]
        %v502 = vld [vmem:[%s346 + $0x9c] sm:$0xf]
        %v503 = vld [vmem:[%s346 + $0xa0] sm:$0xf]
        %v504 = vld [vmem:[%s346 + $0xa4] sm:$0xf]
        %v505 = vld [vmem:[%s346 + $0xa8] sm:$0xf]
        %v506 = vld [vmem:[%s346 + $0xac] sm:$0xf]
        %v507 = vld [vmem:[%s346 + $0xb0] sm:$0xf]
        %v508 = vld [vmem:[%s346 + $0xb4] sm:$0xf]
        %v509 = vld [vmem:[%s346 + $0xb8] sm:$0xf]
        %v510 = vld [vmem:[%s346 + $0xbc] sm:$0xf]
        %v511 = vld [vmem:[%s346 + $0xc0] sm:$0xf]
        %v512 = vld [vmem:[%s346 + $0xc4] sm:$0xf]
        %v513 = vld [vmem:[%s346 + $0xc8] sm:$0xf]
        %v514 = vld [vmem:[%s346 + $0xcc] sm:$0xf]
        %v515 = vld [vmem:[%s346 + $0xd0] sm:$0xf]
        %v516 = vld [vmem:[%s346 + $0xd4] sm:$0xf]
        %v517 = vld [vmem:[%s346 + $0xd8] sm:$0xf]
        %v518 = vld [vmem:[%s346 + $0xdc] sm:$0xf]
        %v519 = vld [vmem:[%s346 + $0xe0] sm:$0xf]
        %v520 = vld [vmem:[%s346 + $0xe4] sm:$0xf]
        %v521 = vld [vmem:[%s346 + $0xe8] sm:$0xf]
        %v522 = vld [vmem:[%s346 + $0xec] sm:$0xf]
        %v523 = vld [vmem:[%s346 + $0xf0] sm:$0xf]
        %v524 = vld [vmem:[%s346 + $0xf4] sm:$0xf]
        %v525 = vld [vmem:[%s346 + $0xf8] sm:$0xf]
        %v526 = vld [vmem:[%s346 + $0xfc] sm:$0xf]
        %v527 = vld [vmem:[%s346 + $0x100] sm:$0xf]
        %v528 = vld [vmem:[%s346 + $0x104] sm:$0xf]
        %v529 = vld [vmem:[%s346 + $0x108] sm:$0xf]
        %v530 = vld [vmem:[%s346 + $0x10c] sm:$0xf]
        %v531 = vld [vmem:[%s346 + $0x110] sm:$0xf]
        %v532 = vld [vmem:[%s346 + $0x114] sm:$0xf]
        %v533 = vld [vmem:[%s346 + $0x118] sm:$0xf]
        %v534 = vld [vmem:[%s346 + $0x11c] sm:$0xf]
        %v535 = vld [vmem:[%s346 + $0x120] sm:$0xf]
        %v536 = vld [vmem:[%s346 + $0x124] sm:$0xf]
        %v537 = vld [vmem:[%s346 + $0x128] sm:$0xf]
        %v538 = vld [vmem:[%s346 + $0x12c] sm:$0xf]
        %v539 = vld [vmem:[%s346 + $0x130] sm:$0xf]
        %v540 = vld [vmem:[%s346 + $0x134] sm:$0xf]
        %v541 = vld [vmem:[%s346 + $0x138] sm:$0xf]
        %v542 = vld [vmem:[%s346 + $0x13c] sm:$0xf]
        %v543 = vld [vmem:[%s346 + $0x140] sm:$0xf]
        %v544 = vld [vmem:[%s346 + $0x144] sm:$0xf]
        %v545 = vld [vmem:[%s346 + $0x148] sm:$0xf]
        %v546 = vld [vmem:[%s346 + $0x14c] sm:$0xf]
        %v547 = vld [vmem:[%s346 + $0x150] sm:$0xf]
        %v548 = vld [vmem:[%s346 + $0x154] sm:$0xf]
        %v549 = vld [vmem:[%s346 + $0x158] sm:$0xf]
        %v550 = vld [vmem:[%s346 + $0x15c] sm:$0xf]
        %v551 = vld [vmem:[%s346 + $0x160] sm:$0xf]
        %v552 = vld [vmem:[%s346 + $0x164] sm:$0xf]
        %v553 = vld [vmem:[%s346 + $0x168] sm:$0xf]
        %v554 = vld [vmem:[%s346 + $0x16c] sm:$0xf]
        %v555 = vld [vmem:[%s346 + $0x170] sm:$0xf]
        %v556 = vld [vmem:[%s346 + $0x174] sm:$0xf]
        %v557 = vld [vmem:[%s346 + $0x178] sm:$0xf]
        %v558 = vld [vmem:[%s346 + $0x17c] sm:$0xf]
        %v559 = vld [vmem:[%s346 + $0x180] sm:$0xf]
        %v560 = vld [vmem:[%s346 + $0x184] sm:$0xf]
        %v561 = vld [vmem:[%s346 + $0x188] sm:$0xf]
        %v562 = vld [vmem:[%s346 + $0x18c] sm:$0xf]
        %v563 = vld [vmem:[%s346 + $0x190] sm:$0xf]
        %v564 = vld [vmem:[%s346 + $0x194] sm:$0xf]
        %v565 = vld [vmem:[%s346 + $0x198] sm:$0xf]
        %v566 = vld [vmem:[%s346 + $0x19c] sm:$0xf]
        %v567 = vld [vmem:[%s346 + $0x1a0] sm:$0xf]
        %v568 = vld [vmem:[%s346 + $0x1a4] sm:$0xf]
        %v569 = vld [vmem:[%s346 + $0x1a8] sm:$0xf]
        %v570 = vld [vmem:[%s346 + $0x1ac] sm:$0xf]
        %v571 = vld [vmem:[%s346 + $0x1b0] sm:$0xf]
        %v572 = vld [vmem:[%s346 + $0x1b4] sm:$0xf]
        %v573 = vld [vmem:[%s346 + $0x1b8] sm:$0xf]
        %v574 = vld [vmem:[%s346 + $0x1bc] sm:$0xf]
        %v575 = vld [vmem:[%s346 + $0x1c0] sm:$0xf]
        %v576 = vld [vmem:[%s346 + $0x1c4] sm:$0xf]
        %v577 = vld [vmem:[%s346 + $0x1c8] sm:$0xf]
        %v578 = vld [vmem:[%s346 + $0x1cc] sm:$0xf]
        %v579 = vld [vmem:[%s346 + $0x1d0] sm:$0xf]
        %v580 = vld [vmem:[%s346 + $0x1d4] sm:$0xf]
        %v581 = vld [vmem:[%s346 + $0x1d8] sm:$0xf]
        %v582 = vld [vmem:[%s346 + $0x1dc] sm:$0xf]
        %v583 = vld [vmem:[%s346 + $0x1e0] sm:$0xf]
        %v584 = vld [vmem:[%s346 + $0x1e4] sm:$0xf]
        %v585 = vld [vmem:[%s346 + $0x1e8] sm:$0xf]
        %v586 = vld [vmem:[%s346 + $0x1ec] sm:$0xf]
        %v587 = vld [vmem:[%s346 + $0x1f0] sm:$0xf]
        %v588 = vld [vmem:[%s346 + $0x1f4] sm:$0xf]
        %v589 = vld [vmem:[%s346 + $0x1f8] sm:$0xf]
        %v590 = vld [vmem:[%s346 + $0x1fc] sm:$0xf]
        %v655 = vunpack.c.l.b16 %v399
        %v656 = vunpack.c.h.b16 %v399
        %v657 = vunpack.c.l.b16 %v400
        %v658 = vunpack.c.h.b16 %v400
        %v659 = vunpack.c.l.b16 %v401
        %v660 = vunpack.c.h.b16 %v401
        %v661 = vunpack.c.l.b16 %v402
        %v662 = vunpack.c.h.b16 %v402
        %v663 = vunpack.c.l.b16 %v403
        %v664 = vunpack.c.h.b16 %v403
        %v665 = vunpack.c.l.b16 %v404
        %v666 = vunpack.c.h.b16 %v404
        %v667 = vunpack.c.l.b16 %v405
        %v668 = vunpack.c.h.b16 %v405
        %v669 = vunpack.c.l.b16 %v406
        %v670 = vunpack.c.h.b16 %v406
        %v671 = vunpack.c.l.b16 %v407
        %v672 = vunpack.c.h.b16 %v407
        %v673 = vunpack.c.l.b16 %v408
        %v674 = vunpack.c.h.b16 %v408
        %v675 = vunpack.c.l.b16 %v409
        %v676 = vunpack.c.h.b16 %v409
        %v677 = vunpack.c.l.b16 %v410
        %v678 = vunpack.c.h.b16 %v410
        %v679 = vunpack.c.l.b16 %v411
        %v680 = vunpack.c.h.b16 %v411
        %v681 = vunpack.c.l.b16 %v412
        %v682 = vunpack.c.h.b16 %v412
        %v683 = vunpack.c.l.b16 %v413
        %v684 = vunpack.c.h.b16 %v413
        %v685 = vunpack.c.l.b16 %v414
        %v686 = vunpack.c.h.b16 %v414
        %v687 = vunpack.c.l.b16 %v415
        %v688 = vunpack.c.h.b16 %v415
        %v689 = vunpack.c.l.b16 %v416
        %v690 = vunpack.c.h.b16 %v416
        %v691 = vunpack.c.l.b16 %v417
        %v692 = vunpack.c.h.b16 %v417
        %v693 = vunpack.c.l.b16 %v418
        %v694 = vunpack.c.h.b16 %v418
        %v695 = vunpack.c.l.b16 %v419
        %v696 = vunpack.c.h.b16 %v419
        %v697 = vunpack.c.l.b16 %v420
        %v698 = vunpack.c.h.b16 %v420
        %v699 = vunpack.c.l.b16 %v421
        %v700 = vunpack.c.h.b16 %v421
        %v701 = vunpack.c.l.b16 %v422
        %v702 = vunpack.c.h.b16 %v422
        %v703 = vunpack.c.l.b16 %v423
        %v704 = vunpack.c.h.b16 %v423
        %v705 = vunpack.c.l.b16 %v424
        %v706 = vunpack.c.h.b16 %v424
        %v707 = vunpack.c.l.b16 %v425
        %v708 = vunpack.c.h.b16 %v425
        %v709 = vunpack.c.l.b16 %v426
        %v710 = vunpack.c.h.b16 %v426
        %v711 = vunpack.c.l.b16 %v427
        %v712 = vunpack.c.h.b16 %v427
        %v713 = vunpack.c.l.b16 %v428
        %v714 = vunpack.c.h.b16 %v428
        %v715 = vunpack.c.l.b16 %v429
        %v716 = vunpack.c.h.b16 %v429
        %v717 = vunpack.c.l.b16 %v430
        %v718 = vunpack.c.h.b16 %v430
        %v719 = vunpack.c.l.b16 %v431
        %v720 = vunpack.c.h.b16 %v431
        %v721 = vunpack.c.l.b16 %v432
        %v722 = vunpack.c.h.b16 %v432
        %v723 = vunpack.c.l.b16 %v433
        %v724 = vunpack.c.h.b16 %v433
        %v725 = vunpack.c.l.b16 %v434
        %v726 = vunpack.c.h.b16 %v434
        %v727 = vunpack.c.l.b16 %v435
        %v728 = vunpack.c.h.b16 %v435
        %v729 = vunpack.c.l.b16 %v436
        %v730 = vunpack.c.h.b16 %v436
        %v731 = vunpack.c.l.b16 %v437
        %v732 = vunpack.c.h.b16 %v437
        %v733 = vunpack.c.l.b16 %v438
        %v734 = vunpack.c.h.b16 %v438
        %v735 = vunpack.c.l.b16 %v439
        %v736 = vunpack.c.h.b16 %v439
        %v737 = vunpack.c.l.b16 %v440
        %v738 = vunpack.c.h.b16 %v440
        %v739 = vunpack.c.l.b16 %v441
        %v740 = vunpack.c.h.b16 %v441
        %v741 = vunpack.c.l.b16 %v442
        %v742 = vunpack.c.h.b16 %v442
        %v743 = vunpack.c.l.b16 %v443
        %v744 = vunpack.c.h.b16 %v443
        %v745 = vunpack.c.l.b16 %v444
        %v746 = vunpack.c.h.b16 %v444
        %v747 = vunpack.c.l.b16 %v445
        %v748 = vunpack.c.h.b16 %v445
        %v749 = vunpack.c.l.b16 %v446
        %v750 = vunpack.c.h.b16 %v446
        %v751 = vunpack.c.l.b16 %v447
        %v752 = vunpack.c.h.b16 %v447
        %v753 = vunpack.c.l.b16 %v448
        %v754 = vunpack.c.h.b16 %v448
        %v755 = vunpack.c.l.b16 %v449
        %v756 = vunpack.c.h.b16 %v449
        %v757 = vunpack.c.l.b16 %v450
        %v758 = vunpack.c.h.b16 %v450
        %v759 = vunpack.c.l.b16 %v451
        %v760 = vunpack.c.h.b16 %v451
        %v761 = vunpack.c.l.b16 %v452
        %v762 = vunpack.c.h.b16 %v452
        %v763 = vunpack.c.l.b16 %v453
        %v764 = vunpack.c.h.b16 %v453
        %v765 = vunpack.c.l.b16 %v454
        %v766 = vunpack.c.h.b16 %v454
        %v767 = vunpack.c.l.b16 %v455
        %v768 = vunpack.c.h.b16 %v455
        %v769 = vunpack.c.l.b16 %v456
        %v770 = vunpack.c.h.b16 %v456
        %v771 = vunpack.c.l.b16 %v457
        %v772 = vunpack.c.h.b16 %v457
        %v773 = vunpack.c.l.b16 %v458
        %v774 = vunpack.c.h.b16 %v458
        %v775 = vunpack.c.l.b16 %v459
        %v776 = vunpack.c.h.b16 %v459
        %v777 = vunpack.c.l.b16 %v460
        %v778 = vunpack.c.h.b16 %v460
        %v779 = vunpack.c.l.b16 %v461
        %v780 = vunpack.c.h.b16 %v461
        %v781 = vunpack.c.l.b16 %v462
        %v782 = vunpack.c.h.b16 %v462
        %v783 = vpack.c.b16 %v663, %v655
        %v784 = vpack.c.b16 %v664, %v656
        %v785 = vpack.c.b16 %v665, %v657
        %v786 = vpack.c.b16 %v666, %v658
        %v787 = vpack.c.b16 %v667, %v659
        %v788 = vpack.c.b16 %v668, %v660
        %v789 = vpack.c.b16 %v669, %v661
        %v790 = vpack.c.b16 %v670, %v662
        %v791 = vpack.c.b16 %v679, %v671
        %v792 = vpack.c.b16 %v680, %v672
        %v793 = vpack.c.b16 %v681, %v673
        %v794 = vpack.c.b16 %v682, %v674
        %v795 = vpack.c.b16 %v683, %v675
        %v796 = vpack.c.b16 %v684, %v676
        %v797 = vpack.c.b16 %v685, %v677
        %v798 = vpack.c.b16 %v686, %v678
        %v799 = vpack.c.b16 %v695, %v687
        %v800 = vpack.c.b16 %v696, %v688
        %v801 = vpack.c.b16 %v697, %v689
        %v802 = vpack.c.b16 %v698, %v690
        %v803 = vpack.c.b16 %v699, %v691
        %v804 = vpack.c.b16 %v700, %v692
        %v805 = vpack.c.b16 %v701, %v693
        %v806 = vpack.c.b16 %v702, %v694
        %v807 = vpack.c.b16 %v711, %v703
        %v808 = vpack.c.b16 %v712, %v704
        %v809 = vpack.c.b16 %v713, %v705
        %v810 = vpack.c.b16 %v714, %v706
        %v811 = vpack.c.b16 %v715, %v707
        %v812 = vpack.c.b16 %v716, %v708
        %v813 = vpack.c.b16 %v717, %v709
        %v814 = vpack.c.b16 %v718, %v710
        %v815 = vpack.c.b16 %v727, %v719
        %v816 = vpack.c.b16 %v728, %v720
        %v817 = vpack.c.b16 %v729, %v721
        %v818 = vpack.c.b16 %v730, %v722
        %v819 = vpack.c.b16 %v731, %v723
        %v820 = vpack.c.b16 %v732, %v724
        %v821 = vpack.c.b16 %v733, %v725
        %v822 = vpack.c.b16 %v734, %v726
        %v823 = vpack.c.b16 %v743, %v735
        %v824 = vpack.c.b16 %v744, %v736
        %v825 = vpack.c.b16 %v745, %v737
        %v826 = vpack.c.b16 %v746, %v738
        %v827 = vpack.c.b16 %v747, %v739
        %v828 = vpack.c.b16 %v748, %v740
        %v829 = vpack.c.b16 %v749, %v741
        %v830 = vpack.c.b16 %v750, %v742
        %v831 = vpack.c.b16 %v759, %v751
        %v832 = vpack.c.b16 %v760, %v752
        %v833 = vpack.c.b16 %v761, %v753
        %v834 = vpack.c.b16 %v762, %v754
        %v835 = vpack.c.b16 %v763, %v755
        %v836 = vpack.c.b16 %v764, %v756
        %v837 = vpack.c.b16 %v765, %v757
        %v838 = vpack.c.b16 %v766, %v758
        %v839 = vpack.c.b16 %v775, %v767
        %v840 = vpack.c.b16 %v776, %v768
        %v841 = vpack.c.b16 %v777, %v769
        %v842 = vpack.c.b16 %v778, %v770
        %v843 = vpack.c.b16 %v779, %v771
        %v844 = vpack.c.b16 %v780, %v772
        %v845 = vpack.c.b16 %v781, %v773
        %v846 = vpack.c.b16 %v782, %v774
        %v1039 = vunpack.c.l.b16 %v463
        %v1040 = vunpack.c.l.b16 %v464
        %v1041 = vunpack.c.l.b16 %v465
        %v1042 = vunpack.c.l.b16 %v466
        %v1043 = vunpack.c.l.b16 %v467
        %v1044 = vunpack.c.l.b16 %v468
        %v1045 = vunpack.c.l.b16 %v469
        %v1046 = vunpack.c.l.b16 %v470
        %v1047 = vunpack.c.l.b16 %v471
        %v1048 = vunpack.c.l.b16 %v472
        %v1049 = vunpack.c.l.b16 %v473
        %v1050 = vunpack.c.l.b16 %v474
        %v1051 = vunpack.c.l.b16 %v475
        %v1052 = vunpack.c.l.b16 %v476
        %v1053 = vunpack.c.l.b16 %v477
        %v1054 = vunpack.c.l.b16 %v478
        %v1055 = vunpack.c.l.b16 %v479
        %v1056 = vunpack.c.l.b16 %v480
        %v1057 = vunpack.c.l.b16 %v481
        %v1058 = vunpack.c.l.b16 %v482
        %v1059 = vunpack.c.l.b16 %v483
        %v1060 = vunpack.c.l.b16 %v484
        %v1061 = vunpack.c.l.b16 %v485
        %v1062 = vunpack.c.l.b16 %v486
        %v1063 = vunpack.c.l.b16 %v487
        %v1064 = vunpack.c.l.b16 %v488
        %v1065 = vunpack.c.l.b16 %v489
        %v1066 = vunpack.c.l.b16 %v490
        %v1067 = vunpack.c.l.b16 %v491
        %v1068 = vunpack.c.l.b16 %v492
        %v1069 = vunpack.c.l.b16 %v493
        %v1070 = vunpack.c.l.b16 %v494
        %v1071 = vunpack.c.l.b16 %v495
        %v1072 = vunpack.c.l.b16 %v496
        %v1073 = vunpack.c.l.b16 %v497
        %v1074 = vunpack.c.l.b16 %v498
        %v1075 = vunpack.c.l.b16 %v499
        %v1076 = vunpack.c.l.b16 %v500
        %v1077 = vunpack.c.l.b16 %v501
        %v1078 = vunpack.c.l.b16 %v502
        %v1079 = vunpack.c.l.b16 %v503
        %v1080 = vunpack.c.l.b16 %v504
        %v1081 = vunpack.c.l.b16 %v505
        %v1082 = vunpack.c.l.b16 %v506
        %v1083 = vunpack.c.l.b16 %v507
        %v1084 = vunpack.c.l.b16 %v508
        %v1085 = vunpack.c.l.b16 %v509
        %v1086 = vunpack.c.l.b16 %v510
        %v1087 = vunpack.c.l.b16 %v511
        %v1088 = vunpack.c.l.b16 %v512
        %v1089 = vunpack.c.l.b16 %v513
        %v1090 = vunpack.c.l.b16 %v514
        %v1091 = vunpack.c.l.b16 %v515
        %v1092 = vunpack.c.l.b16 %v516
        %v1093 = vunpack.c.l.b16 %v517
        %v1094 = vunpack.c.l.b16 %v518
        %v1095 = vunpack.c.l.b16 %v519
        %v1096 = vunpack.c.l.b16 %v520
        %v1097 = vunpack.c.l.b16 %v521
        %v1098 = vunpack.c.l.b16 %v522
        %v1099 = vunpack.c.l.b16 %v523
        %v1100 = vunpack.c.l.b16 %v524
        %v1101 = vunpack.c.l.b16 %v525
        %v1102 = vunpack.c.l.b16 %v526
        %v1103 = vunpack.c.l.b16 %v527
        %v1104 = vunpack.c.l.b16 %v528
        %v1105 = vunpack.c.l.b16 %v529
        %v1106 = vunpack.c.l.b16 %v530
        %v1107 = vunpack.c.l.b16 %v531
        %v1108 = vunpack.c.l.b16 %v532
        %v1109 = vunpack.c.l.b16 %v533
        %v1110 = vunpack.c.l.b16 %v534
        %v1111 = vunpack.c.l.b16 %v535
        %v1112 = vunpack.c.l.b16 %v536
        %v1113 = vunpack.c.l.b16 %v537
        %v1114 = vunpack.c.l.b16 %v538
        %v1115 = vunpack.c.l.b16 %v539
        %v1116 = vunpack.c.l.b16 %v540
        %v1117 = vunpack.c.l.b16 %v541
        %v1118 = vunpack.c.l.b16 %v542
        %v1119 = vunpack.c.l.b16 %v543
        %v1120 = vunpack.c.l.b16 %v544
        %v1121 = vunpack.c.l.b16 %v545
        %v1122 = vunpack.c.l.b16 %v546
        %v1123 = vunpack.c.l.b16 %v547
        %v1124 = vunpack.c.l.b16 %v548
        %v1125 = vunpack.c.l.b16 %v549
        %v1126 = vunpack.c.l.b16 %v550
        %v1127 = vunpack.c.l.b16 %v551
        %v1128 = vunpack.c.l.b16 %v552
        %v1129 = vunpack.c.l.b16 %v553
        %v1130 = vunpack.c.l.b16 %v554
        %v1131 = vunpack.c.l.b16 %v555
        %v1132 = vunpack.c.l.b16 %v556
        %v1133 = vunpack.c.l.b16 %v557
        %v1134 = vunpack.c.l.b16 %v558
        %v1135 = vunpack.c.l.b16 %v559
        %v1136 = vunpack.c.l.b16 %v560
        %v1137 = vunpack.c.l.b16 %v561
        %v1138 = vunpack.c.l.b16 %v562
        %v1139 = vunpack.c.l.b16 %v563
        %v1140 = vunpack.c.l.b16 %v564
        %v1141 = vunpack.c.l.b16 %v565
        %v1142 = vunpack.c.l.b16 %v566
        %v1143 = vunpack.c.l.b16 %v567
        %v1144 = vunpack.c.l.b16 %v568
        %v1145 = vunpack.c.l.b16 %v569
        %v1146 = vunpack.c.l.b16 %v570
        %v1147 = vunpack.c.l.b16 %v571
        %v1148 = vunpack.c.l.b16 %v572
        %v1149 = vunpack.c.l.b16 %v573
        %v1150 = vunpack.c.l.b16 %v574
        %v1151 = vunpack.c.l.b16 %v575
        %v1152 = vunpack.c.l.b16 %v576
        %v1153 = vunpack.c.l.b16 %v577
        %v1154 = vunpack.c.l.b16 %v578
        %v1155 = vunpack.c.l.b16 %v579
        %v1156 = vunpack.c.l.b16 %v580
        %v1157 = vunpack.c.l.b16 %v581
        %v1158 = vunpack.c.l.b16 %v582
        %v1159 = vunpack.c.l.b16 %v583
        %v1160 = vunpack.c.l.b16 %v584
        %v1161 = vunpack.c.l.b16 %v585
        %v1162 = vunpack.c.l.b16 %v586
        %v1163 = vunpack.c.l.b16 %v587
        %v1164 = vunpack.c.l.b16 %v588
        %v1165 = vunpack.c.l.b16 %v589
        %v1166 = vunpack.c.l.b16 %v590
        %v1167 = vpack.c.b16 %v1040, %v1039
        %v1168 = vpack.c.b16 %v1042, %v1041
        %v1169 = vpack.c.b16 %v1044, %v1043
        %v1170 = vpack.c.b16 %v1046, %v1045
        %v1171 = vpack.c.b16 %v1048, %v1047
        %v1172 = vpack.c.b16 %v1050, %v1049
        %v1173 = vpack.c.b16 %v1052, %v1051
        %v1174 = vpack.c.b16 %v1054, %v1053
        %v1175 = vpack.c.b16 %v1056, %v1055
        %v1176 = vpack.c.b16 %v1058, %v1057
        %v1177 = vpack.c.b16 %v1060, %v1059
        %v1178 = vpack.c.b16 %v1062, %v1061
        %v1179 = vpack.c.b16 %v1064, %v1063
        %v1180 = vpack.c.b16 %v1066, %v1065
        %v1181 = vpack.c.b16 %v1068, %v1067
        %v1182 = vpack.c.b16 %v1070, %v1069
        %v1183 = vpack.c.b16 %v1072, %v1071
        %v1184 = vpack.c.b16 %v1074, %v1073
        %v1185 = vpack.c.b16 %v1076, %v1075
        %v1186 = vpack.c.b16 %v1078, %v1077
        %v1187 = vpack.c.b16 %v1080, %v1079
        %v1188 = vpack.c.b16 %v1082, %v1081
        %v1189 = vpack.c.b16 %v1084, %v1083
        %v1190 = vpack.c.b16 %v1086, %v1085
        %v1191 = vpack.c.b16 %v1088, %v1087
        %v1192 = vpack.c.b16 %v1090, %v1089
        %v1193 = vpack.c.b16 %v1092, %v1091
        %v1194 = vpack.c.b16 %v1094, %v1093
        %v1195 = vpack.c.b16 %v1096, %v1095
        %v1196 = vpack.c.b16 %v1098, %v1097
        %v1197 = vpack.c.b16 %v1100, %v1099
        %v1198 = vpack.c.b16 %v1102, %v1101
        %v1199 = vpack.c.b16 %v1104, %v1103
        %v1200 = vpack.c.b16 %v1106, %v1105
        %v1201 = vpack.c.b16 %v1108, %v1107
        %v1202 = vpack.c.b16 %v1110, %v1109
        %v1203 = vpack.c.b16 %v1112, %v1111
        %v1204 = vpack.c.b16 %v1114, %v1113
        %v1205 = vpack.c.b16 %v1116, %v1115
        %v1206 = vpack.c.b16 %v1118, %v1117
        %v1207 = vpack.c.b16 %v1120, %v1119
        %v1208 = vpack.c.b16 %v1122, %v1121
        %v1209 = vpack.c.b16 %v1124, %v1123
        %v1210 = vpack.c.b16 %v1126, %v1125
        %v1211 = vpack.c.b16 %v1128, %v1127
        %v1212 = vpack.c.b16 %v1130, %v1129
        %v1213 = vpack.c.b16 %v1132, %v1131
        %v1214 = vpack.c.b16 %v1134, %v1133
        %v1215 = vpack.c.b16 %v1136, %v1135
        %v1216 = vpack.c.b16 %v1138, %v1137
        %v1217 = vpack.c.b16 %v1140, %v1139
        %v1218 = vpack.c.b16 %v1142, %v1141
        %v1219 = vpack.c.b16 %v1144, %v1143
        %v1220 = vpack.c.b16 %v1146, %v1145
        %v1221 = vpack.c.b16 %v1148, %v1147
        %v1222 = vpack.c.b16 %v1150, %v1149
        %v1223 = vpack.c.b16 %v1152, %v1151
        %v1224 = vpack.c.b16 %v1154, %v1153
        %v1225 = vpack.c.b16 %v1156, %v1155
        %v1226 = vpack.c.b16 %v1158, %v1157
        %v1227 = vpack.c.b16 %v1160, %v1159
        %v1228 = vpack.c.b16 %v1162, %v1161
        %v1229 = vpack.c.b16 %v1164, %v1163
        %v1230 = vpack.c.b16 %v1166, %v1165
        %1295 = vmatprep.subr.bf16.mxu0 0
        %1296 = vmatpush1.bf16.msra.mxu0 %v1174
        %1297 = vmatprep.subr.bf16.mxu0 0
        %1298 = vmatpush1.bf16.msra.mxu0 %v1173
        %1299 = vmatprep.subr.bf16.mxu0 0
        %1300 = vmatpush1.bf16.msra.mxu0 %v1172
        %1301 = vmatprep.subr.bf16.mxu0 0
        %1302 = vmatpush1.bf16.msra.mxu0 %v1171
        %1303 = vmatprep.subr.bf16.mxu0 0
        %1304 = vmatpush1.bf16.msra.mxu0 %v1170
        %1305 = vmatprep.subr.bf16.mxu0 0
        %1306 = vmatpush1.bf16.msra.mxu0 %v1169
        %1307 = vmatprep.subr.bf16.mxu0 0
        %1308 = vmatpush1.bf16.msra.mxu0 %v1168
        %1309 = vmatprep.subr.bf16.mxu0 0
        %1310 = vmatpush1.bf16.msra.mxu0 %v1167
        %1311 = vmatprep.subr.bf16.mxu0 0
        %1312 = vmatpush2.bf16.msra.mxu0 %v1182
        %1313 = vmatprep.subr.bf16.mxu0 0
        %1314 = vmatpush2.bf16.msra.mxu0 %v1181
        %1315 = vmatprep.subr.bf16.mxu0 0
        %1316 = vmatpush2.bf16.msra.mxu0 %v1180
        %1317 = vmatprep.subr.bf16.mxu0 0
        %1318 = vmatpush2.bf16.msra.mxu0 %v1179
        %1319 = vmatprep.subr.bf16.mxu0 0
        %1320 = vmatpush2.bf16.msra.mxu0 %v1178
        %1321 = vmatprep.subr.bf16.mxu0 0
        %1322 = vmatpush2.bf16.msra.mxu0 %v1177
        %1323 = vmatprep.subr.bf16.mxu0 0
        %1324 = vmatpush2.bf16.msra.mxu0 %v1176
        %1325 = vmatprep.subr.bf16.mxu0 0
        %1326 = vmatpush2.bf16.msra.mxu0 %v1175
        %1327 = vmatprep.mubr.bf16.mxu0 %v784
        %1328 = vmatmul.mubr.bf16.gmra.mxu0 %v783
        %v1329 = vpop.f32.mrf.mxu0
        %v1330 = vadd.f32 0.0, %v1329
        %v1331 = vpop.f32.mrf.mxu0
        %v1332 = vpop.f32.mrf.mxu0
        %v1333 = vadd.f32 0.0, %v1332
        %v1334 = vpop.f32.mrf.mxu0
        %1335 = vmatprep.mubr.bf16.mxu0 %v792
        %1336 = vmatmul.mubr.bf16.gmra.mxu0 %v791
        %v1337 = vpop.f32.mrf.mxu0
        %v1338 = vadd.f32 0.0, %v1337
        %v1339 = vpop.f32.mrf.mxu0
        %v1340 = vpop.f32.mrf.mxu0
        %v1341 = vadd.f32 0.0, %v1340
        %v1342 = vpop.f32.mrf.mxu0
        %1343 = vmatprep.mubr.bf16.mxu0 %v800
        %1344 = vmatmul.mubr.bf16.gmra.mxu0 %v799
        %v1345 = vpop.f32.mrf.mxu0
        %v1346 = vadd.f32 0.0, %v1345
        %v1347 = vpop.f32.mrf.mxu0
        %v1348 = vpop.f32.mrf.mxu0
        %v1349 = vadd.f32 0.0, %v1348
        %v1350 = vpop.f32.mrf.mxu0
        %1351 = vmatprep.mubr.bf16.mxu0 %v808
        %1352 = vmatmul.mubr.bf16.gmra.mxu0 %v807
        %v1353 = vpop.f32.mrf.mxu0
        %v1354 = vadd.f32 0.0, %v1353
        %v1355 = vpop.f32.mrf.mxu0
        %v1356 = vpop.f32.mrf.mxu0
        %v1357 = vadd.f32 0.0, %v1356
        %v1358 = vpop.f32.mrf.mxu0
        %1359 = vmatprep.mubr.bf16.mxu0 %v816
        %1360 = vmatmul.mubr.bf16.gmra.mxu0 %v815
        %v1361 = vpop.f32.mrf.mxu0
        %v1362 = vadd.f32 0.0, %v1361
        %v1363 = vpop.f32.mrf.mxu0
        %v1364 = vpop.f32.mrf.mxu0
        %v1365 = vadd.f32 0.0, %v1364
        %v1366 = vpop.f32.mrf.mxu0
        %1367 = vmatprep.mubr.bf16.mxu0 %v824
        %1368 = vmatmul.mubr.bf16.gmra.mxu0 %v823
        %v1369 = vpop.f32.mrf.mxu0
        %v1370 = vadd.f32 0.0, %v1369
        %v1371 = vpop.f32.mrf.mxu0
        %v1372 = vpop.f32.mrf.mxu0
        %v1373 = vadd.f32 0.0, %v1372
        %v1374 = vpop.f32.mrf.mxu0
        %1375 = vmatprep.mubr.bf16.mxu0 %v832
        %1376 = vmatmul.mubr.bf16.gmra.mxu0 %v831
        %v1377 = vpop.f32.mrf.mxu0
        %v1378 = vadd.f32 0.0, %v1377
        %v1379 = vpop.f32.mrf.mxu0
        %v1380 = vpop.f32.mrf.mxu0
        %v1381 = vadd.f32 0.0, %v1380
        %v1382 = vpop.f32.mrf.mxu0
        %1383 = vmatprep.mubr.bf16.mxu0 %v840
        %1384 = vmatmul.mubr.bf16.gmra.mxu0 %v839
        %v1385 = vpop.f32.mrf.mxu0
        %v1386 = vadd.f32 0.0, %v1385
        %v1387 = vpop.f32.mrf.mxu0
        %v1388 = vpop.f32.mrf.mxu0
        %v1389 = vadd.f32 0.0, %v1388
        %v1390 = vpop.f32.mrf.mxu0
        %1391 = vdwg.mxu0
        %1392 = vmatprep.subr.bf16.mxu0 0
        %1393 = vmatpush1.bf16.msra.mxu0 %v1190
        %1394 = vmatprep.subr.bf16.mxu0 0
        %1395 = vmatpush1.bf16.msra.mxu0 %v1189
        %1396 = vmatprep.subr.bf16.mxu0 0
        %1397 = vmatpush1.bf16.msra.mxu0 %v1188
        %1398 = vmatprep.subr.bf16.mxu0 0
        %1399 = vmatpush1.bf16.msra.mxu0 %v1187
        %1400 = vmatprep.subr.bf16.mxu0 0
        %1401 = vmatpush1.bf16.msra.mxu0 %v1186
        %1402 = vmatprep.subr.bf16.mxu0 0
        %1403 = vmatpush1.bf16.msra.mxu0 %v1185
        %1404 = vmatprep.subr.bf16.mxu0 0
        %1405 = vmatpush1.bf16.msra.mxu0 %v1184
        %1406 = vmatprep.subr.bf16.mxu0 0
        %1407 = vmatpush1.bf16.msra.mxu0 %v1183
        %1408 = vmatprep.subr.bf16.mxu0 0
        %1409 = vmatpush2.bf16.msra.mxu0 %v1198
        %1410 = vmatprep.subr.bf16.mxu0 0
        %1411 = vmatpush2.bf16.msra.mxu0 %v1197
        %1412 = vmatprep.subr.bf16.mxu0 0
        %1413 = vmatpush2.bf16.msra.mxu0 %v1196
        %1414 = vmatprep.subr.bf16.mxu0 0
        %1415 = vmatpush2.bf16.msra.mxu0 %v1195
        %1416 = vmatprep.subr.bf16.mxu0 0
        %1417 = vmatpush2.bf16.msra.mxu0 %v1194
        %1418 = vmatprep.subr.bf16.mxu0 0
        %1419 = vmatpush2.bf16.msra.mxu0 %v1193
        %1420 = vmatprep.subr.bf16.mxu0 0
        %1421 = vmatpush2.bf16.msra.mxu0 %v1192
        %1422 = vmatprep.subr.bf16.mxu0 0
        %1423 = vmatpush2.bf16.msra.mxu0 %v1191
        %1424 = vmatprep.mubr.bf16.mxu0 %v786
        %1425 = vmatmul.mubr.bf16.gmra.mxu0 %v785
        %v1426 = vpop.f32.mrf.mxu0
        %v1427 = vadd.f32 %v1330, %v1426
        %v1428 = vpop.f32.mrf.mxu0
        %v1429 = vpop.f32.mrf.mxu0
        %v1430 = vadd.f32 %v1333, %v1429
        %v1431 = vpop.f32.mrf.mxu0
        %1432 = vmatprep.mubr.bf16.mxu0 %v794
        %1433 = vmatmul.mubr.bf16.gmra.mxu0 %v793
        %v1434 = vpop.f32.mrf.mxu0
        %v1435 = vadd.f32 %v1338, %v1434
        %v1436 = vpop.f32.mrf.mxu0
        %v1437 = vpop.f32.mrf.mxu0
        %v1438 = vadd.f32 %v1341, %v1437
        %v1439 = vpop.f32.mrf.mxu0
        %1440 = vmatprep.mubr.bf16.mxu0 %v802
        %1441 = vmatmul.mubr.bf16.gmra.mxu0 %v801
        %v1442 = vpop.f32.mrf.mxu0
        %v1443 = vadd.f32 %v1346, %v1442
        %v1444 = vpop.f32.mrf.mxu0
        %v1445 = vpop.f32.mrf.mxu0
        %v1446 = vadd.f32 %v1349, %v1445
        %v1447 = vpop.f32.mrf.mxu0
        %1448 = vmatprep.mubr.bf16.mxu0 %v810
        %1449 = vmatmul.mubr.bf16.gmra.mxu0 %v809
        %v1450 = vpop.f32.mrf.mxu0
        %v1451 = vadd.f32 %v1354, %v1450
        %v1452 = vpop.f32.mrf.mxu0
        %v1453 = vpop.f32.mrf.mxu0
        %v1454 = vadd.f32 %v1357, %v1453
        %v1455 = vpop.f32.mrf.mxu0
        %1456 = vmatprep.mubr.bf16.mxu0 %v818
        %1457 = vmatmul.mubr.bf16.gmra.mxu0 %v817
        %v1458 = vpop.f32.mrf.mxu0
        %v1459 = vadd.f32 %v1362, %v1458
        %v1460 = vpop.f32.mrf.mxu0
        %v1461 = vpop.f32.mrf.mxu0
        %v1462 = vadd.f32 %v1365, %v1461
        %v1463 = vpop.f32.mrf.mxu0
        %1464 = vmatprep.mubr.bf16.mxu0 %v826
        %1465 = vmatmul.mubr.bf16.gmra.mxu0 %v825
        %v1466 = vpop.f32.mrf.mxu0
        %v1467 = vadd.f32 %v1370, %v1466
        %v1468 = vpop.f32.mrf.mxu0
        %v1469 = vpop.f32.mrf.mxu0
        %v1470 = vadd.f32 %v1373, %v1469
        %v1471 = vpop.f32.mrf.mxu0
        %1472 = vmatprep.mubr.bf16.mxu0 %v834
        %1473 = vmatmul.mubr.bf16.gmra.mxu0 %v833
        %v1474 = vpop.f32.mrf.mxu0
        %v1475 = vadd.f32 %v1378, %v1474
        %v1476 = vpop.f32.mrf.mxu0
        %v1477 = vpop.f32.mrf.mxu0
        %v1478 = vadd.f32 %v1381, %v1477
        %v1479 = vpop.f32.mrf.mxu0
        %1480 = vmatprep.mubr.bf16.mxu0 %v842
        %1481 = vmatmul.mubr.bf16.gmra.mxu0 %v841
        %v1482 = vpop.f32.mrf.mxu0
        %v1483 = vadd.f32 %v1386, %v1482
        %v1484 = vpop.f32.mrf.mxu0
        %v1485 = vpop.f32.mrf.mxu0
        %v1486 = vadd.f32 %v1389, %v1485
        %v1487 = vpop.f32.mrf.mxu0
        %1488 = vdwg.mxu0
        %1489 = vmatprep.subr.bf16.mxu0 0
        %1490 = vmatpush1.bf16.msra.mxu0 %v1206
        %1491 = vmatprep.subr.bf16.mxu0 0
        %1492 = vmatpush1.bf16.msra.mxu0 %v1205
        %1493 = vmatprep.subr.bf16.mxu0 0
        %1494 = vmatpush1.bf16.msra.mxu0 %v1204
        %1495 = vmatprep.subr.bf16.mxu0 0
        %1496 = vmatpush1.bf16.msra.mxu0 %v1203
        %1497 = vmatprep.subr.bf16.mxu0 0
        %1498 = vmatpush1.bf16.msra.mxu0 %v1202
        %1499 = vmatprep.subr.bf16.mxu0 0
        %1500 = vmatpush1.bf16.msra.mxu0 %v1201
        %1501 = vmatprep.subr.bf16.mxu0 0
        %1502 = vmatpush1.bf16.msra.mxu0 %v1200
        %1503 = vmatprep.subr.bf16.mxu0 0
        %1504 = vmatpush1.bf16.msra.mxu0 %v1199
        %1505 = vmatprep.subr.bf16.mxu0 0
        %1506 = vmatpush2.bf16.msra.mxu0 %v1214
        %1507 = vmatprep.subr.bf16.mxu0 0
        %1508 = vmatpush2.bf16.msra.mxu0 %v1213
        %1509 = vmatprep.subr.bf16.mxu0 0
        %1510 = vmatpush2.bf16.msra.mxu0 %v1212
        %1511 = vmatprep.subr.bf16.mxu0 0
        %1512 = vmatpush2.bf16.msra.mxu0 %v1211
        %1513 = vmatprep.subr.bf16.mxu0 0
        %1514 = vmatpush2.bf16.msra.mxu0 %v1210
        %1515 = vmatprep.subr.bf16.mxu0 0
        %1516 = vmatpush2.bf16.msra.mxu0 %v1209
        %1517 = vmatprep.subr.bf16.mxu0 0
        %1518 = vmatpush2.bf16.msra.mxu0 %v1208
        %1519 = vmatprep.subr.bf16.mxu0 0
        %1520 = vmatpush2.bf16.msra.mxu0 %v1207
        %1521 = vmatprep.mubr.bf16.mxu0 %v788
        %1522 = vmatmul.mubr.bf16.gmra.mxu0 %v787
        %v1523 = vpop.f32.mrf.mxu0
        %v1524 = vadd.f32 %v1427, %v1523
        %v1525 = vpop.f32.mrf.mxu0
        %v1526 = vpop.f32.mrf.mxu0
        %v1527 = vadd.f32 %v1430, %v1526
        %v1528 = vpop.f32.mrf.mxu0
        %1529 = vmatprep.mubr.bf16.mxu0 %v796
        %1530 = vmatmul.mubr.bf16.gmra.mxu0 %v795
        %v1531 = vpop.f32.mrf.mxu0
        %v1532 = vadd.f32 %v1435, %v1531
        %v1533 = vpop.f32.mrf.mxu0
        %v1534 = vpop.f32.mrf.mxu0
        %v1535 = vadd.f32 %v1438, %v1534
        %v1536 = vpop.f32.mrf.mxu0
        %1537 = vmatprep.mubr.bf16.mxu0 %v804
        %1538 = vmatmul.mubr.bf16.gmra.mxu0 %v803
        %v1539 = vpop.f32.mrf.mxu0
        %v1540 = vadd.f32 %v1443, %v1539
        %v1541 = vpop.f32.mrf.mxu0
        %v1542 = vpop.f32.mrf.mxu0
        %v1543 = vadd.f32 %v1446, %v1542
        %v1544 = vpop.f32.mrf.mxu0
        %1545 = vmatprep.mubr.bf16.mxu0 %v812
        %1546 = vmatmul.mubr.bf16.gmra.mxu0 %v811
        %v1547 = vpop.f32.mrf.mxu0
        %v1548 = vadd.f32 %v1451, %v1547
        %v1549 = vpop.f32.mrf.mxu0
        %v1550 = vpop.f32.mrf.mxu0
        %v1551 = vadd.f32 %v1454, %v1550
        %v1552 = vpop.f32.mrf.mxu0
        %1553 = vmatprep.mubr.bf16.mxu0 %v820
        %1554 = vmatmul.mubr.bf16.gmra.mxu0 %v819
        %v1555 = vpop.f32.mrf.mxu0
        %v1556 = vadd.f32 %v1459, %v1555
        %v1557 = vpop.f32.mrf.mxu0
        %v1558 = vpop.f32.mrf.mxu0
        %v1559 = vadd.f32 %v1462, %v1558
        %v1560 = vpop.f32.mrf.mxu0
        %1561 = vmatprep.mubr.bf16.mxu0 %v828
        %1562 = vmatmul.mubr.bf16.gmra.mxu0 %v827
        %v1563 = vpop.f32.mrf.mxu0
        %v1564 = vadd.f32 %v1467, %v1563
        %v1565 = vpop.f32.mrf.mxu0
        %v1566 = vpop.f32.mrf.mxu0
        %v1567 = vadd.f32 %v1470, %v1566
        %v1568 = vpop.f32.mrf.mxu0
        %1569 = vmatprep.mubr.bf16.mxu0 %v836
        %1570 = vmatmul.mubr.bf16.gmra.mxu0 %v835
        %v1571 = vpop.f32.mrf.mxu0
        %v1572 = vadd.f32 %v1475, %v1571
        %v1573 = vpop.f32.mrf.mxu0
        %v1574 = vpop.f32.mrf.mxu0
        %v1575 = vadd.f32 %v1478, %v1574
        %v1576 = vpop.f32.mrf.mxu0
        %1577 = vmatprep.mubr.bf16.mxu0 %v844
        %1578 = vmatmul.mubr.bf16.gmra.mxu0 %v843
        %v1579 = vpop.f32.mrf.mxu0
        %v1580 = vadd.f32 %v1483, %v1579
        %v1581 = vpop.f32.mrf.mxu0
        %v1582 = vpop.f32.mrf.mxu0
        %v1583 = vadd.f32 %v1486, %v1582
        %v1584 = vpop.f32.mrf.mxu0
        %1585 = vdwg.mxu0
        %1586 = vmatprep.subr.bf16.mxu0 0
        %1587 = vmatpush1.bf16.msra.mxu0 %v1222
        %1588 = vmatprep.subr.bf16.mxu0 0
        %1589 = vmatpush1.bf16.msra.mxu0 %v1221
        %1590 = vmatprep.subr.bf16.mxu0 0
        %1591 = vmatpush1.bf16.msra.mxu0 %v1220
        %1592 = vmatprep.subr.bf16.mxu0 0
        %1593 = vmatpush1.bf16.msra.mxu0 %v1219
        %1594 = vmatprep.subr.bf16.mxu0 0
        %1595 = vmatpush1.bf16.msra.mxu0 %v1218
        %1596 = vmatprep.subr.bf16.mxu0 0
        %1597 = vmatpush1.bf16.msra.mxu0 %v1217
        %1598 = vmatprep.subr.bf16.mxu0 0
        %1599 = vmatpush1.bf16.msra.mxu0 %v1216
        %1600 = vmatprep.subr.bf16.mxu0 0
        %1601 = vmatpush1.bf16.msra.mxu0 %v1215
        %1602 = vmatprep.subr.bf16.mxu0 0
        %1603 = vmatpush2.bf16.msra.mxu0 %v1230
        %1604 = vmatprep.subr.bf16.mxu0 0
        %1605 = vmatpush2.bf16.msra.mxu0 %v1229
        %1606 = vmatprep.subr.bf16.mxu0 0
        %1607 = vmatpush2.bf16.msra.mxu0 %v1228
        %1608 = vmatprep.subr.bf16.mxu0 0
        %1609 = vmatpush2.bf16.msra.mxu0 %v1227
        %1610 = vmatprep.subr.bf16.mxu0 0
        %1611 = vmatpush2.bf16.msra.mxu0 %v1226
        %1612 = vmatprep.subr.bf16.mxu0 0
        %1613 = vmatpush2.bf16.msra.mxu0 %v1225
        %1614 = vmatprep.subr.bf16.mxu0 0
        %1615 = vmatpush2.bf16.msra.mxu0 %v1224
        %1616 = vmatprep.subr.bf16.mxu0 0
        %1617 = vmatpush2.bf16.msra.mxu0 %v1223
        %1618 = vmatprep.mubr.bf16.mxu0 %v790
        %1619 = vmatmul.mubr.bf16.gmra.mxu0 %v789
        %v1620 = vpop.f32.mrf.mxu0
        %v1621 = vadd.f32 %v1524, %v1620
        %v1622 = vpop.f32.mrf.mxu0
        %v1623 = vpop.f32.mrf.mxu0
        %v1624 = vadd.f32 %v1527, %v1623
        %v1625 = vpop.f32.mrf.mxu0
        %1626 = vmatprep.mubr.bf16.mxu0 %v798
        %1627 = vmatmul.mubr.bf16.gmra.mxu0 %v797
        %v1628 = vpop.f32.mrf.mxu0
        %v1629 = vadd.f32 %v1532, %v1628
        %v1630 = vpop.f32.mrf.mxu0
        %v1631 = vpop.f32.mrf.mxu0
        %v1632 = vadd.f32 %v1535, %v1631
        %v1633 = vpop.f32.mrf.mxu0
        %1634 = vmatprep.mubr.bf16.mxu0 %v806
        %1635 = vmatmul.mubr.bf16.gmra.mxu0 %v805
        %v1636 = vpop.f32.mrf.mxu0
        %v1637 = vadd.f32 %v1540, %v1636
        %v1638 = vpop.f32.mrf.mxu0
        %v1639 = vpop.f32.mrf.mxu0
        %v1640 = vadd.f32 %v1543, %v1639
        %v1641 = vpop.f32.mrf.mxu0
        %1642 = vmatprep.mubr.bf16.mxu0 %v814
        %1643 = vmatmul.mubr.bf16.gmra.mxu0 %v813
        %v1644 = vpop.f32.mrf.mxu0
        %v1645 = vadd.f32 %v1548, %v1644
        %v1646 = vpop.f32.mrf.mxu0
        %v1647 = vpop.f32.mrf.mxu0
        %v1648 = vadd.f32 %v1551, %v1647
        %v1649 = vpop.f32.mrf.mxu0
        %1650 = vmatprep.mubr.bf16.mxu0 %v822
        %1651 = vmatmul.mubr.bf16.gmra.mxu0 %v821
        %v1652 = vpop.f32.mrf.mxu0
        %v1653 = vadd.f32 %v1556, %v1652
        %v1654 = vpop.f32.mrf.mxu0
        %v1655 = vpop.f32.mrf.mxu0
        %v1656 = vadd.f32 %v1559, %v1655
        %v1657 = vpop.f32.mrf.mxu0
        %1658 = vmatprep.mubr.bf16.mxu0 %v830
        %1659 = vmatmul.mubr.bf16.gmra.mxu0 %v829
        %v1660 = vpop.f32.mrf.mxu0
        %v1661 = vadd.f32 %v1564, %v1660
        %v1662 = vpop.f32.mrf.mxu0
        %v1663 = vpop.f32.mrf.mxu0
        %v1664 = vadd.f32 %v1567, %v1663
        %v1665 = vpop.f32.mrf.mxu0
        %1666 = vmatprep.mubr.bf16.mxu0 %v838
        %1667 = vmatmul.mubr.bf16.gmra.mxu0 %v837
        %v1668 = vpop.f32.mrf.mxu0
        %v1669 = vadd.f32 %v1572, %v1668
        %v1670 = vpop.f32.mrf.mxu0
        %v1671 = vpop.f32.mrf.mxu0
        %v1672 = vadd.f32 %v1575, %v1671
        %v1673 = vpop.f32.mrf.mxu0
        %1674 = vmatprep.mubr.bf16.mxu0 %v846
        %1675 = vmatmul.mubr.bf16.gmra.mxu0 %v845
        %v1676 = vpop.f32.mrf.mxu0
        %v1677 = vadd.f32 %v1580, %v1676
        %v1678 = vpop.f32.mrf.mxu0
        %v1679 = vpop.f32.mrf.mxu0
        %v1680 = vadd.f32 %v1583, %v1679
        %v1681 = vpop.f32.mrf.mxu0
        %1682 = vdwg.mxu0
        %v1683 = vadd.f32 %v383, %v1621
        %v1684 = vadd.f32 %v384, %v1624
        %v1685 = vadd.f32 %v385, %v1629
        %v1686 = vadd.f32 %v386, %v1632
        %v1687 = vadd.f32 %v387, %v1637
        %v1688 = vadd.f32 %v388, %v1640
        %v1689 = vadd.f32 %v389, %v1645
        %v1690 = vadd.f32 %v390, %v1648
        %v1691 = vadd.f32 %v391, %v1653
        %v1692 = vadd.f32 %v392, %v1656
        %v1693 = vadd.f32 %v393, %v1661
        %v1694 = vadd.f32 %v394, %v1664
        %v1695 = vadd.f32 %v395, %v1669
        %v1696 = vadd.f32 %v396, %v1672
        %v1697 = vadd.f32 %v397, %v1677
        %v1698 = vadd.f32 %v398, %v1680
        %1699 = vst [vmem:[%s322] sm:$0xff] %v1683
        %1700 = vst [vmem:[%s322 + $0x8] sm:$0xff] %v1684
        %1701 = vst [vmem:[%s322 + $0x10] sm:$0xff] %v1685
        %1702 = vst [vmem:[%s322 + $0x18] sm:$0xff] %v1686
        %1703 = vst [vmem:[%s322 + $0x20] sm:$0xff] %v1687
        %1704 = vst [vmem:[%s322 + $0x28] sm:$0xff] %v1688
        %1705 = vst [vmem:[%s322 + $0x30] sm:$0xff] %v1689
        %1706 = vst [vmem:[%s322 + $0x38] sm:$0xff] %v1690
        %1707 = vst [vmem:[%s322 + $0x40] sm:$0xff] %v1691
        %1708 = vst [vmem:[%s322 + $0x48] sm:$0xff] %v1692
        %1709 = vst [vmem:[%s322 + $0x50] sm:$0xff] %v1693
        %1710 = vst [vmem:[%s322 + $0x58] sm:$0xff] %v1694
        %1711 = vst [vmem:[%s322 + $0x60] sm:$0xff] %v1695
        %1712 = vst [vmem:[%s322 + $0x68] sm:$0xff] %v1696
        %1713 = vst [vmem:[%s322 + $0x70] sm:$0xff] %v1697
        %1714 = vst [vmem:[%s322 + $0x78] sm:$0xff] %v1698
        // Predicated region
        $region45: #{kcge_forward.7} parent=39 // pred_check
          %p1715 = pneg %p363
        $region46: #{kcge_forward.7} parent=39 // pred_check_branch
          %1717 = sbr.rel (%p1715) target = $region48
        $region47: #{kcge_forward.7} parent=39 // pred_region
          %v1718 = vld [vmem:[%s322] sm:$0xff]
          %v1719 = vld [vmem:[%s322 + $0x8] sm:$0xff]
          %v1720 = vld [vmem:[%s322 + $0x10] sm:$0xff]
          %v1721 = vld [vmem:[%s322 + $0x18] sm:$0xff]
          %v1722 = vld [vmem:[%s322 + $0x20] sm:$0xff]
          %v1723 = vld [vmem:[%s322 + $0x28] sm:$0xff]
          %v1724 = vld [vmem:[%s322 + $0x30] sm:$0xff]
          %v1725 = vld [vmem:[%s322 + $0x38] sm:$0xff]
          %v1726 = vld [vmem:[%s322 + $0x40] sm:$0xff]
          %v1727 = vld [vmem:[%s322 + $0x48] sm:$0xff]
          %v1728 = vld [vmem:[%s322 + $0x50] sm:$0xff]
          %v1729 = vld [vmem:[%s322 + $0x58] sm:$0xff]
          %v1730 = vld [vmem:[%s322 + $0x60] sm:$0xff]
          %v1731 = vld [vmem:[%s322 + $0x68] sm:$0xff]
          %v1732 = vld [vmem:[%s322 + $0x70] sm:$0xff]
          %v1733 = vld [vmem:[%s322 + $0x78] sm:$0xff]
          %v1734 = vld [vmem:[%s2] sm:$0x1]
          %v1736 = vlaneseq
          %v1737 = vshrl.u32 %v1736, 7
          %v1738 = vsub.s32 0, %v1737
          %v1739 = vrot.slane %v1734, %v1738
          %v1741 = vadd.f32 %v1718, %v1739
          %v1742 = vadd.f32 %v1719, %v1739
          %v1743 = vadd.f32 %v1720, %v1739
          %v1744 = vadd.f32 %v1721, %v1739
          %v1745 = vadd.f32 %v1722, %v1739
          %v1746 = vadd.f32 %v1723, %v1739
          %v1747 = vadd.f32 %v1724, %v1739
          %v1748 = vadd.f32 %v1725, %v1739
          %v1749 = vadd.f32 %v1726, %v1739
          %v1750 = vadd.f32 %v1727, %v1739
          %v1751 = vadd.f32 %v1728, %v1739
          %v1752 = vadd.f32 %v1729, %v1739
          %v1753 = vadd.f32 %v1730, %v1739
          %v1754 = vadd.f32 %v1731, %v1739
          %v1755 = vadd.f32 %v1732, %v1739
          %v1756 = vadd.f32 %v1733, %v1739
          %v1757 = vld [vmem:[%s352] sm:$0xff]
          %v1758 = vld [vmem:[%s352 + $0x8] sm:$0xff]
          %v1759 = vld [vmem:[%s352 + $0x10] sm:$0xff]
          %v1760 = vld [vmem:[%s352 + $0x18] sm:$0xff]
          %v1761 = vld [vmem:[%s352 + $0x20] sm:$0xff]
          %v1762 = vld [vmem:[%s352 + $0x28] sm:$0xff]
          %v1763 = vld [vmem:[%s352 + $0x30] sm:$0xff]
          %v1764 = vld [vmem:[%s352 + $0x38] sm:$0xff]
          %v1765 = vld [vmem:[%s352 + $0x40] sm:$0xff]
          %v1766 = vld [vmem:[%s352 + $0x48] sm:$0xff]
          %v1767 = vld [vmem:[%s352 + $0x50] sm:$0xff]
          %v1768 = vld [vmem:[%s352 + $0x58] sm:$0xff]
          %v1769 = vld [vmem:[%s352 + $0x60] sm:$0xff]
          %v1770 = vld [vmem:[%s352 + $0x68] sm:$0xff]
          %v1771 = vld [vmem:[%s352 + $0x70] sm:$0xff]
          %v1772 = vld [vmem:[%s352 + $0x78] sm:$0xff]
          %v1773 = vld [vmem:[%s358] sm:$0xff]
          %v1774 = vld [vmem:[%s358 + $0x8] sm:$0xff]
          %v1775 = vld [vmem:[%s358 + $0x10] sm:$0xff]
          %v1776 = vld [vmem:[%s358 + $0x18] sm:$0xff]
          %v1777 = vld [vmem:[%s358 + $0x20] sm:$0xff]
          %v1778 = vld [vmem:[%s358 + $0x28] sm:$0xff]
          %v1779 = vld [vmem:[%s358 + $0x30] sm:$0xff]
          %v1780 = vld [vmem:[%s358 + $0x38] sm:$0xff]
          %v1781 = vld [vmem:[%s358 + $0x40] sm:$0xff]
          %v1782 = vld [vmem:[%s358 + $0x48] sm:$0xff]
          %v1783 = vld [vmem:[%s358 + $0x50] sm:$0xff]
          %v1784 = vld [vmem:[%s358 + $0x58] sm:$0xff]
          %v1785 = vld [vmem:[%s358 + $0x60] sm:$0xff]
          %v1786 = vld [vmem:[%s358 + $0x68] sm:$0xff]
          %v1787 = vld [vmem:[%s358 + $0x70] sm:$0xff]
          %v1788 = vld [vmem:[%s358 + $0x78] sm:$0xff]
          %v1789 = vadd.f32 %v1757, %v1773
          %v1790 = vadd.f32 %v1758, %v1774
          %v1791 = vadd.f32 %v1759, %v1775
          %v1792 = vadd.f32 %v1760, %v1776
          %v1793 = vadd.f32 %v1761, %v1777
          %v1794 = vadd.f32 %v1762, %v1778
          %v1795 = vadd.f32 %v1763, %v1779
          %v1796 = vadd.f32 %v1764, %v1780
          %v1797 = vadd.f32 %v1765, %v1781
          %v1798 = vadd.f32 %v1766, %v1782
          %v1799 = vadd.f32 %v1767, %v1783
          %v1800 = vadd.f32 %v1768, %v1784
          %v1801 = vadd.f32 %v1769, %v1785
          %v1802 = vadd.f32 %v1770, %v1786
          %v1803 = vadd.f32 %v1771, %v1787
          %v1804 = vadd.f32 %v1772, %v1788
          %v1805 = vadd.f32 %v1789, %v1741
          %v1806 = vadd.f32 %v1790, %v1742
          %v1807 = vadd.f32 %v1791, %v1743
          %v1808 = vadd.f32 %v1792, %v1744
          %v1809 = vadd.f32 %v1793, %v1745
          %v1810 = vadd.f32 %v1794, %v1746
          %v1811 = vadd.f32 %v1795, %v1747
          %v1812 = vadd.f32 %v1796, %v1748
          %v1813 = vadd.f32 %v1797, %v1749
          %v1814 = vadd.f32 %v1798, %v1750
          %v1815 = vadd.f32 %v1799, %v1751
          %v1816 = vadd.f32 %v1800, %v1752
          %v1817 = vadd.f32 %v1801, %v1753
          %v1818 = vadd.f32 %v1802, %v1754
          %v1819 = vadd.f32 %v1803, %v1755
          %v1820 = vadd.f32 %v1804, %v1756
          %v1821 = vmul.f32 %v1805, 0.25
          %v1822 = vmul.f32 %v1806, 0.25
          %v1823 = vmul.f32 %v1807, 0.25
          %v1824 = vmul.f32 %v1808, 0.25
          %v1825 = vmul.f32 %v1809, 0.25
          %v1826 = vmul.f32 %v1810, 0.25
          %v1827 = vmul.f32 %v1811, 0.25
          %v1828 = vmul.f32 %v1812, 0.25
          %v1829 = vmul.f32 %v1813, 0.25
          %v1830 = vmul.f32 %v1814, 0.25
          %v1831 = vmul.f32 %v1815, 0.25
          %v1832 = vmul.f32 %v1816, 0.25
          %v1833 = vmul.f32 %v1817, 0.25
          %v1834 = vmul.f32 %v1818, 0.25
          %v1835 = vmul.f32 %v1819, 0.25
          %v1836 = vmul.f32 %v1820, 0.25
          %1837 = vst [vmem:[%s322] sm:$0xff] %v1821
          %1838 = vst [vmem:[%s322 + $0x8] sm:$0xff] %v1822
          %1839 = vst [vmem:[%s322 + $0x10] sm:$0xff] %v1823
          %1840 = vst [vmem:[%s322 + $0x18] sm:$0xff] %v1824
          %1841 = vst [vmem:[%s322 + $0x20] sm:$0xff] %v1825
          %1842 = vst [vmem:[%s322 + $0x28] sm:$0xff] %v1826
          %1843 = vst [vmem:[%s322 + $0x30] sm:$0xff] %v1827
          %1844 = vst [vmem:[%s322 + $0x38] sm:$0xff] %v1828
          %1845 = vst [vmem:[%s322 + $0x40] sm:$0xff] %v1829
          %1846 = vst [vmem:[%s322 + $0x48] sm:$0xff] %v1830
          %1847 = vst [vmem:[%s322 + $0x50] sm:$0xff] %v1831
          %1848 = vst [vmem:[%s322 + $0x58] sm:$0xff] %v1832
          %1849 = vst [vmem:[%s322 + $0x60] sm:$0xff] %v1833
          %1850 = vst [vmem:[%s322 + $0x68] sm:$0xff] %v1834
          %1851 = vst [vmem:[%s322 + $0x70] sm:$0xff] %v1835
          %1852 = vst [vmem:[%s322 + $0x78] sm:$0xff] %v1836
          %v1853 = vadd.f32 %v1773, %v1741
          %v1854 = vadd.f32 %v1774, %v1742
          %v1855 = vadd.f32 %v1775, %v1743
          %v1856 = vadd.f32 %v1776, %v1744
          %v1857 = vadd.f32 %v1777, %v1745
          %v1858 = vadd.f32 %v1778, %v1746
          %v1859 = vadd.f32 %v1779, %v1747
          %v1860 = vadd.f32 %v1780, %v1748
          %v1861 = vadd.f32 %v1781, %v1749
          %v1862 = vadd.f32 %v1782, %v1750
          %v1863 = vadd.f32 %v1783, %v1751
          %v1864 = vadd.f32 %v1784, %v1752
          %v1865 = vadd.f32 %v1785, %v1753
          %v1866 = vadd.f32 %v1786, %v1754
          %v1867 = vadd.f32 %v1787, %v1755
          %v1868 = vadd.f32 %v1788, %v1756
          %v1869 = vmul.f32 %v1853, 0.33333334
          %v1870 = vmul.f32 %v1854, 0.33333334
          %v1871 = vmul.f32 %v1855, 0.33333334
          %v1872 = vmul.f32 %v1856, 0.33333334
          %v1873 = vmul.f32 %v1857, 0.33333334
          %v1874 = vmul.f32 %v1858, 0.33333334
          %v1875 = vmul.f32 %v1859, 0.33333334
          %v1876 = vmul.f32 %v1860, 0.33333334
          %v1877 = vmul.f32 %v1861, 0.33333334
          %v1878 = vmul.f32 %v1862, 0.33333334
          %v1879 = vmul.f32 %v1863, 0.33333334
          %v1880 = vmul.f32 %v1864, 0.33333334
          %v1881 = vmul.f32 %v1865, 0.33333334
          %v1882 = vmul.f32 %v1866, 0.33333334
          %v1883 = vmul.f32 %v1867, 0.33333334
          %v1884 = vmul.f32 %v1868, 0.33333334
          %1885 = vst [vmem:[%s329] sm:$0xff] %v1869
          %1886 = vst [vmem:[%s329 + $0x8] sm:$0xff] %v1870
          %1887 = vst [vmem:[%s329 + $0x10] sm:$0xff] %v1871
          %1888 = vst [vmem:[%s329 + $0x18] sm:$0xff] %v1872
          %1889 = vst [vmem:[%s329 + $0x20] sm:$0xff] %v1873
          %1890 = vst [vmem:[%s329 + $0x28] sm:$0xff] %v1874
          %1891 = vst [vmem:[%s329 + $0x30] sm:$0xff] %v1875
          %1892 = vst [vmem:[%s329 + $0x38] sm:$0xff] %v1876
          %1893 = vst [vmem:[%s329 + $0x40] sm:$0xff] %v1877
          %1894 = vst [vmem:[%s329 + $0x48] sm:$0xff] %v1878
          %1895 = vst [vmem:[%s329 + $0x50] sm:$0xff] %v1879
          %1896 = vst [vmem:[%s329 + $0x58] sm:$0xff] %v1880
          %1897 = vst [vmem:[%s329 + $0x60] sm:$0xff] %v1881
          %1898 = vst [vmem:[%s329 + $0x68] sm:$0xff] %v1882
          %1899 = vst [vmem:[%s329 + $0x70] sm:$0xff] %v1883
          %1900 = vst [vmem:[%s329 + $0x78] sm:$0xff] %v1884
        $region48: #{kcge_forward.7} parent=39 // pred_fallthru
          _
        %s1901 = sand.u32 %s171, 1
        %s1902 = scalar_lea.sflag [#allocation3], %s1901
        %s1903 = sand.u32 %s171, 1
        %s1904 = smul.addr %s1903, 128
        %s1905 = scalar_lea.vmem [#allocation2], %s1904
        %s1906 = sand.u32 %s197, 1
        %s1907 = scalar_lea.sflag [#allocation5], %s1906
        %s1908 = sand.u32 %s197, 1
        %s1909 = smul.addr %s1908, 128
        %s1910 = scalar_lea.vmem [#allocation4], %s1909
        // Predicated region
        $region49: #{kcge_forward.7} parent=39 // pred_check
          %p1911 = pneg %p181
        $region50: #{kcge_forward.7} parent=39 // pred_check_branch
          %1913 = sbr.rel (%p1911) target = $region52
        $region51: #{kcge_forward.7} parent=39 // pred_region
          %s1914 = smul.u32 16, %s28
          %s1916 = ssub.s32 2048, 2048
          %1917 = vsyncadd %s1902, %s1916
          %s1918 = smul.addr %s1914, 128
          %s1919 = scalar_lea.hbm %s5, %s1918
          %s1920 = sshll.u32 %s1905, 4
          %s1921 = int_to_ptr.vmem [resolvable:$true] %s1920
          %1926 = dma.vmem_to_hbm [thread:$0]  %s1921, 2048, %s1919, %s1902, 128, 128, 8
        $region52: #{kcge_forward.7} parent=39 // pred_fallthru
          _
        // Predicated region
        $region53: #{kcge_forward.7} parent=39 // pred_check
          %p1927 = pneg %p207
        $region54: #{kcge_forward.7} parent=39 // pred_check_branch
          %1929 = sbr.rel (%p1927) target = $region56
        $region55: #{kcge_forward.7} parent=39 // pred_region
          %s1930 = smul.u32 16, %s28
          %s1932 = ssub.s32 2048, 2048
          %1933 = vsyncadd %s1907, %s1932
          %s1934 = smul.addr %s1930, 128
          %s1935 = scalar_lea.hbm %s6, %s1934
          %s1936 = sshll.u32 %s1910, 4
          %s1937 = int_to_ptr.vmem [resolvable:$true] %s1936
          %1942 = dma.vmem_to_hbm [thread:$0]  %s1937, 2048, %s1935, %s1907, 128, 128, 8
        $region56: #{kcge_forward.7} parent=39 // pred_fallthru
          _
      $region40: #{kcge_forward.7} parent=5 // pred_fallthru
        _
      %p1943 = scmp.le.s32.totalorder 2, %s19
      // Predicated region
      $region57: #{kcge_forward.7} parent=5 // pred_check
        %p1944 = pneg %p1943
      $region58: #{kcge_forward.7} parent=5 // pred_check_branch
        %1946 = sbr.rel (%p1944) target = $region60
      $region59: #{kcge_forward.7} parent=5 // pred_region
        %s1947 = ssub.s32 %s19, 2
        // Predicated region
        $region61: #{kcge_forward.7} parent=59 // pred_check
          %p1948 = pneg %p187
        $region62: #{kcge_forward.7} parent=59 // pred_check_branch
          %1950 = sbr.rel (%p1948) target = $region64
        $region63: #{kcge_forward.7} parent=59 // pred_region
          %s1951 = sand.u32 %s172, 1
          %s1952 = scalar_lea.sflag [#allocation3], %s1951
          %s1953 = sand.u32 %s172, 1
          %s1954 = smul.addr %s1953, 128
          %s1955 = scalar_lea.vmem [#allocation2], %s1954
          %1956 = dma.done %s1952, 2048
        $region64: #{kcge_forward.7} parent=59 // pred_fallthru
          _
        // Predicated region
        $region65: #{kcge_forward.7} parent=59 // pred_check
          %p1957 = pneg %p213
        $region66: #{kcge_forward.7} parent=59 // pred_check_branch
          %1959 = sbr.rel (%p1957) target = $region68
        $region67: #{kcge_forward.7} parent=59 // pred_region
          %s1960 = sand.u32 %s198, 1
          %s1961 = scalar_lea.sflag [#allocation5], %s1960
          %s1962 = sand.u32 %s198, 1
          %s1963 = smul.addr %s1962, 128
          %s1964 = scalar_lea.vmem [#allocation4], %s1963
          %1965 = dma.done %s1961, 2048
        $region68: #{kcge_forward.7} parent=59 // pred_fallthru
          _
      $region60: #{kcge_forward.7} parent=5 // pred_fallthru
        _
    $region6: #{kcge_forward.7} parent=1 // loop_footer
      %s23 = sadd.s32 1, %s19
    $region7: #{kcge_forward.7} parent=1 // loop_footer_branch
      %18 = sbr.rel target = $region3
    $region8: #{kcge_forward.7} parent=1 // loop_exit
      _
    %1966 = vsyncpa [#allocation3], 1
    %s1967 = scalar_lea.sflag [#allocation3], 1
    %1968 = vsyncpa %s1967, 1
    %1969 = vsyncpa [#allocation5], 1
    %s1970 = scalar_lea.sflag [#allocation5], 1
    %1971 = vsyncpa %s1970, 1

</llo_original>
